<compile_context>
chip_gen: v7x
topology: tpu7x:2x2x1
jax: 0.10.0
libtpu: 0.0.40
codegen_flags: <defaults>
</compile_context>

<pallas_src>
import math
import functools

import jax
import jax.numpy as jnp
from jax.experimental import pallas as pl
from jax.experimental.pallas import tpu as pltpu


_ROW_ALIGN = 16   # bf16 MXU LHS packs 16 rows per sublane pair


# ---------------------------------------------------------------------------
# fused kernel: encoder ResMLP stack -> enc proj -> dec proj -> decoder stack
# ---------------------------------------------------------------------------
def make_mlp_stack_kernel(mlp_blocks):
    """refs = (h_in, [w1,b1,w2,b2,w3,b3] * enc_blocks, enc_proj_w, enc_proj_b,
               dec_proj_w, dec_proj_b, [...] * dec_blocks, h_out).
    Matmul operands bf16 (MXU), accumulation & elementwise math f32 (VPU)."""

    def kernel(*refs):
        h_ref = refs[0]
        o_ref = refs[-1]
        p = refs[1:-1]

        def lin(h, w_ref, b_ref):
            return (jnp.dot(h.astype(jnp.bfloat16), w_ref[...],
                            preferred_element_type=jnp.float32) + b_ref[...])

        def relu(v):
            return jnp.maximum(v, 0.0)

        def res_block(h, blk):
            w1, b1, w2, b2, w3, b3 = blk
            y = relu(lin(h, w1, b1))
            y = relu(lin(y, w2, b2))
            y = relu(lin(y, w3, b3))
            return h + y

        idx = 0
        h = h_ref[...]                              # already bf16 (no extra cast)
        for _ in range(mlp_blocks):                 # encoder ResMLP stack
            h = res_block(h, p[idx:idx + 6]); idx += 6
        h = lin(h, p[idx], p[idx + 1]); idx += 2    # encoder proj (grid -> code)
        h = lin(h, p[idx], p[idx + 1]); idx += 2    # decoder proj (code -> grid)
        for _ in range(mlp_blocks):                 # decoder ResMLP stack
            h = res_block(h, p[idx:idx + 6]); idx += 6
        o_ref[...] = h.astype(o_ref.dtype)          # bf16 output (halves writeback)

    return kernel


# ---------------------------------------------------------------------------
# parameter construction (deterministic, PyTorch-like uniform(+/- 1/sqrt(fan)))
# ---------------------------------------------------------------------------
def init_params(key, shape, code_size, lib_size, patch_size, mlp_blocks,
                mlp_cells=None):
    C, H, W = shape
    ph, pw = patch_size
    gh, gw = H // ph, W // pw
    grid_size = lib_size * gh * gw
    if mlp_cells is None:
        mlp_cells = grid_size
    K = C * ph * pw

    n_keys = 12 * mlp_blocks + 8
    keys = iter(jax.random.split(key, n_keys))

    def uniform(shp, fan_in):
        k = 1.0 / math.sqrt(fan_in)
        return jax.random.uniform(next(keys), shp, jnp.float32, -k, k)

    def linear(n_in, n_out):
        # stored already transposed: (in, out)
        return uniform((n_in, n_out), n_in), uniform((n_out,), n_in)

    def resmlp():
        return (list(linear(grid_size, mlp_cells))
                + list(linear(mlp_cells, mlp_cells))
                + list(linear(mlp_cells, grid_size)))

    params = {
        # torch Conv2d weight (lib, C, ph, pw) flattened/transposed -> (K, lib)
        "enc_patch_w": uniform((K, lib_size), K),
        "enc_patch_b": uniform((lib_size,), K),
        "enc_blocks": [resmlp() for _ in range(mlp_blocks)],
        "enc_proj": list(linear(grid_size, code_size)),
        "dec_proj": list(linear(code_size, grid_size)),
        "dec_blocks": [resmlp() for _ in range(mlp_blocks)],
        # torch ConvTranspose2d weight (lib, C, ph, pw) flattened -> (lib, K)
        "dec_patch_w": uniform((lib_size, K), lib_size),
        "dec_patch_b": uniform((C,), lib_size),
    }
    return params


def pack_kernel_params(params, shape, lib_size, patch_size, mlp_blocks):
    """Kernel-ready params: matmul weights bf16, biases f32 shaped (1, dim),
    grid_size-facing dims permuted to the patch-major (g, l) layout so no
    transposes are needed anywhere (the patch conv/deconv weights stay small:
    no GG-block-diagonal expansion)."""
    C, H, W = shape
    ph, pw = patch_size
    gh, gw = H // ph, W // pw
    GG = gh * gw

    # perm[new] = old, where new = g*lib + l and old = l*GG + g (torch layout)
    g_idx = jnp.arange(GG)
    l_idx = jnp.arange(lib_size)
    perm = (l_idx[None, :] * GG + g_idx[:, None]).reshape(-1)

    def w16(w):
        return w.astype(jnp.bfloat16)

    def b32(b):
        return b.reshape(1, -1).astype(jnp.float32)

    def resmlp_packed(blk):
        w1, b1, w2, b2, w3, b3 = blk
        return [w16(w1[perm, :]), b32(b1),
                w16(w2), b32(b2),
                w16(w3[:, perm]), b32(b3[perm])]

    mlp = []
    for blk in params["enc_blocks"]:
        mlp += resmlp_packed(blk)
    mlp += [w16(params["enc_proj"][0][perm, :]), b32(params["enc_proj"][1])]
    mlp += [w16(params["dec_proj"][0][:, perm]), b32(params["dec_proj"][1][perm])]
    for blk in params["dec_blocks"]:
        mlp += resmlp_packed(blk)

    # TODO(synk): on v6e/v7x (2x256x256 MXU) pick grid_size / mlp_cells as
    # multiples of 256; zero-padding 128-dim weights does not reduce MXU pass
    # count, so this is a model-config choice rather than a packing step.
    return {
        "mlp": mlp,
        "enc_patch_w": w16(params["enc_patch_w"]),                      # (K, lib)
        "enc_patch_b": params["enc_patch_b"].astype(jnp.float32),       # (lib,)
        "dec_patch_w": w16(params["dec_patch_w"]),                      # (lib, K)
        "dec_patch_b": jnp.repeat(params["dec_patch_b"],                # (K,)
                                  ph * pw).astype(jnp.float32),
    }


# ---------------------------------------------------------------------------
# XLA-side patch (de)conv glue (k == stride => per-patch matmul)
# ---------------------------------------------------------------------------
def _encode_patches(x, packed, shape, patch_size, lib_size):
    C, H, W = shape
    ph, pw = patch_size
    gh, gw = H // ph, W // pw
    K = C * ph * pw
    N = x.shape[0]
    # cast before the transpose glue: halves the reshuffle + DMA traffic
    patches = (x.astype(jnp.bfloat16)
                .reshape(N, C, gh, ph, gw, pw)
                .transpose(0, 2, 4, 1, 3, 5)
                .reshape(N * gh * gw, K))
    h = (jnp.dot(patches, packed["enc_patch_w"],
                 preferred_element_type=jnp.float32)
         + packed["enc_patch_b"][None, :])
    # patch-major (g, l) grid layout; ResMLP weights were permuted to match
    return h.reshape(N, gh * gw * lib_size).astype(jnp.bfloat16)


def _decode_patches(h, packed, shape, patch_size, lib_size):
    C, H, W = shape
    ph, pw = patch_size
    gh, gw = H // ph, W // pw
    N = h.shape[0]
    z = h.reshape(N * gh * gw, lib_size)
    dec = (jnp.dot(z.astype(jnp.bfloat16), packed["dec_patch_w"],
                   preferred_element_type=jnp.float32)
           + packed["dec_patch_b"][None, :])
    y = jax.nn.sigmoid(dec)                 # exact sigmoid (no approx reciprocal)
    return (y.reshape(N, gh, gw, C, ph, pw)
             .transpose(0, 3, 1, 4, 2, 5)
             .reshape(N, C, H, W))


# ---------------------------------------------------------------------------
# tiling / VMEM budgeting
# ---------------------------------------------------------------------------
def _vmem_capacity_bytes():
    try:
        return int(pltpu.get_tpu_info().vmem_capacity_bytes)
    except Exception:
        return 64 * 1024 * 1024   # conservative: v7x per-TensorCore budget


def _round_up(x, m):
    return (x + m - 1) // m * m


def _choose_batch_tiling(n, per_row_bytes, act_budget_bytes):
    """block_n: multiple of 16 sized from the VMEM activation budget; batch is
    padded to a tile multiple (no whole-batch fallback); >=2 grid steps when
    the batch allows it, so ("parallel",) shards tiles over both v7x TCs."""
    budget_rows = act_budget_bytes // max(per_row_bytes, 1)
    block_n = max(_ROW_ALIGN, (budget_rows // _ROW_ALIGN) * _ROW_ALIGN)
    block_n = min(block_n, 512)
    n_pad = _round_up(max(n, _ROW_ALIGN), _ROW_ALIGN)
    if n_pad >= 2 * _ROW_ALIGN:
        half = max((n_pad // 2) // _ROW_ALIGN * _ROW_ALIGN, _ROW_ALIGN)
        block_n = min(block_n, half)
    block_n = min(block_n, n_pad)
    n_pad = _round_up(n_pad, block_n)
    return block_n, n_pad


def _const_spec(shape, single_buffer):
    # index-invariant weight/bias block; single-buffered when supported
    if single_buffer:
        return pl.BlockSpec(shape, lambda i: (0, 0),
                            pipeline_mode=pl.Buffered(1))
    return pl.BlockSpec(shape, lambda i: (0, 0))


# ---------------------------------------------------------------------------
# forward pass
# ---------------------------------------------------------------------------
def forward(x, packed, *, shape, code_size, lib_size, patch_size, mlp_blocks,
            mlp_cells=None, single_buffer_weights=True):
    C, H, W = shape
    ph, pw = patch_size
    gh, gw = H // ph, W // pw
    GG = gh * gw
    grid_size = lib_size * GG
    if mlp_cells is None:
        mlp_cells = grid_size
    N = x.shape[0]

    # -- XLA stage 1: patch Conv2d (k == stride) as a small per-patch matmul --
    h0 = _encode_patches(x, packed, shape, patch_size, lib_size)  # (N, grid) bf16

    # -- VMEM / tiling budget, clamped to the real device budget --------------
    mlp_params = packed["mlp"]
    weight_bytes = sum(int(p.size) * p.dtype.itemsize for p in mlp_params)
    n_buffers = 1 if single_buffer_weights else 2
    resident_bytes = n_buffers * weight_bytes
    usable_vmem = int(_vmem_capacity_bytes() * 0.85)
    # double-buffered bf16 in/out tiles + f32 temporaries headroom, per row
    per_row_bytes = 4 * grid_size * 2 + 8 * 4 * max(grid_size, mlp_cells)
    act_budget = max(usable_vmem - resident_bytes, 2 << 20)
    block_n, n_pad = _choose_batch_tiling(N, per_row_bytes, act_budget)
    vmem_limit = resident_bytes + block_n * per_row_bytes + (8 << 20)
    vmem_limit = min(max(vmem_limit, 16 << 20), usable_vmem)
    # TODO(synk): when resident_bytes alone approaches usable_vmem (large
    # grid_size/mlp_cells on v7x's 64 MiB VMEM), stream the per-layer ResMLP
    # weights with pl.ANY + manual double-buffered make_async_copy instead of
    # keeping the whole stack VMEM-resident.

    if n_pad != N:
        h0 = jnp.pad(h0, ((0, n_pad - N), (0, 0)))

    grid = (n_pad // block_n,)
    h_spec = pl.BlockSpec((block_n, grid_size), lambda i: (i, 0))
    o_spec = pl.BlockSpec((block_n, grid_size), lambda i: (i, 0))
    p_specs = [_const_spec(p.shape, single_buffer_weights) for p in mlp_params]

    flops_per_row = 2 * (2 * mlp_blocks * (grid_size * mlp_cells
                                           + mlp_cells * mlp_cells
                                           + mlp_cells * grid_size)
                         + 2 * grid_size * code_size)
    cost = pl.CostEstimate(flops=n_pad * flops_per_row,
                           transcendentals=0,
                           bytes_accessed=4 * n_pad * grid_size + weight_bytes)

    h_dec = pl.pallas_call(
        make_mlp_stack_kernel(mlp_blocks),
        out_shape=jax.ShapeDtypeStruct((n_pad, grid_size), jnp.bfloat16),
        grid=grid,
        in_specs=[h_spec] + p_specs,
        out_specs=o_spec,
        compiler_params=pltpu.CompilerParams(
            dimension_semantics=("parallel",),
            vmem_limit_bytes=vmem_limit),
        cost_estimate=cost,
    )(h0, *mlp_params)

    # -- XLA stage 3: patch ConvTranspose2d as matmul + exact sigmoid + NCHW --
    # TODO(synk): if the patch-glue traffic ever shows up in profiles, fold the
    # per-patch (de)conv into the kernel with an inner per-patch loop.
    return _decode_patches(h_dec[:N], packed, shape, patch_size, lib_size)


# ---------------------------------------------------------------------------
# pure-JAX references
# ---------------------------------------------------------------------------
def forward_ref_packed(x, packed, shape, lib_size, patch_size, mlp_blocks):
    """Plain-JAX reference mirroring the kernel/wrapper math exactly
    (bf16 matmul operands, f32 accumulation, permuted grid layout)."""

    def lin(h, w, b):
        return jnp.dot(h.astype(jnp.bfloat16), w,
                       preferred_element_type=jnp.float32) + b

    def relu(v):
        return jnp.maximum(v, 0.0)

    h = _encode_patches(x, packed, shape, patch_size, lib_size)
    p = packed["mlp"]
    idx = 0
    for _ in range(mlp_blocks):
        w1, b1, w2, b2, w3, b3 = p[idx:idx + 6]; idx += 6
        y = relu(lin(h, w1, b1)); y = relu(lin(y, w2, b2)); y = relu(lin(y, w3, b3))
        h = h + y
    h = lin(h, p[idx], p[idx + 1]); idx += 2
    h = lin(h, p[idx], p[idx + 1]); idx += 2
    for _ in range(mlp_blocks):
        w1, b1, w2, b2, w3, b3 = p[idx:idx + 6]; idx += 6
        y = relu(lin(h, w1, b1)); y = relu(lin(y, w2, b2)); y = relu(lin(y, w3, b3))
        h = h + y
    return _decode_patches(h.astype(jnp.bfloat16), packed, shape, patch_size,
                           lib_size)


def forward_ref_f32(x, params, shape, code_size, lib_size, patch_size,
                    mlp_blocks):
    """Full-f32 reference mirroring the PyTorch module exactly (torch layout)."""
    C, H, W = shape
    ph, pw = patch_size
    gh, gw = H // ph, W // pw
    grid_size = lib_size * gh * gw
    N = x.shape[0]
    M = N * gh * gw
    K = C * ph * pw

    patches = (x.reshape(N, C, gh, ph, gw, pw)
                .transpose(0, 2, 4, 1, 3, 5)
                .reshape(M, K))
    enc = patches @ params["enc_patch_w"] + params["enc_patch_b"][None, :]
    h = (enc.reshape(N, gh, gw, lib_size)
            .transpose(0, 3, 1, 2)
            .reshape(N, grid_size))

    def resmlp(h, blk):
        w1, b1, w2, b2, w3, b3 = blk
        y = jnp.maximum(h @ w1 + b1[None, :], 0.0)
        y = jnp.maximum(y @ w2 + b2[None, :], 0.0)
        y = jnp.maximum(y @ w3 + b3[None, :], 0.0)
        return h + y

    for blk in params["enc_blocks"]:
        h = resmlp(h, blk)
    h = h @ params["enc_proj"][0] + params["enc_proj"][1][None, :]
    h = h @ params["dec_proj"][0] + params["dec_proj"][1][None, :]
    for blk in params["dec_blocks"]:
        h = resmlp(h, blk)

    z = (h.reshape(N, lib_size, gh, gw)
          .transpose(0, 2, 3, 1)
          .reshape(M, lib_size))
    bt = jnp.repeat(params["dec_patch_b"], ph * pw)
    dec = jax.nn.sigmoid(z @ params["dec_patch_w"] + bt[None, :])
    y = (dec.reshape(N, gh, gw, C, ph, pw)
            .transpose(0, 3, 1, 4, 2, 5)
            .reshape(N, C, H, W))
    return y


if __name__ == "__main__":
    # small config: shape=(C=4, H=16, W=16), patch=4 -> 4x4 patch grid,
    # lib_size=8 -> grid_size = 128, code_size=32, mlp_blocks=2
    shape = (4, 16, 16)
    patch_size = (4, 4)
    lib_size = 8
    code_size = 32
    mlp_blocks = 2
    N = 2

    key = jax.random.PRNGKey(0)
    k_x, k_p = jax.random.split(key)
    x = jax.random.uniform(k_x, (N, *shape), jnp.float32)
    params = init_params(k_p, shape, code_size, lib_size, patch_size,
                         mlp_blocks)
    packed = pack_kernel_params(params, shape, lib_size, patch_size,
                                mlp_blocks)

    def run(single_buffer_weights):
        fwd = jax.jit(functools.partial(
            forward, shape=shape, code_size=code_size, lib_size=lib_size,
            patch_size=patch_size, mlp_blocks=mlp_blocks,
            single_buffer_weights=single_buffer_weights))
        return jax.block_until_ready(fwd(x, packed))

    try:
        out = run(True)
    except Exception:
        # pipeline_mode=pl.Buffered(1) unavailable on this JAX build:
        # fall back to default (double-buffered) index-invariant weight specs.
        out = run(False)

    assert out.shape == (N, *shape), out.shape
    assert bool(jnp.all(jnp.isfinite(out)))

    # same-math (bf16 matmul) reference: checks the Pallas kernel machinery
    ref_bf16 = jax.block_until_ready(
        forward_ref_packed(x, packed, shape, lib_size, patch_size, mlp_blocks))
    assert bool(jnp.allclose(out, ref_bf16, atol=1e-2, rtol=1e-2)), (
        float(jnp.max(jnp.abs(out - ref_bf16))))

    # full-f32 reference mirroring the PyTorch module: checks semantics
    ref_f32 = jax.block_until_ready(
        forward_ref_f32(x, params, shape, code_size, lib_size, patch_size,
                        mlp_blocks))
    assert bool(jnp.allclose(out, ref_f32, atol=5e-2, rtol=5e-2)), (
        float(jnp.max(jnp.abs(out - ref_f32))))

    print("KERNEL_OK")
</pallas_src>

<mosaic_0001>
module attributes {stable_mosaic.version = 11 : i64} {
  func.func @kernel(%arg0: i32, %arg1: memref<16x128xbf16, #tpu.memory_space<vmem>>, %arg2: memref<128x128xbf16, #tpu.memory_space<vmem>>, %arg3: memref<1x128xf32, #tpu.memory_space<vmem>>, %arg4: memref<128x128xbf16, #tpu.memory_space<vmem>>, %arg5: memref<1x128xf32, #tpu.memory_space<vmem>>, %arg6: memref<128x128xbf16, #tpu.memory_space<vmem>>, %arg7: memref<1x128xf32, #tpu.memory_space<vmem>>, %arg8: memref<128x128xbf16, #tpu.memory_space<vmem>>, %arg9: memref<1x128xf32, #tpu.memory_space<vmem>>, %arg10: memref<128x128xbf16, #tpu.memory_space<vmem>>, %arg11: memref<1x128xf32, #tpu.memory_space<vmem>>, %arg12: memref<128x128xbf16, #tpu.memory_space<vmem>>, %arg13: memref<1x128xf32, #tpu.memory_space<vmem>>, %arg14: memref<128x32xbf16, #tpu.memory_space<vmem>>, %arg15: memref<1x32xf32, #tpu.memory_space<vmem>>, %arg16: memref<32x128xbf16, #tpu.memory_space<vmem>>, %arg17: memref<1x128xf32, #tpu.memory_space<vmem>>, %arg18: memref<128x128xbf16, #tpu.memory_space<vmem>>, %arg19: memref<1x128xf32, #tpu.memory_space<vmem>>, %arg20: memref<128x128xbf16, #tpu.memory_space<vmem>>, %arg21: memref<1x128xf32, #tpu.memory_space<vmem>>, %arg22: memref<128x128xbf16, #tpu.memory_space<vmem>>, %arg23: memref<1x128xf32, #tpu.memory_space<vmem>>, %arg24: memref<128x128xbf16, #tpu.memory_space<vmem>>, %arg25: memref<1x128xf32, #tpu.memory_space<vmem>>, %arg26: memref<128x128xbf16, #tpu.memory_space<vmem>>, %arg27: memref<1x128xf32, #tpu.memory_space<vmem>>, %arg28: memref<128x128xbf16, #tpu.memory_space<vmem>>, %arg29: memref<1x128xf32, #tpu.memory_space<vmem>>, %arg30: memref<16x128xbf16, #tpu.memory_space<vmem>>) attributes {dimension_semantics = [#tpu.dimension_semantics<parallel>], iteration_bounds = array<i64: 1>, scalar_prefetch = 0 : i64, scratch_operands = 0 : i64, tpu.core_type = #tpu.core_type<tc>, window_params = [{transform_indices = @transform_0, window_bounds = array<i64: 16, 128>}, {pipeline_mode = #tpu.pipeline_mode<synchronous>, transform_indices = @transform_1, window_bounds = array<i64: 128, 128>}, {pipeline_mode = #tpu.pipeline_mode<synchronous>, transform_indices = @transform_2, window_bounds = array<i64: 1, 128>}, {pipeline_mode = #tpu.pipeline_mode<synchronous>, transform_indices = @transform_3, window_bounds = array<i64: 128, 128>}, {pipeline_mode = #tpu.pipeline_mode<synchronous>, transform_indices = @transform_4, window_bounds = array<i64: 1, 128>}, {pipeline_mode = #tpu.pipeline_mode<synchronous>, transform_indices = @transform_5, window_bounds = array<i64: 128, 128>}, {pipeline_mode = #tpu.pipeline_mode<synchronous>, transform_indices = @transform_6, window_bounds = array<i64: 1, 128>}, {pipeline_mode = #tpu.pipeline_mode<synchronous>, transform_indices = @transform_7, window_bounds = array<i64: 128, 128>}, {pipeline_mode = #tpu.pipeline_mode<synchronous>, transform_indices = @transform_8, window_bounds = array<i64: 1, 128>}, {pipeline_mode = #tpu.pipeline_mode<synchronous>, transform_indices = @transform_9, window_bounds = array<i64: 128, 128>}, {pipeline_mode = #tpu.pipeline_mode<synchronous>, transform_indices = @transform_10, window_bounds = array<i64: 1, 128>}, {pipeline_mode = #tpu.pipeline_mode<synchronous>, transform_indices = @transform_11, window_bounds = array<i64: 128, 128>}, {pipeline_mode = #tpu.pipeline_mode<synchronous>, transform_indices = @transform_12, window_bounds = array<i64: 1, 128>}, {pipeline_mode = #tpu.pipeline_mode<synchronous>, transform_indices = @transform_13, window_bounds = array<i64: 128, 32>}, {pipeline_mode = #tpu.pipeline_mode<synchronous>, transform_indices = @transform_14, window_bounds = array<i64: 1, 32>}, {pipeline_mode = #tpu.pipeline_mode<synchronous>, transform_indices = @transform_15, window_bounds = array<i64: 32, 128>}, {pipeline_mode = #tpu.pipeline_mode<synchronous>, transform_indices = @transform_16, window_bounds = array<i64: 1, 128>}, {pipeline_mode = #tpu.pipeline_mode<synchronous>, transform_indices = @transform_17, window_bounds = array<i64: 128, 128>}, {pipeline_mode = #tpu.pipeline_mode<synchronous>, transform_indices = @transform_18, window_bounds = array<i64: 1, 128>}, {pipeline_mode = #tpu.pipeline_mode<synchronous>, transform_indices = @transform_19, window_bounds = array<i64: 128, 128>}, {pipeline_mode = #tpu.pipeline_mode<synchronous>, transform_indices = @transform_20, window_bounds = array<i64: 1, 128>}, {pipeline_mode = #tpu.pipeline_mode<synchronous>, transform_indices = @transform_21, window_bounds = array<i64: 128, 128>}, {pipeline_mode = #tpu.pipeline_mode<synchronous>, transform_indices = @transform_22, window_bounds = array<i64: 1, 128>}, {pipeline_mode = #tpu.pipeline_mode<synchronous>, transform_indices = @transform_23, window_bounds = array<i64: 128, 128>}, {pipeline_mode = #tpu.pipeline_mode<synchronous>, transform_indices = @transform_24, window_bounds = array<i64: 1, 128>}, {pipeline_mode = #tpu.pipeline_mode<synchronous>, transform_indices = @transform_25, window_bounds = array<i64: 128, 128>}, {pipeline_mode = #tpu.pipeline_mode<synchronous>, transform_indices = @transform_26, window_bounds = array<i64: 1, 128>}, {pipeline_mode = #tpu.pipeline_mode<synchronous>, transform_indices = @transform_27, window_bounds = array<i64: 128, 128>}, {pipeline_mode = #tpu.pipeline_mode<synchronous>, transform_indices = @transform_28, window_bounds = array<i64: 1, 128>}, {transform_indices = @transform_29, window_bounds = array<i64: 16, 128>}]} {
    %c0 = arith.constant 0 : index
    %c0_0 = arith.constant 0 : index
    %0 = vector.load %arg1[%c0, %c0_0] : memref<16x128xbf16, #tpu.memory_space<vmem>>, vector<16x128xbf16>
    %c0_1 = arith.constant 0 : index
    %c0_2 = arith.constant 0 : index
    %1 = vector.load %arg2[%c0_1, %c0_2] : memref<128x128xbf16, #tpu.memory_space<vmem>>, vector<128x128xbf16>
    %cst = arith.constant dense<0.000000e+00> : vector<16x128xf32>
    %2 = tpu.matmul %0, %1, %cst {dimension_numbers = #tpu.dot_dimension_numbers<[1], [0], [0], [1], [0, 0, 1, 1], [], []>} : vector<16x128xbf16>, vector<128x128xbf16>, vector<16x128xf32> -> vector<16x128xf32>
    %c0_3 = arith.constant 0 : index
    %c0_4 = arith.constant 0 : index
    %3 = vector.load %arg3[%c0_3, %c0_4] : memref<1x128xf32, #tpu.memory_space<vmem>>, vector<1x128xf32>
    %4 = vector.broadcast %3 : vector<1x128xf32> to vector<16x128xf32>
    %5 = arith.addf %2, %4 : vector<16x128xf32>
    %cst_5 = arith.constant 0.000000e+00 : f32
    %6 = vector.broadcast %cst_5 : f32 to vector<16x128xf32>
    %7 = arith.maximumf %5, %6 : vector<16x128xf32>
    %8 = arith.truncf %7 : vector<16x128xf32> to vector<16x128xbf16>
    %c0_6 = arith.constant 0 : index
    %c0_7 = arith.constant 0 : index
    %9 = vector.load %arg4[%c0_6, %c0_7] : memref<128x128xbf16, #tpu.memory_space<vmem>>, vector<128x128xbf16>
    %cst_8 = arith.constant dense<0.000000e+00> : vector<16x128xf32>
    %10 = tpu.matmul %8, %9, %cst_8 {dimension_numbers = #tpu.dot_dimension_numbers<[1], [0], [0], [1], [0, 0, 1, 1], [], []>} : vector<16x128xbf16>, vector<128x128xbf16>, vector<16x128xf32> -> vector<16x128xf32>
    %c0_9 = arith.constant 0 : index
    %c0_10 = arith.constant 0 : index
    %11 = vector.load %arg5[%c0_9, %c0_10] : memref<1x128xf32, #tpu.memory_space<vmem>>, vector<1x128xf32>
    %12 = vector.broadcast %11 : vector<1x128xf32> to vector<16x128xf32>
    %13 = arith.addf %10, %12 : vector<16x128xf32>
    %cst_11 = arith.constant 0.000000e+00 : f32
    %14 = vector.broadcast %cst_11 : f32 to vector<16x128xf32>
    %15 = arith.maximumf %13, %14 : vector<16x128xf32>
    %16 = arith.truncf %15 : vector<16x128xf32> to vector<16x128xbf16>
    %c0_12 = arith.constant 0 : index
    %c0_13 = arith.constant 0 : index
    %17 = vector.load %arg6[%c0_12, %c0_13] : memref<128x128xbf16, #tpu.memory_space<vmem>>, vector<128x128xbf16>
    %cst_14 = arith.constant dense<0.000000e+00> : vector<16x128xf32>
    %18 = tpu.matmul %16, %17, %cst_14 {dimension_numbers = #tpu.dot_dimension_numbers<[1], [0], [0], [1], [0, 0, 1, 1], [], []>} : vector<16x128xbf16>, vector<128x128xbf16>, vector<16x128xf32> -> vector<16x128xf32>
    %c0_15 = arith.constant 0 : index
    %c0_16 = arith.constant 0 : index
    %19 = vector.load %arg7[%c0_15, %c0_16] : memref<1x128xf32, #tpu.memory_space<vmem>>, vector<1x128xf32>
    %20 = vector.broadcast %19 : vector<1x128xf32> to vector<16x128xf32>
    %21 = arith.addf %18, %20 : vector<16x128xf32>
    %cst_17 = arith.constant 0.000000e+00 : f32
    %22 = vector.broadcast %cst_17 : f32 to vector<16x128xf32>
    %23 = arith.maximumf %21, %22 : vector<16x128xf32>
    %24 = arith.extf %0 : vector<16x128xbf16> to vector<16x128xf32>
    %25 = arith.addf %24, %23 : vector<16x128xf32>
    %26 = arith.truncf %25 : vector<16x128xf32> to vector<16x128xbf16>
    %c0_18 = arith.constant 0 : index
    %c0_19 = arith.constant 0 : index
    %27 = vector.load %arg8[%c0_18, %c0_19] : memref<128x128xbf16, #tpu.memory_space<vmem>>, vector<128x128xbf16>
    %cst_20 = arith.constant dense<0.000000e+00> : vector<16x128xf32>
    %28 = tpu.matmul %26, %27, %cst_20 {dimension_numbers = #tpu.dot_dimension_numbers<[1], [0], [0], [1], [0, 0, 1, 1], [], []>} : vector<16x128xbf16>, vector<128x128xbf16>, vector<16x128xf32> -> vector<16x128xf32>
    %c0_21 = arith.constant 0 : index
    %c0_22 = arith.constant 0 : index
    %29 = vector.load %arg9[%c0_21, %c0_22] : memref<1x128xf32, #tpu.memory_space<vmem>>, vector<1x128xf32>
    %30 = vector.broadcast %29 : vector<1x128xf32> to vector<16x128xf32>
    %31 = arith.addf %28, %30 : vector<16x128xf32>
    %cst_23 = arith.constant 0.000000e+00 : f32
    %32 = vector.broadcast %cst_23 : f32 to vector<16x128xf32>
    %33 = arith.maximumf %31, %32 : vector<16x128xf32>
    %34 = arith.truncf %33 : vector<16x128xf32> to vector<16x128xbf16>
    %c0_24 = arith.constant 0 : index
    %c0_25 = arith.constant 0 : index
    %35 = vector.load %arg10[%c0_24, %c0_25] : memref<128x128xbf16, #tpu.memory_space<vmem>>, vector<128x128xbf16>
    %cst_26 = arith.constant dense<0.000000e+00> : vector<16x128xf32>
    %36 = tpu.matmul %34, %35, %cst_26 {dimension_numbers = #tpu.dot_dimension_numbers<[1], [0], [0], [1], [0, 0, 1, 1], [], []>} : vector<16x128xbf16>, vector<128x128xbf16>, vector<16x128xf32> -> vector<16x128xf32>
    %c0_27 = arith.constant 0 : index
    %c0_28 = arith.constant 0 : index
    %37 = vector.load %arg11[%c0_27, %c0_28] : memref<1x128xf32, #tpu.memory_space<vmem>>, vector<1x128xf32>
    %38 = vector.broadcast %37 : vector<1x128xf32> to vector<16x128xf32>
    %39 = arith.addf %36, %38 : vector<16x128xf32>
    %cst_29 = arith.constant 0.000000e+00 : f32
    %40 = vector.broadcast %cst_29 : f32 to vector<16x128xf32>
    %41 = arith.maximumf %39, %40 : vector<16x128xf32>
    %42 = arith.truncf %41 : vector<16x128xf32> to vector<16x128xbf16>
    %c0_30 = arith.constant 0 : index
    %c0_31 = arith.constant 0 : index
    %43 = vector.load %arg12[%c0_30, %c0_31] : memref<128x128xbf16, #tpu.memory_space<vmem>>, vector<128x128xbf16>
    %cst_32 = arith.constant dense<0.000000e+00> : vector<16x128xf32>
    %44 = tpu.matmul %42, %43, %cst_32 {dimension_numbers = #tpu.dot_dimension_numbers<[1], [0], [0], [1], [0, 0, 1, 1], [], []>} : vector<16x128xbf16>, vector<128x128xbf16>, vector<16x128xf32> -> vector<16x128xf32>
    %c0_33 = arith.constant 0 : index
    %c0_34 = arith.constant 0 : index
    %45 = vector.load %arg13[%c0_33, %c0_34] : memref<1x128xf32, #tpu.memory_space<vmem>>, vector<1x128xf32>
    %46 = vector.broadcast %45 : vector<1x128xf32> to vector<16x128xf32>
    %47 = arith.addf %44, %46 : vector<16x128xf32>
    %cst_35 = arith.constant 0.000000e+00 : f32
    %48 = vector.broadcast %cst_35 : f32 to vector<16x128xf32>
    %49 = arith.maximumf %47, %48 : vector<16x128xf32>
    %50 = arith.addf %25, %49 : vector<16x128xf32>
    %51 = arith.truncf %50 : vector<16x128xf32> to vector<16x128xbf16>
    %c0_36 = arith.constant 0 : index
    %c0_37 = arith.constant 0 : index
    %52 = vector.load %arg14[%c0_36, %c0_37] : memref<128x32xbf16, #tpu.memory_space<vmem>>, vector<128x32xbf16>
    %cst_38 = arith.constant dense<0.000000e+00> : vector<16x32xf32>
    %53 = tpu.matmul %51, %52, %cst_38 {dimension_numbers = #tpu.dot_dimension_numbers<[1], [0], [0], [1], [0, 0, 1, 1], [], []>} : vector<16x128xbf16>, vector<128x32xbf16>, vector<16x32xf32> -> vector<16x32xf32>
    %c0_39 = arith.constant 0 : index
    %c0_40 = arith.constant 0 : index
    %54 = vector.load %arg15[%c0_39, %c0_40] : memref<1x32xf32, #tpu.memory_space<vmem>>, vector<1x32xf32>
    %55 = vector.broadcast %54 : vector<1x32xf32> to vector<16x32xf32>
    %56 = arith.addf %53, %55 : vector<16x32xf32>
    %57 = arith.truncf %56 : vector<16x32xf32> to vector<16x32xbf16>
    %c0_41 = arith.constant 0 : index
    %c0_42 = arith.constant 0 : index
    %58 = vector.load %arg16[%c0_41, %c0_42] : memref<32x128xbf16, #tpu.memory_space<vmem>>, vector<32x128xbf16>
    %cst_43 = arith.constant dense<0.000000e+00> : vector<16x128xf32>
    %59 = tpu.matmul %57, %58, %cst_43 {dimension_numbers = #tpu.dot_dimension_numbers<[1], [0], [0], [1], [0, 0, 1, 1], [], []>} : vector<16x32xbf16>, vector<32x128xbf16>, vector<16x128xf32> -> vector<16x128xf32>
    %c0_44 = arith.constant 0 : index
    %c0_45 = arith.constant 0 : index
    %60 = vector.load %arg17[%c0_44, %c0_45] : memref<1x128xf32, #tpu.memory_space<vmem>>, vector<1x128xf32>
    %61 = vector.broadcast %60 : vector<1x128xf32> to vector<16x128xf32>
    %62 = arith.addf %59, %61 : vector<16x128xf32>
    %63 = arith.truncf %62 : vector<16x128xf32> to vector<16x128xbf16>
    %c0_46 = arith.constant 0 : index
    %c0_47 = arith.constant 0 : index
    %64 = vector.load %arg18[%c0_46, %c0_47] : memref<128x128xbf16, #tpu.memory_space<vmem>>, vector<128x128xbf16>
    %cst_48 = arith.constant dense<0.000000e+00> : vector<16x128xf32>
    %65 = tpu.matmul %63, %64, %cst_48 {dimension_numbers = #tpu.dot_dimension_numbers<[1], [0], [0], [1], [0, 0, 1, 1], [], []>} : vector<16x128xbf16>, vector<128x128xbf16>, vector<16x128xf32> -> vector<16x128xf32>
    %c0_49 = arith.constant 0 : index
    %c0_50 = arith.constant 0 : index
    %66 = vector.load %arg19[%c0_49, %c0_50] : memref<1x128xf32, #tpu.memory_space<vmem>>, vector<1x128xf32>
    %67 = vector.broadcast %66 : vector<1x128xf32> to vector<16x128xf32>
    %68 = arith.addf %65, %67 : vector<16x128xf32>
    %cst_51 = arith.constant 0.000000e+00 : f32
    %69 = vector.broadcast %cst_51 : f32 to vector<16x128xf32>
    %70 = arith.maximumf %68, %69 : vector<16x128xf32>
    %71 = arith.truncf %70 : vector<16x128xf32> to vector<16x128xbf16>
    %c0_52 = arith.constant 0 : index
    %c0_53 = arith.constant 0 : index
    %72 = vector.load %arg20[%c0_52, %c0_53] : memref<128x128xbf16, #tpu.memory_space<vmem>>, vector<128x128xbf16>
    %cst_54 = arith.constant dense<0.000000e+00> : vector<16x128xf32>
    %73 = tpu.matmul %71, %72, %cst_54 {dimension_numbers = #tpu.dot_dimension_numbers<[1], [0], [0], [1], [0, 0, 1, 1], [], []>} : vector<16x128xbf16>, vector<128x128xbf16>, vector<16x128xf32> -> vector<16x128xf32>
    %c0_55 = arith.constant 0 : index
    %c0_56 = arith.constant 0 : index
    %74 = vector.load %arg21[%c0_55, %c0_56] : memref<1x128xf32, #tpu.memory_space<vmem>>, vector<1x128xf32>
    %75 = vector.broadcast %74 : vector<1x128xf32> to vector<16x128xf32>
    %76 = arith.addf %73, %75 : vector<16x128xf32>
    %cst_57 = arith.constant 0.000000e+00 : f32
    %77 = vector.broadcast %cst_57 : f32 to vector<16x128xf32>
    %78 = arith.maximumf %76, %77 : vector<16x128xf32>
    %79 = arith.truncf %78 : vector<16x128xf32> to vector<16x128xbf16>
    %c0_58 = arith.constant 0 : index
    %c0_59 = arith.constant 0 : index
    %80 = vector.load %arg22[%c0_58, %c0_59] : memref<128x128xbf16, #tpu.memory_space<vmem>>, vector<128x128xbf16>
    %cst_60 = arith.constant dense<0.000000e+00> : vector<16x128xf32>
    %81 = tpu.matmul %79, %80, %cst_60 {dimension_numbers = #tpu.dot_dimension_numbers<[1], [0], [0], [1], [0, 0, 1, 1], [], []>} : vector<16x128xbf16>, vector<128x128xbf16>, vector<16x128xf32> -> vector<16x128xf32>
    %c0_61 = arith.constant 0 : index
    %c0_62 = arith.constant 0 : index
    %82 = vector.load %arg23[%c0_61, %c0_62] : memref<1x128xf32, #tpu.memory_space<vmem>>, vector<1x128xf32>
    %83 = vector.broadcast %82 : vector<1x128xf32> to vector<16x128xf32>
    %84 = arith.addf %81, %83 : vector<16x128xf32>
    %cst_63 = arith.constant 0.000000e+00 : f32
    %85 = vector.broadcast %cst_63 : f32 to vector<16x128xf32>
    %86 = arith.maximumf %84, %85 : vector<16x128xf32>
    %87 = arith.addf %62, %86 : vector<16x128xf32>
    %88 = arith.truncf %87 : vector<16x128xf32> to vector<16x128xbf16>
    %c0_64 = arith.constant 0 : index
    %c0_65 = arith.constant 0 : index
    %89 = vector.load %arg24[%c0_64, %c0_65] : memref<128x128xbf16, #tpu.memory_space<vmem>>, vector<128x128xbf16>
    %cst_66 = arith.constant dense<0.000000e+00> : vector<16x128xf32>
    %90 = tpu.matmul %88, %89, %cst_66 {dimension_numbers = #tpu.dot_dimension_numbers<[1], [0], [0], [1], [0, 0, 1, 1], [], []>} : vector<16x128xbf16>, vector<128x128xbf16>, vector<16x128xf32> -> vector<16x128xf32>
    %c0_67 = arith.constant 0 : index
    %c0_68 = arith.constant 0 : index
    %91 = vector.load %arg25[%c0_67, %c0_68] : memref<1x128xf32, #tpu.memory_space<vmem>>, vector<1x128xf32>
    %92 = vector.broadcast %91 : vector<1x128xf32> to vector<16x128xf32>
    %93 = arith.addf %90, %92 : vector<16x128xf32>
    %cst_69 = arith.constant 0.000000e+00 : f32
    %94 = vector.broadcast %cst_69 : f32 to vector<16x128xf32>
    %95 = arith.maximumf %93, %94 : vector<16x128xf32>
    %96 = arith.truncf %95 : vector<16x128xf32> to vector<16x128xbf16>
    %c0_70 = arith.constant 0 : index
    %c0_71 = arith.constant 0 : index
    %97 = vector.load %arg26[%c0_70, %c0_71] : memref<128x128xbf16, #tpu.memory_space<vmem>>, vector<128x128xbf16>
    %cst_72 = arith.constant dense<0.000000e+00> : vector<16x128xf32>
    %98 = tpu.matmul %96, %97, %cst_72 {dimension_numbers = #tpu.dot_dimension_numbers<[1], [0], [0], [1], [0, 0, 1, 1], [], []>} : vector<16x128xbf16>, vector<128x128xbf16>, vector<16x128xf32> -> vector<16x128xf32>
    %c0_73 = arith.constant 0 : index
    %c0_74 = arith.constant 0 : index
    %99 = vector.load %arg27[%c0_73, %c0_74] : memref<1x128xf32, #tpu.memory_space<vmem>>, vector<1x128xf32>
    %100 = vector.broadcast %99 : vector<1x128xf32> to vector<16x128xf32>
    %101 = arith.addf %98, %100 : vector<16x128xf32>
    %cst_75 = arith.constant 0.000000e+00 : f32
    %102 = vector.broadcast %cst_75 : f32 to vector<16x128xf32>
    %103 = arith.maximumf %101, %102 : vector<16x128xf32>
    %104 = arith.truncf %103 : vector<16x128xf32> to vector<16x128xbf16>
    %c0_76 = arith.constant 0 : index
    %c0_77 = arith.constant 0 : index
    %105 = vector.load %arg28[%c0_76, %c0_77] : memref<128x128xbf16, #tpu.memory_space<vmem>>, vector<128x128xbf16>
    %cst_78 = arith.constant dense<0.000000e+00> : vector<16x128xf32>
    %106 = tpu.matmul %104, %105, %cst_78 {dimension_numbers = #tpu.dot_dimension_numbers<[1], [0], [0], [1], [0, 0, 1, 1], [], []>} : vector<16x128xbf16>, vector<128x128xbf16>, vector<16x128xf32> -> vector<16x128xf32>
    %c0_79 = arith.constant 0 : index
    %c0_80 = arith.constant 0 : index
    %107 = vector.load %arg29[%c0_79, %c0_80] : memref<1x128xf32, #tpu.memory_space<vmem>>, vector<1x128xf32>
    %108 = vector.broadcast %107 : vector<1x128xf32> to vector<16x128xf32>
    %109 = arith.addf %106, %108 : vector<16x128xf32>
    %cst_81 = arith.constant 0.000000e+00 : f32
    %110 = vector.broadcast %cst_81 : f32 to vector<16x128xf32>
    %111 = arith.maximumf %109, %110 : vector<16x128xf32>
    %112 = arith.addf %87, %111 : vector<16x128xf32>
    %113 = arith.truncf %112 : vector<16x128xf32> to vector<16x128xbf16>
    %c0_82 = arith.constant 0 : index
    %c0_83 = arith.constant 0 : index
    %114 = vector.load %arg30[%c0_82, %c0_83] : memref<16x128xbf16, #tpu.memory_space<vmem>>, vector<16x128xbf16>
    tpu.vector_store %arg30[%c0_82, %c0_83], %113 {strides = array<i32>} : memref<16x128xbf16, #tpu.memory_space<vmem>>, vector<16x128xbf16>,
    return
  }
  func.func @transform_0(%arg0: i32) -> (i32, i32) {
    %c0_i32 = arith.constant 0 : i32
    %c0_i32_0 = arith.constant 0 : i32
    return %arg0, %c0_i32 : i32, i32
  }
  func.func @transform_1(%arg0: i32) -> (i32, i32) {
    %c0_i32 = arith.constant 0 : i32
    %c0_i32_0 = arith.constant 0 : i32
    %c0_i32_1 = arith.constant 0 : i32
    return %c0_i32, %c0_i32_0 : i32, i32
  }
  func.func @transform_2(%arg0: i32) -> (i32, i32) {
    %c0_i32 = arith.constant 0 : i32
    %c0_i32_0 = arith.constant 0 : i32
    %c0_i32_1 = arith.constant 0 : i32
    return %c0_i32, %c0_i32_0 : i32, i32
  }
  func.func @transform_3(%arg0: i32) -> (i32, i32) {
    %c0_i32 = arith.constant 0 : i32
    %c0_i32_0 = arith.constant 0 : i32
    %c0_i32_1 = arith.constant 0 : i32
    return %c0_i32, %c0_i32_0 : i32, i32
  }
  func.func @transform_4(%arg0: i32) -> (i32, i32) {
    %c0_i32 = arith.constant 0 : i32
    %c0_i32_0 = arith.constant 0 : i32
    %c0_i32_1 = arith.constant 0 : i32
    return %c0_i32, %c0_i32_0 : i32, i32
  }
  func.func @transform_5(%arg0: i32) -> (i32, i32) {
    %c0_i32 = arith.constant 0 : i32
    %c0_i32_0 = arith.constant 0 : i32
    %c0_i32_1 = arith.constant 0 : i32
    return %c0_i32, %c0_i32_0 : i32, i32
  }
  func.func @transform_6(%arg0: i32) -> (i32, i32) {
    %c0_i32 = arith.constant 0 : i32
    %c0_i32_0 = arith.constant 0 : i32
    %c0_i32_1 = arith.constant 0 : i32
    return %c0_i32, %c0_i32_0 : i32, i32
  }
  func.func @transform_7(%arg0: i32) -> (i32, i32) {
    %c0_i32 = arith.constant 0 : i32
    %c0_i32_0 = arith.constant 0 : i32
    %c0_i32_1 = arith.constant 0 : i32
    return %c0_i32, %c0_i32_0 : i32, i32
  }
  func.func @transform_8(%arg0: i32) -> (i32, i32) {
    %c0_i32 = arith.constant 0 : i32
    %c0_i32_0 = arith.constant 0 : i32
    %c0_i32_1 = arith.constant 0 : i32
    return %c0_i32, %c0_i32_0 : i32, i32
  }
  func.func @transform_9(%arg0: i32) -> (i32, i32) {
    %c0_i32 = arith.constant 0 : i32
    %c0_i32_0 = arith.constant 0 : i32
    %c0_i32_1 = arith.constant 0 : i32
    return %c0_i32, %c0_i32_0 : i32, i32
  }
  func.func @transform_10(%arg0: i32) -> (i32, i32) {
    %c0_i32 = arith.constant 0 : i32
    %c0_i32_0 = arith.constant 0 : i32
    %c0_i32_1 = arith.constant 0 : i32
    return %c0_i32, %c0_i32_0 : i32, i32
  }
  func.func @transform_11(%arg0: i32) -> (i32, i32) {
    %c0_i32 = arith.constant 0 : i32
    %c0_i32_0 = arith.constant 0 : i32
    %c0_i32_1 = arith.constant 0 : i32
    return %c0_i32, %c0_i32_0 : i32, i32
  }
  func.func @transform_12(%arg0: i32) -> (i32, i32) {
    %c0_i32 = arith.constant 0 : i32
    %c0_i32_0 = arith.constant 0 : i32
    %c0_i32_1 = arith.constant 0 : i32
    return %c0_i32, %c0_i32_0 : i32, i32
  }
  func.func @transform_13(%arg0: i32) -> (i32, i32) {
    %c0_i32 = arith.constant 0 : i32
    %c0_i32_0 = arith.constant 0 : i32
    %c0_i32_1 = arith.constant 0 : i32
    return %c0_i32, %c0_i32_0 : i32, i32
  }
  func.func @transform_14(%arg0: i32) -> (i32, i32) {
    %c0_i32 = arith.constant 0 : i32
    %c0_i32_0 = arith.constant 0 : i32
    %c0_i32_1 = arith.constant 0 : i32
    return %c0_i32, %c0_i32_0 : i32, i32
  }
  func.func @transform_15(%arg0: i32) -> (i32, i32) {
    %c0_i32 = arith.constant 0 : i32
    %c0_i32_0 = arith.constant 0 : i32
    %c0_i32_1 = arith.constant 0 : i32
    return %c0_i32, %c0_i32_0 : i32, i32
  }
  func.func @transform_16(%arg0: i32) -> (i32, i32) {
    %c0_i32 = arith.constant 0 : i32
    %c0_i32_0 = arith.constant 0 : i32
    %c0_i32_1 = arith.constant 0 : i32
    return %c0_i32, %c0_i32_0 : i32, i32
  }
  func.func @transform_17(%arg0: i32) -> (i32, i32) {
    %c0_i32 = arith.constant 0 : i32
    %c0_i32_0 = arith.constant 0 : i32
    %c0_i32_1 = arith.constant 0 : i32
    return %c0_i32, %c0_i32_0 : i32, i32
  }
  func.func @transform_18(%arg0: i32) -> (i32, i32) {
    %c0_i32 = arith.constant 0 : i32
    %c0_i32_0 = arith.constant 0 : i32
    %c0_i32_1 = arith.constant 0 : i32
    return %c0_i32, %c0_i32_0 : i32, i32
  }
  func.func @transform_19(%arg0: i32) -> (i32, i32) {
    %c0_i32 = arith.constant 0 : i32
    %c0_i32_0 = arith.constant 0 : i32
    %c0_i32_1 = arith.constant 0 : i32
    return %c0_i32, %c0_i32_0 : i32, i32
  }
  func.func @transform_20(%arg0: i32) -> (i32, i32) {
    %c0_i32 = arith.constant 0 : i32
    %c0_i32_0 = arith.constant 0 : i32
    %c0_i32_1 = arith.constant 0 : i32
    return %c0_i32, %c0_i32_0 : i32, i32
  }
  func.func @transform_21(%arg0: i32) -> (i32, i32) {
    %c0_i32 = arith.constant 0 : i32
    %c0_i32_0 = arith.constant 0 : i32
    %c0_i32_1 = arith.constant 0 : i32
    return %c0_i32, %c0_i32_0 : i32, i32
  }
  func.func @transform_22(%arg0: i32) -> (i32, i32) {
    %c0_i32 = arith.constant 0 : i32
    %c0_i32_0 = arith.constant 0 : i32
    %c0_i32_1 = arith.constant 0 : i32
    return %c0_i32, %c0_i32_0 : i32, i32
  }
  func.func @transform_23(%arg0: i32) -> (i32, i32) {
    %c0_i32 = arith.constant 0 : i32
    %c0_i32_0 = arith.constant 0 : i32
    %c0_i32_1 = arith.constant 0 : i32
    return %c0_i32, %c0_i32_0 : i32, i32
  }
  func.func @transform_24(%arg0: i32) -> (i32, i32) {
    %c0_i32 = arith.constant 0 : i32
    %c0_i32_0 = arith.constant 0 : i32
    %c0_i32_1 = arith.constant 0 : i32
    return %c0_i32, %c0_i32_0 : i32, i32
  }
  func.func @transform_25(%arg0: i32) -> (i32, i32) {
    %c0_i32 = arith.constant 0 : i32
    %c0_i32_0 = arith.constant 0 : i32
    %c0_i32_1 = arith.constant 0 : i32
    return %c0_i32, %c0_i32_0 : i32, i32
  }
  func.func @transform_26(%arg0: i32) -> (i32, i32) {
    %c0_i32 = arith.constant 0 : i32
    %c0_i32_0 = arith.constant 0 : i32
    %c0_i32_1 = arith.constant 0 : i32
    return %c0_i32, %c0_i32_0 : i32, i32
  }
  func.func @transform_27(%arg0: i32) -> (i32, i32) {
    %c0_i32 = arith.constant 0 : i32
    %c0_i32_0 = arith.constant 0 : i32
    %c0_i32_1 = arith.constant 0 : i32
    return %c0_i32, %c0_i32_0 : i32, i32
  }
  func.func @transform_28(%arg0: i32) -> (i32, i32) {
    %c0_i32 = arith.constant 0 : i32
    %c0_i32_0 = arith.constant 0 : i32
    %c0_i32_1 = arith.constant 0 : i32
    return %c0_i32, %c0_i32_0 : i32, i32
  }
  func.func @transform_29(%arg0: i32) -> (i32, i32) {
    %c0_i32 = arith.constant 0 : i32
    %c0_i32_0 = arith.constant 0 : i32
    return %arg0, %c0_i32 : i32, i32
  }
}

module attributes {stable_mosaic.version = 11 : i64} {
  func.func @kernel(%arg0: i32, %arg1: memref<16x128xbf16, #tpu.memory_space<vmem>>, %arg2: memref<128x128xbf16, #tpu.memory_space<vmem>>, %arg3: memref<1x128xf32, #tpu.memory_space<vmem>>, %arg4: memref<128x128xbf16, #tpu.memory_space<vmem>>, %arg5: memref<1x128xf32, #tpu.memory_space<vmem>>, %arg6: memref<128x128xbf16, #tpu.memory_space<vmem>>, %arg7: memref<1x128xf32, #tpu.memory_space<vmem>>, %arg8: memref<128x128xbf16, #tpu.memory_space<vmem>>, %arg9: memref<1x128xf32, #tpu.memory_space<vmem>>, %arg10: memref<128x128xbf16, #tpu.memory_space<vmem>>, %arg11: memref<1x128xf32, #tpu.memory_space<vmem>>, %arg12: memref<128x128xbf16, #tpu.memory_space<vmem>>, %arg13: memref<1x128xf32, #tpu.memory_space<vmem>>, %arg14: memref<128x32xbf16, #tpu.memory_space<vmem>>, %arg15: memref<1x32xf32, #tpu.memory_space<vmem>>, %arg16: memref<32x128xbf16, #tpu.memory_space<vmem>>, %arg17: memref<1x128xf32, #tpu.memory_space<vmem>>, %arg18: memref<128x128xbf16, #tpu.memory_space<vmem>>, %arg19: memref<1x128xf32, #tpu.memory_space<vmem>>, %arg20: memref<128x128xbf16, #tpu.memory_space<vmem>>, %arg21: memref<1x128xf32, #tpu.memory_space<vmem>>, %arg22: memref<128x128xbf16, #tpu.memory_space<vmem>>, %arg23: memref<1x128xf32, #tpu.memory_space<vmem>>, %arg24: memref<128x128xbf16, #tpu.memory_space<vmem>>, %arg25: memref<1x128xf32, #tpu.memory_space<vmem>>, %arg26: memref<128x128xbf16, #tpu.memory_space<vmem>>, %arg27: memref<1x128xf32, #tpu.memory_space<vmem>>, %arg28: memref<128x128xbf16, #tpu.memory_space<vmem>>, %arg29: memref<1x128xf32, #tpu.memory_space<vmem>>, %arg30: memref<16x128xbf16, #tpu.memory_space<vmem>>) attributes {dimension_semantics = [#tpu.dimension_semantics<parallel>], iteration_bounds = array<i64: 1>, scalar_prefetch = 0 : i64, scratch_operands = 0 : i64, tpu.core_type = #tpu.core_type<tc>, window_params = [{transform_indices = @transform_0, window_bounds = array<i64: 16, 128>}, {pipeline_mode = #tpu.pipeline_mode<synchronous>, transform_indices = @transform_1, window_bounds = array<i64: 128, 128>}, {pipeline_mode = #tpu.pipeline_mode<synchronous>, transform_indices = @transform_2, window_bounds = array<i64: 1, 128>}, {pipeline_mode = #tpu.pipeline_mode<synchronous>, transform_indices = @transform_3, window_bounds = array<i64: 128, 128>}, {pipeline_mode = #tpu.pipeline_mode<synchronous>, transform_indices = @transform_4, window_bounds = array<i64: 1, 128>}, {pipeline_mode = #tpu.pipeline_mode<synchronous>, transform_indices = @transform_5, window_bounds = array<i64: 128, 128>}, {pipeline_mode = #tpu.pipeline_mode<synchronous>, transform_indices = @transform_6, window_bounds = array<i64: 1, 128>}, {pipeline_mode = #tpu.pipeline_mode<synchronous>, transform_indices = @transform_7, window_bounds = array<i64: 128, 128>}, {pipeline_mode = #tpu.pipeline_mode<synchronous>, transform_indices = @transform_8, window_bounds = array<i64: 1, 128>}, {pipeline_mode = #tpu.pipeline_mode<synchronous>, transform_indices = @transform_9, window_bounds = array<i64: 128, 128>}, {pipeline_mode = #tpu.pipeline_mode<synchronous>, transform_indices = @transform_10, window_bounds = array<i64: 1, 128>}, {pipeline_mode = #tpu.pipeline_mode<synchronous>, transform_indices = @transform_11, window_bounds = array<i64: 128, 128>}, {pipeline_mode = #tpu.pipeline_mode<synchronous>, transform_indices = @transform_12, window_bounds = array<i64: 1, 128>}, {pipeline_mode = #tpu.pipeline_mode<synchronous>, transform_indices = @transform_13, window_bounds = array<i64: 128, 32>}, {pipeline_mode = #tpu.pipeline_mode<synchronous>, transform_indices = @transform_14, window_bounds = array<i64: 1, 32>}, {pipeline_mode = #tpu.pipeline_mode<synchronous>, transform_indices = @transform_15, window_bounds = array<i64: 32, 128>}, {pipeline_mode = #tpu.pipeline_mode<synchronous>, transform_indices = @transform_16, window_bounds = array<i64: 1, 128>}, {pipeline_mode = #tpu.pipeline_mode<synchronous>, transform_indices = @transform_17, window_bounds = array<i64: 128, 128>}, {pipeline_mode = #tpu.pipeline_mode<synchronous>, transform_indices = @transform_18, window_bounds = array<i64: 1, 128>}, {pipeline_mode = #tpu.pipeline_mode<synchronous>, transform_indices = @transform_19, window_bounds = array<i64: 128, 128>}, {pipeline_mode = #tpu.pipeline_mode<synchronous>, transform_indices = @transform_20, window_bounds = array<i64: 1, 128>}, {pipeline_mode = #tpu.pipeline_mode<synchronous>, transform_indices = @transform_21, window_bounds = array<i64: 128, 128>}, {pipeline_mode = #tpu.pipeline_mode<synchronous>, transform_indices = @transform_22, window_bounds = array<i64: 1, 128>}, {pipeline_mode = #tpu.pipeline_mode<synchronous>, transform_indices = @transform_23, window_bounds = array<i64: 128, 128>}, {pipeline_mode = #tpu.pipeline_mode<synchronous>, transform_indices = @transform_24, window_bounds = array<i64: 1, 128>}, {pipeline_mode = #tpu.pipeline_mode<synchronous>, transform_indices = @transform_25, window_bounds = array<i64: 128, 128>}, {pipeline_mode = #tpu.pipeline_mode<synchronous>, transform_indices = @transform_26, window_bounds = array<i64: 1, 128>}, {pipeline_mode = #tpu.pipeline_mode<synchronous>, transform_indices = @transform_27, window_bounds = array<i64: 128, 128>}, {pipeline_mode = #tpu.pipeline_mode<synchronous>, transform_indices = @transform_28, window_bounds = array<i64: 1, 128>}, {transform_indices = @transform_29, window_bounds = array<i64: 16, 128>}]} {
    %c0 = arith.constant 0 : index
    %c0_0 = arith.constant 0 : index
    %0 = vector.load %arg1[%c0, %c0_0] : memref<16x128xbf16, #tpu.memory_space<vmem>>, vector<16x128xbf16>
    %c0_1 = arith.constant 0 : index
    %c0_2 = arith.constant 0 : index
    %1 = vector.load %arg2[%c0_1, %c0_2] : memref<128x128xbf16, #tpu.memory_space<vmem>>, vector<128x128xbf16>
    %cst = arith.constant dense<0.000000e+00> : vector<16x128xf32>
    %2 = tpu.matmul %0, %1, %cst {dimension_numbers = #tpu.dot_dimension_numbers<[1], [0], [0], [1], [0, 0, 1, 1], [], []>} : vector<16x128xbf16>, vector<128x128xbf16>, vector<16x128xf32> -> vector<16x128xf32>
    %c0_3 = arith.constant 0 : index
    %c0_4 = arith.constant 0 : index
    %3 = vector.load %arg3[%c0_3, %c0_4] : memref<1x128xf32, #tpu.memory_space<vmem>>, vector<1x128xf32>
    %4 = vector.broadcast %3 : vector<1x128xf32> to vector<16x128xf32>
    %5 = arith.addf %2, %4 : vector<16x128xf32>
    %cst_5 = arith.constant 0.000000e+00 : f32
    %6 = vector.broadcast %cst_5 : f32 to vector<16x128xf32>
    %7 = arith.maximumf %5, %6 : vector<16x128xf32>
    %8 = arith.truncf %7 : vector<16x128xf32> to vector<16x128xbf16>
    %c0_6 = arith.constant 0 : index
    %c0_7 = arith.constant 0 : index
    %9 = vector.load %arg4[%c0_6, %c0_7] : memref<128x128xbf16, #tpu.memory_space<vmem>>, vector<128x128xbf16>
    %cst_8 = arith.constant dense<0.000000e+00> : vector<16x128xf32>
    %10 = tpu.matmul %8, %9, %cst_8 {dimension_numbers = #tpu.dot_dimension_numbers<[1], [0], [0], [1], [0, 0, 1, 1], [], []>} : vector<16x128xbf16>, vector<128x128xbf16>, vector<16x128xf32> -> vector<16x128xf32>
    %c0_9 = arith.constant 0 : index
    %c0_10 = arith.constant 0 : index
    %11 = vector.load %arg5[%c0_9, %c0_10] : memref<1x128xf32, #tpu.memory_space<vmem>>, vector<1x128xf32>
    %12 = vector.broadcast %11 : vector<1x128xf32> to vector<16x128xf32>
    %13 = arith.addf %10, %12 : vector<16x128xf32>
    %cst_11 = arith.constant 0.000000e+00 : f32
    %14 = vector.broadcast %cst_11 : f32 to vector<16x128xf32>
    %15 = arith.maximumf %13, %14 : vector<16x128xf32>
    %16 = arith.truncf %15 : vector<16x128xf32> to vector<16x128xbf16>
    %c0_12 = arith.constant 0 : index
    %c0_13 = arith.constant 0 : index
    %17 = vector.load %arg6[%c0_12, %c0_13] : memref<128x128xbf16, #tpu.memory_space<vmem>>, vector<128x128xbf16>
    %cst_14 = arith.constant dense<0.000000e+00> : vector<16x128xf32>
    %18 = tpu.matmul %16, %17, %cst_14 {dimension_numbers = #tpu.dot_dimension_numbers<[1], [0], [0], [1], [0, 0, 1, 1], [], []>} : vector<16x128xbf16>, vector<128x128xbf16>, vector<16x128xf32> -> vector<16x128xf32>
    %c0_15 = arith.constant 0 : index
    %c0_16 = arith.constant 0 : index
    %19 = vector.load %arg7[%c0_15, %c0_16] : memref<1x128xf32, #tpu.memory_space<vmem>>, vector<1x128xf32>
    %20 = vector.broadcast %19 : vector<1x128xf32> to vector<16x128xf32>
    %21 = arith.addf %18, %20 : vector<16x128xf32>
    %cst_17 = arith.constant 0.000000e+00 : f32
    %22 = vector.broadcast %cst_17 : f32 to vector<16x128xf32>
    %23 = arith.maximumf %21, %22 : vector<16x128xf32>
    %24 = arith.extf %0 : vector<16x128xbf16> to vector<16x128xf32>
    %25 = arith.addf %24, %23 : vector<16x128xf32>
    %26 = arith.truncf %25 : vector<16x128xf32> to vector<16x128xbf16>
    %c0_18 = arith.constant 0 : index
    %c0_19 = arith.constant 0 : index
    %27 = vector.load %arg8[%c0_18, %c0_19] : memref<128x128xbf16, #tpu.memory_space<vmem>>, vector<128x128xbf16>
    %cst_20 = arith.constant dense<0.000000e+00> : vector<16x128xf32>
    %28 = tpu.matmul %26, %27, %cst_20 {dimension_numbers = #tpu.dot_dimension_numbers<[1], [0], [0], [1], [0, 0, 1, 1], [], []>} : vector<16x128xbf16>, vector<128x128xbf16>, vector<16x128xf32> -> vector<16x128xf32>
    %c0_21 = arith.constant 0 : index
    %c0_22 = arith.constant 0 : index
    %29 = vector.load %arg9[%c0_21, %c0_22] : memref<1x128xf32, #tpu.memory_space<vmem>>, vector<1x128xf32>
    %30 = vector.broadcast %29 : vector<1x128xf32> to vector<16x128xf32>
    %31 = arith.addf %28, %30 : vector<16x128xf32>
    %cst_23 = arith.constant 0.000000e+00 : f32
    %32 = vector.broadcast %cst_23 : f32 to vector<16x128xf32>
    %33 = arith.maximumf %31, %32 : vector<16x128xf32>
    %34 = arith.truncf %33 : vector<16x128xf32> to vector<16x128xbf16>
    %c0_24 = arith.constant 0 : index
    %c0_25 = arith.constant 0 : index
    %35 = vector.load %arg10[%c0_24, %c0_25] : memref<128x128xbf16, #tpu.memory_space<vmem>>, vector<128x128xbf16>
    %cst_26 = arith.constant dense<0.000000e+00> : vector<16x128xf32>
    %36 = tpu.matmul %34, %35, %cst_26 {dimension_numbers = #tpu.dot_dimension_numbers<[1], [0], [0], [1], [0, 0, 1, 1], [], []>} : vector<16x128xbf16>, vector<128x128xbf16>, vector<16x128xf32> -> vector<16x128xf32>
    %c0_27 = arith.constant 0 : index
    %c0_28 = arith.constant 0 : index
    %37 = vector.load %arg11[%c0_27, %c0_28] : memref<1x128xf32, #tpu.memory_space<vmem>>, vector<1x128xf32>
    %38 = vector.broadcast %37 : vector<1x128xf32> to vector<16x128xf32>
    %39 = arith.addf %36, %38 : vector<16x128xf32>
    %cst_29 = arith.constant 0.000000e+00 : f32
    %40 = vector.broadcast %cst_29 : f32 to vector<16x128xf32>
    %41 = arith.maximumf %39, %40 : vector<16x128xf32>
    %42 = arith.truncf %41 : vector<16x128xf32> to vector<16x128xbf16>
    %c0_30 = arith.constant 0 : index
    %c0_31 = arith.constant 0 : index
    %43 = vector.load %arg12[%c0_30, %c0_31] : memref<128x128xbf16, #tpu.memory_space<vmem>>, vector<128x128xbf16>
    %cst_32 = arith.constant dense<0.000000e+00> : vector<16x128xf32>
    %44 = tpu.matmul %42, %43, %cst_32 {dimension_numbers = #tpu.dot_dimension_numbers<[1], [0], [0], [1], [0, 0, 1, 1], [], []>} : vector<16x128xbf16>, vector<128x128xbf16>, vector<16x128xf32> -> vector<16x128xf32>
    %c0_33 = arith.constant 0 : index
    %c0_34 = arith.constant 0 : index
    %45 = vector.load %arg13[%c0_33, %c0_34] : memref<1x128xf32, #tpu.memory_space<vmem>>, vector<1x128xf32>
    %46 = vector.broadcast %45 : vector<1x128xf32> to vector<16x128xf32>
    %47 = arith.addf %44, %46 : vector<16x128xf32>
    %cst_35 = arith.constant 0.000000e+00 : f32
    %48 = vector.broadcast %cst_35 : f32 to vector<16x128xf32>
    %49 = arith.maximumf %47, %48 : vector<16x128xf32>
    %50 = arith.addf %25, %49 : vector<16x128xf32>
    %51 = arith.truncf %50 : vector<16x128xf32> to vector<16x128xbf16>
    %c0_36 = arith.constant 0 : index
    %c0_37 = arith.constant 0 : index
    %52 = vector.load %arg14[%c0_36, %c0_37] : memref<128x32xbf16, #tpu.memory_space<vmem>>, vector<128x32xbf16>
    %cst_38 = arith.constant dense<0.000000e+00> : vector<16x32xf32>
    %53 = tpu.matmul %51, %52, %cst_38 {dimension_numbers = #tpu.dot_dimension_numbers<[1], [0], [0], [1], [0, 0, 1, 1], [], []>} : vector<16x128xbf16>, vector<128x32xbf16>, vector<16x32xf32> -> vector<16x32xf32>
    %c0_39 = arith.constant 0 : index
    %c0_40 = arith.constant 0 : index
    %54 = vector.load %arg15[%c0_39, %c0_40] : memref<1x32xf32, #tpu.memory_space<vmem>>, vector<1x32xf32>
    %55 = vector.broadcast %54 : vector<1x32xf32> to vector<16x32xf32>
    %56 = arith.addf %53, %55 : vector<16x32xf32>
    %57 = arith.truncf %56 : vector<16x32xf32> to vector<16x32xbf16>
    %c0_41 = arith.constant 0 : index
    %c0_42 = arith.constant 0 : index
    %58 = vector.load %arg16[%c0_41, %c0_42] : memref<32x128xbf16, #tpu.memory_space<vmem>>, vector<32x128xbf16>
    %cst_43 = arith.constant dense<0.000000e+00> : vector<16x128xf32>
    %59 = tpu.matmul %57, %58, %cst_43 {dimension_numbers = #tpu.dot_dimension_numbers<[1], [0], [0], [1], [0, 0, 1, 1], [], []>} : vector<16x32xbf16>, vector<32x128xbf16>, vector<16x128xf32> -> vector<16x128xf32>
    %c0_44 = arith.constant 0 : index
    %c0_45 = arith.constant 0 : index
    %60 = vector.load %arg17[%c0_44, %c0_45] : memref<1x128xf32, #tpu.memory_space<vmem>>, vector<1x128xf32>
    %61 = vector.broadcast %60 : vector<1x128xf32> to vector<16x128xf32>
    %62 = arith.addf %59, %61 : vector<16x128xf32>
    %63 = arith.truncf %62 : vector<16x128xf32> to vector<16x128xbf16>
    %c0_46 = arith.constant 0 : index
    %c0_47 = arith.constant 0 : index
    %64 = vector.load %arg18[%c0_46, %c0_47] : memref<128x128xbf16, #tpu.memory_space<vmem>>, vector<128x128xbf16>
    %cst_48 = arith.constant dense<0.000000e+00> : vector<16x128xf32>
    %65 = tpu.matmul %63, %64, %cst_48 {dimension_numbers = #tpu.dot_dimension_numbers<[1], [0], [0], [1], [0, 0, 1, 1], [], []>} : vector<16x128xbf16>, vector<128x128xbf16>, vector<16x128xf32> -> vector<16x128xf32>
    %c0_49 = arith.constant 0 : index
    %c0_50 = arith.constant 0 : index
    %66 = vector.load %arg19[%c0_49, %c0_50] : memref<1x128xf32, #tpu.memory_space<vmem>>, vector<1x128xf32>
    %67 = vector.broadcast %66 : vector<1x128xf32> to vector<16x128xf32>
    %68 = arith.addf %65, %67 : vector<16x128xf32>
    %cst_51 = arith.constant 0.000000e+00 : f32
    %69 = vector.broadcast %cst_51 : f32 to vector<16x128xf32>
    %70 = arith.maximumf %68, %69 : vector<16x128xf32>
    %71 = arith.truncf %70 : vector<16x128xf32> to vector<16x128xbf16>
    %c0_52 = arith.constant 0 : index
    %c0_53 = arith.constant 0 : index
    %72 = vector.load %arg20[%c0_52, %c0_53] : memref<128x128xbf16, #tpu.memory_space<vmem>>, vector<128x128xbf16>
    %cst_54 = arith.constant dense<0.000000e+00> : vector<16x128xf32>
    %73 = tpu.matmul %71, %72, %cst_54 {dimension_numbers = #tpu.dot_dimension_numbers<[1], [0], [0], [1], [0, 0, 1, 1], [], []>} : vector<16x128xbf16>, vector<128x128xbf16>, vector<16x128xf32> -> vector<16x128xf32>
    %c0_55 = arith.constant 0 : index
    %c0_56 = arith.constant 0 : index
    %74 = vector.load %arg21[%c0_55, %c0_56] : memref<1x128xf32, #tpu.memory_space<vmem>>, vector<1x128xf32>
    %75 = vector.broadcast %74 : vector<1x128xf32> to vector<16x128xf32>
    %76 = arith.addf %73, %75 : vector<16x128xf32>
    %cst_57 = arith.constant 0.000000e+00 : f32
    %77 = vector.broadcast %cst_57 : f32 to vector<16x128xf32>
    %78 = arith.maximumf %76, %77 : vector<16x128xf32>
    %79 = arith.truncf %78 : vector<16x128xf32> to vector<16x128xbf16>
    %c0_58 = arith.constant 0 : index
    %c0_59 = arith.constant 0 : index
    %80 = vector.load %arg22[%c0_58, %c0_59] : memref<128x128xbf16, #tpu.memory_space<vmem>>, vector<128x128xbf16>
    %cst_60 = arith.constant dense<0.000000e+00> : vector<16x128xf32>
    %81 = tpu.matmul %79, %80, %cst_60 {dimension_numbers = #tpu.dot_dimension_numbers<[1], [0], [0], [1], [0, 0, 1, 1], [], []>} : vector<16x128xbf16>, vector<128x128xbf16>, vector<16x128xf32> -> vector<16x128xf32>
    %c0_61 = arith.constant 0 : index
    %c0_62 = arith.constant 0 : index
    %82 = vector.load %arg23[%c0_61, %c0_62] : memref<1x128xf32, #tpu.memory_space<vmem>>, vector<1x128xf32>
    %83 = vector.broadcast %82 : vector<1x128xf32> to vector<16x128xf32>
    %84 = arith.addf %81, %83 : vector<16x128xf32>
    %cst_63 = arith.constant 0.000000e+00 : f32
    %85 = vector.broadcast %cst_63 : f32 to vector<16x128xf32>
    %86 = arith.maximumf %84, %85 : vector<16x128xf32>
    %87 = arith.addf %62, %86 : vector<16x128xf32>
    %88 = arith.truncf %87 : vector<16x128xf32> to vector<16x128xbf16>
    %c0_64 = arith.constant 0 : index
    %c0_65 = arith.constant 0 : index
    %89 = vector.load %arg24[%c0_64, %c0_65] : memref<128x128xbf16, #tpu.memory_space<vmem>>, vector<128x128xbf16>
    %cst_66 = arith.constant dense<0.000000e+00> : vector<16x128xf32>
    %90 = tpu.matmul %88, %89, %cst_66 {dimension_numbers = #tpu.dot_dimension_numbers<[1], [0], [0], [1], [0, 0, 1, 1], [], []>} : vector<16x128xbf16>, vector<128x128xbf16>, vector<16x128xf32> -> vector<16x128xf32>
    %c0_67 = arith.constant 0 : index
    %c0_68 = arith.constant 0 : index
    %91 = vector.load %arg25[%c0_67, %c0_68] : memref<1x128xf32, #tpu.memory_space<vmem>>, vector<1x128xf32>
    %92 = vector.broadcast %91 : vector<1x128xf32> to vector<16x128xf32>
    %93 = arith.addf %90, %92 : vector<16x128xf32>
    %cst_69 = arith.constant 0.000000e+00 : f32
    %94 = vector.broadcast %cst_69 : f32 to vector<16x128xf32>
    %95 = arith.maximumf %93, %94 : vector<16x128xf32>
    %96 = arith.truncf %95 : vector<16x128xf32> to vector<16x128xbf16>
    %c0_70 = arith.constant 0 : index
    %c0_71 = arith.constant 0 : index
    %97 = vector.load %arg26[%c0_70, %c0_71] : memref<128x128xbf16, #tpu.memory_space<vmem>>, vector<128x128xbf16>
    %cst_72 = arith.constant dense<0.000000e+00> : vector<16x128xf32>
    %98 = tpu.matmul %96, %97, %cst_72 {dimension_numbers = #tpu.dot_dimension_numbers<[1], [0], [0], [1], [0, 0, 1, 1], [], []>} : vector<16x128xbf16>, vector<128x128xbf16>, vector<16x128xf32> -> vector<16x128xf32>
    %c0_73 = arith.constant 0 : index
    %c0_74 = arith.constant 0 : index
    %99 = vector.load %arg27[%c0_73, %c0_74] : memref<1x128xf32, #tpu.memory_space<vmem>>, vector<1x128xf32>
    %100 = vector.broadcast %99 : vector<1x128xf32> to vector<16x128xf32>
    %101 = arith.addf %98, %100 : vector<16x128xf32>
    %cst_75 = arith.constant 0.000000e+00 : f32
    %102 = vector.broadcast %cst_75 : f32 to vector<16x128xf32>
    %103 = arith.maximumf %101, %102 : vector<16x128xf32>
    %104 = arith.truncf %103 : vector<16x128xf32> to vector<16x128xbf16>
    %c0_76 = arith.constant 0 : index
    %c0_77 = arith.constant 0 : index
    %105 = vector.load %arg28[%c0_76, %c0_77] : memref<128x128xbf16, #tpu.memory_space<vmem>>, vector<128x128xbf16>
    %cst_78 = arith.constant dense<0.000000e+00> : vector<16x128xf32>
    %106 = tpu.matmul %104, %105, %cst_78 {dimension_numbers = #tpu.dot_dimension_numbers<[1], [0], [0], [1], [0, 0, 1, 1], [], []>} : vector<16x128xbf16>, vector<128x128xbf16>, vector<16x128xf32> -> vector<16x128xf32>
    %c0_79 = arith.constant 0 : index
    %c0_80 = arith.constant 0 : index
    %107 = vector.load %arg29[%c0_79, %c0_80] : memref<1x128xf32, #tpu.memory_space<vmem>>, vector<1x128xf32>
    %108 = vector.broadcast %107 : vector<1x128xf32> to vector<16x128xf32>
    %109 = arith.addf %106, %108 : vector<16x128xf32>
    %cst_81 = arith.constant 0.000000e+00 : f32
    %110 = vector.broadcast %cst_81 : f32 to vector<16x128xf32>
    %111 = arith.maximumf %109, %110 : vector<16x128xf32>
    %112 = arith.addf %87, %111 : vector<16x128xf32>
    %113 = arith.truncf %112 : vector<16x128xf32> to vector<16x128xbf16>
    %c0_82 = arith.constant 0 : index
    %c0_83 = arith.constant 0 : index
    %114 = vector.load %arg30[%c0_82, %c0_83] : memref<16x128xbf16, #tpu.memory_space<vmem>>, vector<16x128xbf16>
    tpu.vector_store %arg30[%c0_82, %c0_83], %113 {strides = array<i32>} : memref<16x128xbf16, #tpu.memory_space<vmem>>, vector<16x128xbf16>,
    return
  }
  func.func @transform_0(%arg0: i32) -> (i32, i32) {
    %c0_i32 = arith.constant 0 : i32
    %c0_i32_0 = arith.constant 0 : i32
    return %arg0, %c0_i32 : i32, i32
  }
  func.func @transform_1(%arg0: i32) -> (i32, i32) {
    %c0_i32 = arith.constant 0 : i32
    %c0_i32_0 = arith.constant 0 : i32
    %c0_i32_1 = arith.constant 0 : i32
    return %c0_i32, %c0_i32_0 : i32, i32
  }
  func.func @transform_2(%arg0: i32) -> (i32, i32) {
    %c0_i32 = arith.constant 0 : i32
    %c0_i32_0 = arith.constant 0 : i32
    %c0_i32_1 = arith.constant 0 : i32
    return %c0_i32, %c0_i32_0 : i32, i32
  }
  func.func @transform_3(%arg0: i32) -> (i32, i32) {
    %c0_i32 = arith.constant 0 : i32
    %c0_i32_0 = arith.constant 0 : i32
    %c0_i32_1 = arith.constant 0 : i32
    return %c0_i32, %c0_i32_0 : i32, i32
  }
  func.func @transform_4(%arg0: i32) -> (i32, i32) {
    %c0_i32 = arith.constant 0 : i32
    %c0_i32_0 = arith.constant 0 : i32
    %c0_i32_1 = arith.constant 0 : i32
    return %c0_i32, %c0_i32_0 : i32, i32
  }
  func.func @transform_5(%arg0: i32) -> (i32, i32) {
    %c0_i32 = arith.constant 0 : i32
    %c0_i32_0 = arith.constant 0 : i32
    %c0_i32_1 = arith.constant 0 : i32
    return %c0_i32, %c0_i32_0 : i32, i32
  }
  func.func @transform_6(%arg0: i32) -> (i32, i32) {
    %c0_i32 = arith.constant 0 : i32
    %c0_i32_0 = arith.constant 0 : i32
    %c0_i32_1 = arith.constant 0 : i32
    return %c0_i32, %c0_i32_0 : i32, i32
  }
  func.func @transform_7(%arg0: i32) -> (i32, i32) {
    %c0_i32 = arith.constant 0 : i32
    %c0_i32_0 = arith.constant 0 : i32
    %c0_i32_1 = arith.constant 0 : i32
    return %c0_i32, %c0_i32_0 : i32, i32
  }
  func.func @transform_8(%arg0: i32) -> (i32, i32) {
    %c0_i32 = arith.constant 0 : i32
    %c0_i32_0 = arith.constant 0 : i32
    %c0_i32_1 = arith.constant 0 : i32
    return %c0_i32, %c0_i32_0 : i32, i32
  }
  func.func @transform_9(%arg0: i32) -> (i32, i32) {
    %c0_i32 = arith.constant 0 : i32
    %c0_i32_0 = arith.constant 0 : i32
    %c0_i32_1 = arith.constant 0 : i32
    return %c0_i32, %c0_i32_0 : i32, i32
  }
  func.func @transform_10(%arg0: i32) -> (i32, i32) {
    %c0_i32 = arith.constant 0 : i32
    %c0_i32_0 = arith.constant 0 : i32
    %c0_i32_1 = arith.constant 0 : i32
    return %c0_i32, %c0_i32_0 : i32, i32
  }
  func.func @transform_11(%arg0: i32) -> (i32, i32) {
    %c0_i32 = arith.constant 0 : i32
    %c0_i32_0 = arith.constant 0 : i32
    %c0_i32_1 = arith.constant 0 : i32
    return %c0_i32, %c0_i32_0 : i32, i32
  }
  func.func @transform_12(%arg0: i32) -> (i32, i32) {
    %c0_i32 = arith.constant 0 : i32
    %c0_i32_0 = arith.constant 0 : i32
    %c0_i32_1 = arith.constant 0 : i32
    return %c0_i32, %c0_i32_0 : i32, i32
  }
  func.func @transform_13(%arg0: i32) -> (i32, i32) {
    %c0_i32 = arith.constant 0 : i32
    %c0_i32_0 = arith.constant 0 : i32
    %c0_i32_1 = arith.constant 0 : i32
    return %c0_i32, %c0_i32_0 : i32, i32
  }
  func.func @transform_14(%arg0: i32) -> (i32, i32) {
    %c0_i32 = arith.constant 0 : i32
    %c0_i32_0 = arith.constant 0 : i32
    %c0_i32_1 = arith.constant 0 : i32
    return %c0_i32, %c0_i32_0 : i32, i32
  }
  func.func @transform_15(%arg0: i32) -> (i32, i32) {
    %c0_i32 = arith.constant 0 : i32
    %c0_i32_0 = arith.constant 0 : i32
    %c0_i32_1 = arith.constant 0 : i32
    return %c0_i32, %c0_i32_0 : i32, i32
  }
  func.func @transform_16(%arg0: i32) -> (i32, i32) {
    %c0_i32 = arith.constant 0 : i32
    %c0_i32_0 = arith.constant 0 : i32
    %c0_i32_1 = arith.constant 0 : i32
    return %c0_i32, %c0_i32_0 : i32, i32
  }
  func.func @transform_17(%arg0: i32) -> (i32, i32) {
    %c0_i32 = arith.constant 0 : i32
    %c0_i32_0 = arith.constant 0 : i32
    %c0_i32_1 = arith.constant 0 : i32
    return %c0_i32, %c0_i32_0 : i32, i32
  }
  func.func @transform_18(%arg0: i32) -> (i32, i32) {
    %c0_i32 = arith.constant 0 : i32
    %c0_i32_0 = arith.constant 0 : i32
    %c0_i32_1 = arith.constant 0 : i32
    return %c0_i32, %c0_i32_0 : i32, i32
  }
  func.func @transform_19(%arg0: i32) -> (i32, i32) {
    %c0_i32 = arith.constant 0 : i32
    %c0_i32_0 = arith.constant 0 : i32
    %c0_i32_1 = arith.constant 0 : i32
    return %c0_i32, %c0_i32_0 : i32, i32
  }
  func.func @transform_20(%arg0: i32) -> (i32, i32) {
    %c0_i32 = arith.constant 0 : i32
    %c0_i32_0 = arith.constant 0 : i32
    %c0_i32_1 = arith.constant 0 : i32
    return %c0_i32, %c0_i32_0 : i32, i32
  }
  func.func @transform_21(%arg0: i32) -> (i32, i32) {
    %c0_i32 = arith.constant 0 : i32
    %c0_i32_0 = arith.constant 0 : i32
    %c0_i32_1 = arith.constant 0 : i32
    return %c0_i32, %c0_i32_0 : i32, i32
  }
  func.func @transform_22(%arg0: i32) -> (i32, i32) {
    %c0_i32 = arith.constant 0 : i32
    %c0_i32_0 = arith.constant 0 : i32
    %c0_i32_1 = arith.constant 0 : i32
    return %c0_i32, %c0_i32_0 : i32, i32
  }
  func.func @transform_23(%arg0: i32) -> (i32, i32) {
    %c0_i32 = arith.constant 0 : i32
    %c0_i32_0 = arith.constant 0 : i32
    %c0_i32_1 = arith.constant 0 : i32
    return %c0_i32, %c0_i32_0 : i32, i32
  }
  func.func @transform_24(%arg0: i32) -> (i32, i32) {
    %c0_i32 = arith.constant 0 : i32
    %c0_i32_0 = arith.constant 0 : i32
    %c0_i32_1 = arith.constant 0 : i32
    return %c0_i32, %c0_i32_0 : i32, i32
  }
  func.func @transform_25(%arg0: i32) -> (i32, i32) {
    %c0_i32 = arith.constant 0 : i32
    %c0_i32_0 = arith.constant 0 : i32
    %c0_i32_1 = arith.constant 0 : i32
    return %c0_i32, %c0_i32_0 : i32, i32
  }
  func.func @transform_26(%arg0: i32) -> (i32, i32) {
    %c0_i32 = arith.constant 0 : i32
    %c0_i32_0 = arith.constant 0 : i32
    %c0_i32_1 = arith.constant 0 : i32
    return %c0_i32, %c0_i32_0 : i32, i32
  }
  func.func @transform_27(%arg0: i32) -> (i32, i32) {
    %c0_i32 = arith.constant 0 : i32
    %c0_i32_0 = arith.constant 0 : i32
    %c0_i32_1 = arith.constant 0 : i32
    return %c0_i32, %c0_i32_0 : i32, i32
  }
  func.func @transform_28(%arg0: i32) -> (i32, i32) {
    %c0_i32 = arith.constant 0 : i32
    %c0_i32_0 = arith.constant 0 : i32
    %c0_i32_1 = arith.constant 0 : i32
    return %c0_i32, %c0_i32_0 : i32, i32
  }
  func.func @transform_29(%arg0: i32) -> (i32, i32) {
    %c0_i32 = arith.constant 0 : i32
    %c0_i32_0 = arith.constant 0 : i32
    return %arg0, %c0_i32 : i32, i32
  }
}

</mosaic_0001>

<llo_original>
// kernel: forward.1
$region0: #{forward.1}
  #allocation0 [shape = 'u32[]', space=smem, size = 0x4, offset = 0x4, fixed_abs, tag = 'smem constant byte address 0x4 - core index']
  #allocation1 [shape = 'u32[144,128]{1,0:T(1,128)}', space=vmem, size = 0x12000, scoped, tag = 'internal scratch']
  %s0 = inlined_call_operand.smem [shape: u32[30], index: -1, kind: input, shape index: {}]
  %s1 = sld [smem:[%s0]]
  %s2 = scalar_lea.smem %s0, 1
  %s3 = sld [smem:[%s2]]
  %s4 = scalar_lea.smem %s0, 2
  %s5 = sld [smem:[%s4]]
  %s6 = scalar_lea.smem %s0, 3
  %s7 = sld [smem:[%s6]]
  %s8 = scalar_lea.smem %s0, 4
  %s9 = sld [smem:[%s8]]
  %s10 = scalar_lea.smem %s0, 5
  %s11 = sld [smem:[%s10]]
  %s12 = scalar_lea.smem %s0, 6
  %s13 = sld [smem:[%s12]]
  %s14 = scalar_lea.smem %s0, 7
  %s15 = sld [smem:[%s14]]
  %s16 = scalar_lea.smem %s0, 8
  %s17 = sld [smem:[%s16]]
  %s18 = scalar_lea.smem %s0, 9
  %s19 = sld [smem:[%s18]]
  %s20 = scalar_lea.smem %s0, 10
  %s21 = sld [smem:[%s20]]
  %s22 = scalar_lea.smem %s0, 11
  %s23 = sld [smem:[%s22]]
  %s24 = scalar_lea.smem %s0, 12
  %s25 = sld [smem:[%s24]]
  %s26 = scalar_lea.smem %s0, 13
  %s27 = sld [smem:[%s26]]
  %s28 = scalar_lea.smem %s0, 14
  %s29 = sld [smem:[%s28]]
  %s30 = scalar_lea.smem %s0, 15
  %s31 = sld [smem:[%s30]]
  %s32 = scalar_lea.smem %s0, 16
  %s33 = sld [smem:[%s32]]
  %s34 = scalar_lea.smem %s0, 17
  %s35 = sld [smem:[%s34]]
  %s36 = scalar_lea.smem %s0, 18
  %s37 = sld [smem:[%s36]]
  %s38 = scalar_lea.smem %s0, 19
  %s39 = sld [smem:[%s38]]
  %s40 = scalar_lea.smem %s0, 20
  %s41 = sld [smem:[%s40]]
  %s42 = scalar_lea.smem %s0, 21
  %s43 = sld [smem:[%s42]]
  %s44 = scalar_lea.smem %s0, 22
  %s45 = sld [smem:[%s44]]
  %s46 = scalar_lea.smem %s0, 23
  %s47 = sld [smem:[%s46]]
  %s48 = scalar_lea.smem %s0, 24
  %s49 = sld [smem:[%s48]]
  %s50 = scalar_lea.smem %s0, 25
  %s51 = sld [smem:[%s50]]
  %s52 = scalar_lea.smem %s0, 26
  %s53 = sld [smem:[%s52]]
  %s54 = scalar_lea.smem %s0, 27
  %s55 = sld [smem:[%s54]]
  %s56 = scalar_lea.smem %s0, 28
  %s57 = sld [smem:[%s56]]
  %s58 = scalar_lea.smem %s0, 29
  %s59 = sld [smem:[%s58]]
  %s60 = sld [smem:[#allocation0]]
  $region126: #{forward.1} parent=0
    _
  %s62 = ssub.s32 1, %s60
  %s63 = scalar_select 0, %s62, %s60
  // Predicated region
  $region2: #{forward.1} parent=0 // pred_check
    _
  $region3: #{forward.1} parent=0 // pred_check_branch
    %65 = sbr.rel (0) target = $region5
  $region4: #{forward.1} parent=0 // pred_region
    _
  $region5: #{forward.1} parent=0 // pred_fallthru
    _
  // Predicated region
  $region6: #{forward.1} parent=0 // pred_check
    _
  $region7: #{forward.1} parent=0 // pred_check_branch
    %67 = sbr.rel (0) target = $region9
  $region8: #{forward.1} parent=0 // pred_region
    _
  $region9: #{forward.1} parent=0 // pred_fallthru
    _
  // Predicated region
  $region10: #{forward.1} parent=0 // pred_check
    _
  $region11: #{forward.1} parent=0 // pred_check_branch
    %69 = sbr.rel (0) target = $region13
  $region12: #{forward.1} parent=0 // pred_region
    _
  $region13: #{forward.1} parent=0 // pred_fallthru
    _
  // Predicated region
  $region14: #{forward.1} parent=0 // pred_check
    _
  $region15: #{forward.1} parent=0 // pred_check_branch
    %71 = sbr.rel (0) target = $region17
  $region16: #{forward.1} parent=0 // pred_region
    _
  $region17: #{forward.1} parent=0 // pred_fallthru
    _
  // Predicated region
  $region18: #{forward.1} parent=0 // pred_check
    _
  $region19: #{forward.1} parent=0 // pred_check_branch
    %73 = sbr.rel (0) target = $region21
  $region20: #{forward.1} parent=0 // pred_region
    _
  $region21: #{forward.1} parent=0 // pred_fallthru
    _
  // Predicated region
  $region22: #{forward.1} parent=0 // pred_check
    _
  $region23: #{forward.1} parent=0 // pred_check_branch
    %75 = sbr.rel (0) target = $region25
  $region24: #{forward.1} parent=0 // pred_region
    _
  $region25: #{forward.1} parent=0 // pred_fallthru
    _
  // Predicated region
  $region26: #{forward.1} parent=0 // pred_check
    _
  $region27: #{forward.1} parent=0 // pred_check_branch
    %77 = sbr.rel (0) target = $region29
  $region28: #{forward.1} parent=0 // pred_region
    _
  $region29: #{forward.1} parent=0 // pred_fallthru
    _
  // Predicated region
  $region30: #{forward.1} parent=0 // pred_check
    _
  $region31: #{forward.1} parent=0 // pred_check_branch
    %79 = sbr.rel (0) target = $region33
  $region32: #{forward.1} parent=0 // pred_region
    _
  $region33: #{forward.1} parent=0 // pred_fallthru
    _
  // Predicated region
  $region34: #{forward.1} parent=0 // pred_check
    _
  $region35: #{forward.1} parent=0 // pred_check_branch
    %81 = sbr.rel (0) target = $region37
  $region36: #{forward.1} parent=0 // pred_region
    _
  $region37: #{forward.1} parent=0 // pred_fallthru
    _
  // Predicated region
  $region38: #{forward.1} parent=0 // pred_check
    _
  $region39: #{forward.1} parent=0 // pred_check_branch
    %83 = sbr.rel (0) target = $region41
  $region40: #{forward.1} parent=0 // pred_region
    _
  $region41: #{forward.1} parent=0 // pred_fallthru
    _
  // Predicated region
  $region42: #{forward.1} parent=0 // pred_check
    _
  $region43: #{forward.1} parent=0 // pred_check_branch
    %85 = sbr.rel (0) target = $region45
  $region44: #{forward.1} parent=0 // pred_region
    _
  $region45: #{forward.1} parent=0 // pred_fallthru
    _
  // Predicated region
  $region46: #{forward.1} parent=0 // pred_check
    _
  $region47: #{forward.1} parent=0 // pred_check_branch
    %87 = sbr.rel (0) target = $region49
  $region48: #{forward.1} parent=0 // pred_region
    _
  $region49: #{forward.1} parent=0 // pred_fallthru
    _
  // Predicated region
  $region50: #{forward.1} parent=0 // pred_check
    _
  $region51: #{forward.1} parent=0 // pred_check_branch
    %89 = sbr.rel (0) target = $region53
  $region52: #{forward.1} parent=0 // pred_region
    _
  $region53: #{forward.1} parent=0 // pred_fallthru
    _
  // Predicated region
  $region54: #{forward.1} parent=0 // pred_check
    _
  $region55: #{forward.1} parent=0 // pred_check_branch
    %91 = sbr.rel (0) target = $region57
  $region56: #{forward.1} parent=0 // pred_region
    _
  $region57: #{forward.1} parent=0 // pred_fallthru
    _
  // Predicated region
  $region58: #{forward.1} parent=0 // pred_check
    _
  $region59: #{forward.1} parent=0 // pred_check_branch
    %93 = sbr.rel (0) target = $region61
  $region60: #{forward.1} parent=0 // pred_region
    _
  $region61: #{forward.1} parent=0 // pred_fallthru
    _
  // Predicated region
  $region62: #{forward.1} parent=0 // pred_check
    _
  $region63: #{forward.1} parent=0 // pred_check_branch
    %95 = sbr.rel (0) target = $region65
  $region64: #{forward.1} parent=0 // pred_region
    _
  $region65: #{forward.1} parent=0 // pred_fallthru
    _
  // Predicated region
  $region66: #{forward.1} parent=0 // pred_check
    _
  $region67: #{forward.1} parent=0 // pred_check_branch
    %97 = sbr.rel (0) target = $region69
  $region68: #{forward.1} parent=0 // pred_region
    _
  $region69: #{forward.1} parent=0 // pred_fallthru
    _
  // Predicated region
  $region70: #{forward.1} parent=0 // pred_check
    _
  $region71: #{forward.1} parent=0 // pred_check_branch
    %99 = sbr.rel (0) target = $region73
  $region72: #{forward.1} parent=0 // pred_region
    _
  $region73: #{forward.1} parent=0 // pred_fallthru
    _
  // Predicated region
  $region74: #{forward.1} parent=0 // pred_check
    _
  $region75: #{forward.1} parent=0 // pred_check_branch
    %101 = sbr.rel (0) target = $region77
  $region76: #{forward.1} parent=0 // pred_region
    _
  $region77: #{forward.1} parent=0 // pred_fallthru
    _
  // Predicated region
  $region78: #{forward.1} parent=0 // pred_check
    _
  $region79: #{forward.1} parent=0 // pred_check_branch
    %103 = sbr.rel (0) target = $region81
  $region80: #{forward.1} parent=0 // pred_region
    _
  $region81: #{forward.1} parent=0 // pred_fallthru
    _
  // Predicated region
  $region82: #{forward.1} parent=0 // pred_check
    _
  $region83: #{forward.1} parent=0 // pred_check_branch
    %105 = sbr.rel (0) target = $region85
  $region84: #{forward.1} parent=0 // pred_region
    _
  $region85: #{forward.1} parent=0 // pred_fallthru
    _
  // Predicated region
  $region86: #{forward.1} parent=0 // pred_check
    _
  $region87: #{forward.1} parent=0 // pred_check_branch
    %107 = sbr.rel (0) target = $region89
  $region88: #{forward.1} parent=0 // pred_region
    _
  $region89: #{forward.1} parent=0 // pred_fallthru
    _
  // Predicated region
  $region90: #{forward.1} parent=0 // pred_check
    _
  $region91: #{forward.1} parent=0 // pred_check_branch
    %109 = sbr.rel (0) target = $region93
  $region92: #{forward.1} parent=0 // pred_region
    _
  $region93: #{forward.1} parent=0 // pred_fallthru
    _
  // Predicated region
  $region94: #{forward.1} parent=0 // pred_check
    _
  $region95: #{forward.1} parent=0 // pred_check_branch
    %111 = sbr.rel (0) target = $region97
  $region96: #{forward.1} parent=0 // pred_region
    _
  $region97: #{forward.1} parent=0 // pred_fallthru
    _
  // Predicated region
  $region98: #{forward.1} parent=0 // pred_check
    _
  $region99: #{forward.1} parent=0 // pred_check_branch
    %113 = sbr.rel (0) target = $region101
  $region100: #{forward.1} parent=0 // pred_region
    _
  $region101: #{forward.1} parent=0 // pred_fallthru
    _
  // Predicated region
  $region102: #{forward.1} parent=0 // pred_check
    _
  $region103: #{forward.1} parent=0 // pred_check_branch
    %115 = sbr.rel (0) target = $region105
  $region104: #{forward.1} parent=0 // pred_region
    _
  $region105: #{forward.1} parent=0 // pred_fallthru
    _
  // Predicated region
  $region106: #{forward.1} parent=0 // pred_check
    _
  $region107: #{forward.1} parent=0 // pred_check_branch
    %117 = sbr.rel (0) target = $region109
  $region108: #{forward.1} parent=0 // pred_region
    _
  $region109: #{forward.1} parent=0 // pred_fallthru
    _
  // Predicated region
  $region110: #{forward.1} parent=0 // pred_check
    _
  $region111: #{forward.1} parent=0 // pred_check_branch
    %119 = sbr.rel (0) target = $region113
  $region112: #{forward.1} parent=0 // pred_region
    _
  $region113: #{forward.1} parent=0 // pred_fallthru
    _
  // Predicated region
  $region114: #{forward.1} parent=0 // pred_check
    _
  $region115: #{forward.1} parent=0 // pred_check_branch
    %121 = sbr.rel (0) target = $region117
  $region116: #{forward.1} parent=0 // pred_region
    _
  $region117: #{forward.1} parent=0 // pred_fallthru
    _
  %v123 = vld [vmem:[%s1] sm:$0xf]
  %v124 = vld [vmem:[%s1 + $0x4] sm:$0xf]
  %v125 = vld [vmem:[%s3] sm:$0xf]
  %v126 = vld [vmem:[%s3 + $0x4] sm:$0xf]
  %v127 = vld [vmem:[%s3 + $0x8] sm:$0xf]
  %v128 = vld [vmem:[%s3 + $0xc] sm:$0xf]
  %v129 = vld [vmem:[%s3 + $0x10] sm:$0xf]
  %v130 = vld [vmem:[%s3 + $0x14] sm:$0xf]
  %v131 = vld [vmem:[%s3 + $0x18] sm:$0xf]
  %v132 = vld [vmem:[%s3 + $0x1c] sm:$0xf]
  %v133 = vld [vmem:[%s3 + $0x20] sm:$0xf]
  %v134 = vld [vmem:[%s3 + $0x24] sm:$0xf]
  %v135 = vld [vmem:[%s3 + $0x28] sm:$0xf]
  %v136 = vld [vmem:[%s3 + $0x2c] sm:$0xf]
  %v137 = vld [vmem:[%s3 + $0x30] sm:$0xf]
  %v138 = vld [vmem:[%s3 + $0x34] sm:$0xf]
  %v139 = vld [vmem:[%s3 + $0x38] sm:$0xf]
  %v140 = vld [vmem:[%s3 + $0x3c] sm:$0xf]
  %v141 = vld [vmem:[%s5] sm:$0x1]
  %v143 = vlaneseq
  %v144 = vshrl.u32 %v143, 7
  %v145 = vsub.s32 0, %v144
  %v146 = vrot.slane %v141, %v145
  %v150 = vunpack.c.l.b16 %v123
  %v151 = vunpack.c.l.b16 %v124
  %v152 = vpack.c.b16 %v151, %v150
  %v170 = vunpack.c.l.b16 %v125
  %v171 = vunpack.c.l.b16 %v126
  %v172 = vunpack.c.l.b16 %v127
  %v173 = vunpack.c.l.b16 %v128
  %v174 = vunpack.c.l.b16 %v129
  %v175 = vunpack.c.l.b16 %v130
  %v176 = vunpack.c.l.b16 %v131
  %v177 = vunpack.c.l.b16 %v132
  %v178 = vunpack.c.l.b16 %v133
  %v179 = vunpack.c.l.b16 %v134
  %v180 = vunpack.c.l.b16 %v135
  %v181 = vunpack.c.l.b16 %v136
  %v182 = vunpack.c.l.b16 %v137
  %v183 = vunpack.c.l.b16 %v138
  %v184 = vunpack.c.l.b16 %v139
  %v185 = vunpack.c.l.b16 %v140
  %v186 = vpack.c.b16 %v171, %v170
  %v187 = vpack.c.b16 %v173, %v172
  %v188 = vpack.c.b16 %v175, %v174
  %v189 = vpack.c.b16 %v177, %v176
  %v190 = vpack.c.b16 %v179, %v178
  %v191 = vpack.c.b16 %v181, %v180
  %v192 = vpack.c.b16 %v183, %v182
  %v193 = vpack.c.b16 %v185, %v184
  %202 = vmatprep.subr.bf16.mxu0 0
  %203 = vmatpush1.bf16.msra.mxu0 %v186
  %204 = vmatprep.subr.bf16.mxu0 0
  %205 = vmatpush1.bf16.msra.mxu0 %v187
  %206 = vmatprep.subr.bf16.mxu0 0
  %207 = vmatpush1.bf16.msra.mxu0 %v188
  %208 = vmatprep.subr.bf16.mxu0 0
  %209 = vmatpush1.bf16.msra.mxu0 %v189
  %210 = vmatprep.subr.bf16.mxu0 0
  %211 = vmatpush1.bf16.msra.mxu0 %v190
  %212 = vmatprep.subr.bf16.mxu0 0
  %213 = vmatpush1.bf16.msra.mxu0 %v191
  %214 = vmatprep.subr.bf16.mxu0 0
  %215 = vmatpush1.bf16.msra.mxu0 %v192
  %216 = vmatprep.subr.bf16.mxu0 0
  %217 = vmatpush1.bf16.msra.mxu0 %v193
  %218 = vmatprep.subr.bf16.mxu0 0
  %219 = vmatpush1.bf16.msra.mxu0 0
  %220 = vmatprep.subr.bf16.mxu0 0
  %221 = vmatpush1.bf16.msra.mxu0 0
  %222 = vmatprep.subr.bf16.mxu0 0
  %223 = vmatpush1.bf16.msra.mxu0 0
  %224 = vmatprep.subr.bf16.mxu0 0
  %225 = vmatpush1.bf16.msra.mxu0 0
  %226 = vmatprep.subr.bf16.mxu0 0
  %227 = vmatpush1.bf16.msra.mxu0 0
  %228 = vmatprep.subr.bf16.mxu0 0
  %229 = vmatpush1.bf16.msra.mxu0 0
  %230 = vmatprep.subr.bf16.mxu0 0
  %231 = vmatpush1.bf16.msra.mxu0 0
  %232 = vmatprep.subr.bf16.mxu0 0
  %233 = vmatpush1.bf16.msra.mxu0 0
  %234 = vmatprep.mubr.bf16.mxu0 0
  %235 = vmatmul.mubr.bf16.gmra.mrb[0].mxu0 %v152
  %v236 = vpop.f32.mrb[0].mxu0
  %v237 = vadd.f32 %v146, %v236
  %v238 = vpop.f32.mrb[0].mxu0
  %v239 = vpop.f32.mrb[0].mxu0
  %v240 = vadd.f32 %v146, %v239
  %v241 = vpop.f32.mrb[0].mxu0
  %242 = vdwg.mxu0
  %v243 = vmax.f32 %v237, 0.0
  %v244 = vmax.f32 %v240, 0.0
  %v245 = vpack.c.bf16 %v244, %v243
  %v246 = vld [vmem:[%s7] sm:$0xf]
  %v247 = vld [vmem:[%s7 + $0x4] sm:$0xf]
  %v248 = vld [vmem:[%s7 + $0x8] sm:$0xf]
  %v249 = vld [vmem:[%s7 + $0xc] sm:$0xf]
  %v250 = vld [vmem:[%s7 + $0x10] sm:$0xf]
  %v251 = vld [vmem:[%s7 + $0x14] sm:$0xf]
  %v252 = vld [vmem:[%s7 + $0x18] sm:$0xf]
  %v253 = vld [vmem:[%s7 + $0x1c] sm:$0xf]
  %v254 = vld [vmem:[%s7 + $0x20] sm:$0xf]
  %v255 = vld [vmem:[%s7 + $0x24] sm:$0xf]
  %v256 = vld [vmem:[%s7 + $0x28] sm:$0xf]
  %v257 = vld [vmem:[%s7 + $0x2c] sm:$0xf]
  %v258 = vld [vmem:[%s7 + $0x30] sm:$0xf]
  %v259 = vld [vmem:[%s7 + $0x34] sm:$0xf]
  %v260 = vld [vmem:[%s7 + $0x38] sm:$0xf]
  %v261 = vld [vmem:[%s7 + $0x3c] sm:$0xf]
  %v262 = vld [vmem:[%s9] sm:$0x1]
  %v264 = vlaneseq
  %v265 = vshrl.u32 %v264, 7
  %v266 = vsub.s32 0, %v265
  %v267 = vrot.slane %v262, %v266
  %v285 = vunpack.c.l.b16 %v246
  %v286 = vunpack.c.l.b16 %v247
  %v287 = vunpack.c.l.b16 %v248
  %v288 = vunpack.c.l.b16 %v249
  %v289 = vunpack.c.l.b16 %v250
  %v290 = vunpack.c.l.b16 %v251
  %v291 = vunpack.c.l.b16 %v252
  %v292 = vunpack.c.l.b16 %v253
  %v293 = vunpack.c.l.b16 %v254
  %v294 = vunpack.c.l.b16 %v255
  %v295 = vunpack.c.l.b16 %v256
  %v296 = vunpack.c.l.b16 %v257
  %v297 = vunpack.c.l.b16 %v258
  %v298 = vunpack.c.l.b16 %v259
  %v299 = vunpack.c.l.b16 %v260
  %v300 = vunpack.c.l.b16 %v261
  %v301 = vpack.c.b16 %v286, %v285
  %v302 = vpack.c.b16 %v288, %v287
  %v303 = vpack.c.b16 %v290, %v289
  %v304 = vpack.c.b16 %v292, %v291
  %v305 = vpack.c.b16 %v294, %v293
  %v306 = vpack.c.b16 %v296, %v295
  %v307 = vpack.c.b16 %v298, %v297
  %v308 = vpack.c.b16 %v300, %v299
  %317 = vmatprep.subr.bf16.mxu0 0
  %318 = vmatpush1.bf16.msra.mxu0 %v301
  %319 = vmatprep.subr.bf16.mxu0 0
  %320 = vmatpush1.bf16.msra.mxu0 %v302
  %321 = vmatprep.subr.bf16.mxu0 0
  %322 = vmatpush1.bf16.msra.mxu0 %v303
  %323 = vmatprep.subr.bf16.mxu0 0
  %324 = vmatpush1.bf16.msra.mxu0 %v304
  %325 = vmatprep.subr.bf16.mxu0 0
  %326 = vmatpush1.bf16.msra.mxu0 %v305
  %327 = vmatprep.subr.bf16.mxu0 0
  %328 = vmatpush1.bf16.msra.mxu0 %v306
  %329 = vmatprep.subr.bf16.mxu0 0
  %330 = vmatpush1.bf16.msra.mxu0 %v307
  %331 = vmatprep.subr.bf16.mxu0 0
  %332 = vmatpush1.bf16.msra.mxu0 %v308
  %333 = vmatprep.subr.bf16.mxu0 0
  %334 = vmatpush1.bf16.msra.mxu0 0
  %335 = vmatprep.subr.bf16.mxu0 0
  %336 = vmatpush1.bf16.msra.mxu0 0
  %337 = vmatprep.subr.bf16.mxu0 0
  %338 = vmatpush1.bf16.msra.mxu0 0
  %339 = vmatprep.subr.bf16.mxu0 0
  %340 = vmatpush1.bf16.msra.mxu0 0
  %341 = vmatprep.subr.bf16.mxu0 0
  %342 = vmatpush1.bf16.msra.mxu0 0
  %343 = vmatprep.subr.bf16.mxu0 0
  %344 = vmatpush1.bf16.msra.mxu0 0
  %345 = vmatprep.subr.bf16.mxu0 0
  %346 = vmatpush1.bf16.msra.mxu0 0
  %347 = vmatprep.subr.bf16.mxu0 0
  %348 = vmatpush1.bf16.msra.mxu0 0
  %349 = vmatprep.mubr.bf16.mxu0 0
  %350 = vmatmul.mubr.bf16.gmra.mrb[0].mxu0 %v245
  %v351 = vpop.f32.mrb[0].mxu0
  %v352 = vadd.f32 %v267, %v351
  %v353 = vpop.f32.mrb[0].mxu0
  %v354 = vpop.f32.mrb[0].mxu0
  %v355 = vadd.f32 %v267, %v354
  %v356 = vpop.f32.mrb[0].mxu0
  %357 = vdwg.mxu0
  %v358 = vmax.f32 %v352, 0.0
  %v359 = vmax.f32 %v355, 0.0
  %v360 = vpack.c.bf16 %v359, %v358
  %v361 = vld [vmem:[%s11] sm:$0xf]
  %v362 = vld [vmem:[%s11 + $0x4] sm:$0xf]
  %v363 = vld [vmem:[%s11 + $0x8] sm:$0xf]
  %v364 = vld [vmem:[%s11 + $0xc] sm:$0xf]
  %v365 = vld [vmem:[%s11 + $0x10] sm:$0xf]
  %v366 = vld [vmem:[%s11 + $0x14] sm:$0xf]
  %v367 = vld [vmem:[%s11 + $0x18] sm:$0xf]
  %v368 = vld [vmem:[%s11 + $0x1c] sm:$0xf]
  %v369 = vld [vmem:[%s11 + $0x20] sm:$0xf]
  %v370 = vld [vmem:[%s11 + $0x24] sm:$0xf]
  %v371 = vld [vmem:[%s11 + $0x28] sm:$0xf]
  %v372 = vld [vmem:[%s11 + $0x2c] sm:$0xf]
  %v373 = vld [vmem:[%s11 + $0x30] sm:$0xf]
  %v374 = vld [vmem:[%s11 + $0x34] sm:$0xf]
  %v375 = vld [vmem:[%s11 + $0x38] sm:$0xf]
  %v376 = vld [vmem:[%s11 + $0x3c] sm:$0xf]
  %v377 = vld [vmem:[%s13] sm:$0x1]
  %v379 = vlaneseq
  %v380 = vshrl.u32 %v379, 7
  %v381 = vsub.s32 0, %v380
  %v382 = vrot.slane %v377, %v381
  %v400 = vunpack.c.l.b16 %v361
  %v401 = vunpack.c.l.b16 %v362
  %v402 = vunpack.c.l.b16 %v363
  %v403 = vunpack.c.l.b16 %v364
  %v404 = vunpack.c.l.b16 %v365
  %v405 = vunpack.c.l.b16 %v366
  %v406 = vunpack.c.l.b16 %v367
  %v407 = vunpack.c.l.b16 %v368
  %v408 = vunpack.c.l.b16 %v369
  %v409 = vunpack.c.l.b16 %v370
  %v410 = vunpack.c.l.b16 %v371
  %v411 = vunpack.c.l.b16 %v372
  %v412 = vunpack.c.l.b16 %v373
  %v413 = vunpack.c.l.b16 %v374
  %v414 = vunpack.c.l.b16 %v375
  %v415 = vunpack.c.l.b16 %v376
  %v416 = vpack.c.b16 %v401, %v400
  %v417 = vpack.c.b16 %v403, %v402
  %v418 = vpack.c.b16 %v405, %v404
  %v419 = vpack.c.b16 %v407, %v406
  %v420 = vpack.c.b16 %v409, %v408
  %v421 = vpack.c.b16 %v411, %v410
  %v422 = vpack.c.b16 %v413, %v412
  %v423 = vpack.c.b16 %v415, %v414
  %432 = vmatprep.subr.bf16.mxu0 0
  %433 = vmatpush1.bf16.msra.mxu0 %v416
  %434 = vmatprep.subr.bf16.mxu0 0
  %435 = vmatpush1.bf16.msra.mxu0 %v417
  %436 = vmatprep.subr.bf16.mxu0 0
  %437 = vmatpush1.bf16.msra.mxu0 %v418
  %438 = vmatprep.subr.bf16.mxu0 0
  %439 = vmatpush1.bf16.msra.mxu0 %v419
  %440 = vmatprep.subr.bf16.mxu0 0
  %441 = vmatpush1.bf16.msra.mxu0 %v420
  %442 = vmatprep.subr.bf16.mxu0 0
  %443 = vmatpush1.bf16.msra.mxu0 %v421
  %444 = vmatprep.subr.bf16.mxu0 0
  %445 = vmatpush1.bf16.msra.mxu0 %v422
  %446 = vmatprep.subr.bf16.mxu0 0
  %447 = vmatpush1.bf16.msra.mxu0 %v423
  %448 = vmatprep.subr.bf16.mxu0 0
  %449 = vmatpush1.bf16.msra.mxu0 0
  %450 = vmatprep.subr.bf16.mxu0 0
  %451 = vmatpush1.bf16.msra.mxu0 0
  %452 = vmatprep.subr.bf16.mxu0 0
  %453 = vmatpush1.bf16.msra.mxu0 0
  %454 = vmatprep.subr.bf16.mxu0 0
  %455 = vmatpush1.bf16.msra.mxu0 0
  %456 = vmatprep.subr.bf16.mxu0 0
  %457 = vmatpush1.bf16.msra.mxu0 0
  %458 = vmatprep.subr.bf16.mxu0 0
  %459 = vmatpush1.bf16.msra.mxu0 0
  %460 = vmatprep.subr.bf16.mxu0 0
  %461 = vmatpush1.bf16.msra.mxu0 0
  %462 = vmatprep.subr.bf16.mxu0 0
  %463 = vmatpush1.bf16.msra.mxu0 0
  %464 = vmatprep.mubr.bf16.mxu0 0
  %465 = vmatmul.mubr.bf16.gmra.mrb[0].mxu0 %v360
  %v466 = vpop.f32.mrb[0].mxu0
  %v467 = vadd.f32 %v382, %v466
  %v468 = vpop.f32.mrb[0].mxu0
  %v469 = vpop.f32.mrb[0].mxu0
  %v470 = vadd.f32 %v382, %v469
  %v471 = vpop.f32.mrb[0].mxu0
  %472 = vdwg.mxu0
  %v473 = vmax.f32 %v467, 0.0
  %v474 = vmax.f32 %v470, 0.0
  %v475 = vunpack.c.l.bf16 %v123
  %v476 = vunpack.c.l.bf16 %v124
  %v477 = vadd.f32 %v475, %v473
  %v478 = vadd.f32 %v476, %v474
  %v479 = vpack.c.bf16 %v478, %v477
  %v480 = vld [vmem:[%s15] sm:$0xf]
  %v481 = vld [vmem:[%s15 + $0x4] sm:$0xf]
  %v482 = vld [vmem:[%s15 + $0x8] sm:$0xf]
  %v483 = vld [vmem:[%s15 + $0xc] sm:$0xf]
  %v484 = vld [vmem:[%s15 + $0x10] sm:$0xf]
  %v485 = vld [vmem:[%s15 + $0x14] sm:$0xf]
  %v486 = vld [vmem:[%s15 + $0x18] sm:$0xf]
  %v487 = vld [vmem:[%s15 + $0x1c] sm:$0xf]
  %v488 = vld [vmem:[%s15 + $0x20] sm:$0xf]
  %v489 = vld [vmem:[%s15 + $0x24] sm:$0xf]
  %v490 = vld [vmem:[%s15 + $0x28] sm:$0xf]
  %v491 = vld [vmem:[%s15 + $0x2c] sm:$0xf]
  %v492 = vld [vmem:[%s15 + $0x30] sm:$0xf]
  %v493 = vld [vmem:[%s15 + $0x34] sm:$0xf]
  %v494 = vld [vmem:[%s15 + $0x38] sm:$0xf]
  %v495 = vld [vmem:[%s15 + $0x3c] sm:$0xf]
  %v496 = vld [vmem:[%s17] sm:$0x1]
  %v498 = vlaneseq
  %v499 = vshrl.u32 %v498, 7
  %v500 = vsub.s32 0, %v499
  %v501 = vrot.slane %v496, %v500
  %v519 = vunpack.c.l.b16 %v480
  %v520 = vunpack.c.l.b16 %v481
  %v521 = vunpack.c.l.b16 %v482
  %v522 = vunpack.c.l.b16 %v483
  %v523 = vunpack.c.l.b16 %v484
  %v524 = vunpack.c.l.b16 %v485
  %v525 = vunpack.c.l.b16 %v486
  %v526 = vunpack.c.l.b16 %v487
  %v527 = vunpack.c.l.b16 %v488
  %v528 = vunpack.c.l.b16 %v489
  %v529 = vunpack.c.l.b16 %v490
  %v530 = vunpack.c.l.b16 %v491
  %v531 = vunpack.c.l.b16 %v492
  %v532 = vunpack.c.l.b16 %v493
  %v533 = vunpack.c.l.b16 %v494
  %v534 = vunpack.c.l.b16 %v495
  %v535 = vpack.c.b16 %v520, %v519
  %v536 = vpack.c.b16 %v522, %v521
  %v537 = vpack.c.b16 %v524, %v523
  %v538 = vpack.c.b16 %v526, %v525
  %v539 = vpack.c.b16 %v528, %v527
  %v540 = vpack.c.b16 %v530, %v529
  %v541 = vpack.c.b16 %v532, %v531
  %v542 = vpack.c.b16 %v534, %v533
  %551 = vmatprep.subr.bf16.mxu0 0
  %552 = vmatpush1.bf16.msra.mxu0 %v535
  %553 = vmatprep.subr.bf16.mxu0 0
  %554 = vmatpush1.bf16.msra.mxu0 %v536
  %555 = vmatprep.subr.bf16.mxu0 0
  %556 = vmatpush1.bf16.msra.mxu0 %v537
  %557 = vmatprep.subr.bf16.mxu0 0
  %558 = vmatpush1.bf16.msra.mxu0 %v538
  %559 = vmatprep.subr.bf16.mxu0 0
  %560 = vmatpush1.bf16.msra.mxu0 %v539
  %561 = vmatprep.subr.bf16.mxu0 0
  %562 = vmatpush1.bf16.msra.mxu0 %v540
  %563 = vmatprep.subr.bf16.mxu0 0
  %564 = vmatpush1.bf16.msra.mxu0 %v541
  %565 = vmatprep.subr.bf16.mxu0 0
  %566 = vmatpush1.bf16.msra.mxu0 %v542
  %567 = vmatprep.subr.bf16.mxu0 0
  %568 = vmatpush1.bf16.msra.mxu0 0
  %569 = vmatprep.subr.bf16.mxu0 0
  %570 = vmatpush1.bf16.msra.mxu0 0
  %571 = vmatprep.subr.bf16.mxu0 0
  %572 = vmatpush1.bf16.msra.mxu0 0
  %573 = vmatprep.subr.bf16.mxu0 0
  %574 = vmatpush1.bf16.msra.mxu0 0
  %575 = vmatprep.subr.bf16.mxu0 0
  %576 = vmatpush1.bf16.msra.mxu0 0
  %577 = vmatprep.subr.bf16.mxu0 0
  %578 = vmatpush1.bf16.msra.mxu0 0
  %579 = vmatprep.subr.bf16.mxu0 0
  %580 = vmatpush1.bf16.msra.mxu0 0
  %581 = vmatprep.subr.bf16.mxu0 0
  %582 = vmatpush1.bf16.msra.mxu0 0
  %583 = vmatprep.mubr.bf16.mxu0 0
  %584 = vmatmul.mubr.bf16.gmra.mrb[0].mxu0 %v479
  %v585 = vpop.f32.mrb[0].mxu0
  %v586 = vadd.f32 %v501, %v585
  %v587 = vpop.f32.mrb[0].mxu0
  %v588 = vpop.f32.mrb[0].mxu0
  %v589 = vadd.f32 %v501, %v588
  %v590 = vpop.f32.mrb[0].mxu0
  %591 = vdwg.mxu0
  %v592 = vmax.f32 %v586, 0.0
  %v593 = vmax.f32 %v589, 0.0
  %v594 = vpack.c.bf16 %v593, %v592
  %v595 = vld [vmem:[%s19] sm:$0xf]
  %v596 = vld [vmem:[%s19 + $0x4] sm:$0xf]
  %v597 = vld [vmem:[%s19 + $0x8] sm:$0xf]
  %v598 = vld [vmem:[%s19 + $0xc] sm:$0xf]
  %v599 = vld [vmem:[%s19 + $0x10] sm:$0xf]
  %v600 = vld [vmem:[%s19 + $0x14] sm:$0xf]
  %v601 = vld [vmem:[%s19 + $0x18] sm:$0xf]
  %v602 = vld [vmem:[%s19 + $0x1c] sm:$0xf]
  %v603 = vld [vmem:[%s19 + $0x20] sm:$0xf]
  %v604 = vld [vmem:[%s19 + $0x24] sm:$0xf]
  %v605 = vld [vmem:[%s19 + $0x28] sm:$0xf]
  %v606 = vld [vmem:[%s19 + $0x2c] sm:$0xf]
  %v607 = vld [vmem:[%s19 + $0x30] sm:$0xf]
  %v608 = vld [vmem:[%s19 + $0x34] sm:$0xf]
  %v609 = vld [vmem:[%s19 + $0x38] sm:$0xf]
  %v610 = vld [vmem:[%s19 + $0x3c] sm:$0xf]
  %v611 = vld [vmem:[%s21] sm:$0x1]
  %v613 = vlaneseq
  %v614 = vshrl.u32 %v613, 7
  %v615 = vsub.s32 0, %v614
  %v616 = vrot.slane %v611, %v615
  %v634 = vunpack.c.l.b16 %v595
  %v635 = vunpack.c.l.b16 %v596
  %v636 = vunpack.c.l.b16 %v597
  %v637 = vunpack.c.l.b16 %v598
  %v638 = vunpack.c.l.b16 %v599
  %v639 = vunpack.c.l.b16 %v600
  %v640 = vunpack.c.l.b16 %v601
  %v641 = vunpack.c.l.b16 %v602
  %v642 = vunpack.c.l.b16 %v603
  %v643 = vunpack.c.l.b16 %v604
  %v644 = vunpack.c.l.b16 %v605
  %v645 = vunpack.c.l.b16 %v606
  %v646 = vunpack.c.l.b16 %v607
  %v647 = vunpack.c.l.b16 %v608
  %v648 = vunpack.c.l.b16 %v609
  %v649 = vunpack.c.l.b16 %v610
  %v650 = vpack.c.b16 %v635, %v634
  %v651 = vpack.c.b16 %v637, %v636
  %v652 = vpack.c.b16 %v639, %v638
  %v653 = vpack.c.b16 %v641, %v640
  %v654 = vpack.c.b16 %v643, %v642
  %v655 = vpack.c.b16 %v645, %v644
  %v656 = vpack.c.b16 %v647, %v646
  %v657 = vpack.c.b16 %v649, %v648
  %666 = vmatprep.subr.bf16.mxu0 0
  %667 = vmatpush1.bf16.msra.mxu0 %v650
  %668 = vmatprep.subr.bf16.mxu0 0
  %669 = vmatpush1.bf16.msra.mxu0 %v651
  %670 = vmatprep.subr.bf16.mxu0 0
  %671 = vmatpush1.bf16.msra.mxu0 %v652
  %672 = vmatprep.subr.bf16.mxu0 0
  %673 = vmatpush1.bf16.msra.mxu0 %v653
  %674 = vmatprep.subr.bf16.mxu0 0
  %675 = vmatpush1.bf16.msra.mxu0 %v654
  %676 = vmatprep.subr.bf16.mxu0 0
  %677 = vmatpush1.bf16.msra.mxu0 %v655
  %678 = vmatprep.subr.bf16.mxu0 0
  %679 = vmatpush1.bf16.msra.mxu0 %v656
  %680 = vmatprep.subr.bf16.mxu0 0
  %681 = vmatpush1.bf16.msra.mxu0 %v657
  %682 = vmatprep.subr.bf16.mxu0 0
  %683 = vmatpush1.bf16.msra.mxu0 0
  %684 = vmatprep.subr.bf16.mxu0 0
  %685 = vmatpush1.bf16.msra.mxu0 0
  %686 = vmatprep.subr.bf16.mxu0 0
  %687 = vmatpush1.bf16.msra.mxu0 0
  %688 = vmatprep.subr.bf16.mxu0 0
  %689 = vmatpush1.bf16.msra.mxu0 0
  %690 = vmatprep.subr.bf16.mxu0 0
  %691 = vmatpush1.bf16.msra.mxu0 0
  %692 = vmatprep.subr.bf16.mxu0 0
  %693 = vmatpush1.bf16.msra.mxu0 0
  %694 = vmatprep.subr.bf16.mxu0 0
  %695 = vmatpush1.bf16.msra.mxu0 0
  %696 = vmatprep.subr.bf16.mxu0 0
  %697 = vmatpush1.bf16.msra.mxu0 0
  %698 = vmatprep.mubr.bf16.mxu0 0
  %699 = vmatmul.mubr.bf16.gmra.mrb[0].mxu0 %v594
  %v700 = vpop.f32.mrb[0].mxu0
  %v701 = vadd.f32 %v616, %v700
  %v702 = vpop.f32.mrb[0].mxu0
  %v703 = vpop.f32.mrb[0].mxu0
  %v704 = vadd.f32 %v616, %v703
  %v705 = vpop.f32.mrb[0].mxu0
  %706 = vdwg.mxu0
  %v707 = vmax.f32 %v701, 0.0
  %v708 = vmax.f32 %v704, 0.0
  %v709 = vpack.c.bf16 %v708, %v707
  %v710 = vld [vmem:[%s23] sm:$0xf]
  %v711 = vld [vmem:[%s23 + $0x4] sm:$0xf]
  %v712 = vld [vmem:[%s23 + $0x8] sm:$0xf]
  %v713 = vld [vmem:[%s23 + $0xc] sm:$0xf]
  %v714 = vld [vmem:[%s23 + $0x10] sm:$0xf]
  %v715 = vld [vmem:[%s23 + $0x14] sm:$0xf]
  %v716 = vld [vmem:[%s23 + $0x18] sm:$0xf]
  %v717 = vld [vmem:[%s23 + $0x1c] sm:$0xf]
  %v718 = vld [vmem:[%s23 + $0x20] sm:$0xf]
  %v719 = vld [vmem:[%s23 + $0x24] sm:$0xf]
  %v720 = vld [vmem:[%s23 + $0x28] sm:$0xf]
  %v721 = vld [vmem:[%s23 + $0x2c] sm:$0xf]
  %v722 = vld [vmem:[%s23 + $0x30] sm:$0xf]
  %v723 = vld [vmem:[%s23 + $0x34] sm:$0xf]
  %v724 = vld [vmem:[%s23 + $0x38] sm:$0xf]
  %v725 = vld [vmem:[%s23 + $0x3c] sm:$0xf]
  %v726 = vld [vmem:[%s25] sm:$0x1]
  %v728 = vlaneseq
  %v729 = vshrl.u32 %v728, 7
  %v730 = vsub.s32 0, %v729
  %v731 = vrot.slane %v726, %v730
  %v749 = vunpack.c.l.b16 %v710
  %v750 = vunpack.c.l.b16 %v711
  %v751 = vunpack.c.l.b16 %v712
  %v752 = vunpack.c.l.b16 %v713
  %v753 = vunpack.c.l.b16 %v714
  %v754 = vunpack.c.l.b16 %v715
  %v755 = vunpack.c.l.b16 %v716
  %v756 = vunpack.c.l.b16 %v717
  %v757 = vunpack.c.l.b16 %v718
  %v758 = vunpack.c.l.b16 %v719
  %v759 = vunpack.c.l.b16 %v720
  %v760 = vunpack.c.l.b16 %v721
  %v761 = vunpack.c.l.b16 %v722
  %v762 = vunpack.c.l.b16 %v723
  %v763 = vunpack.c.l.b16 %v724
  %v764 = vunpack.c.l.b16 %v725
  %v765 = vpack.c.b16 %v750, %v749
  %v766 = vpack.c.b16 %v752, %v751
  %v767 = vpack.c.b16 %v754, %v753
  %v768 = vpack.c.b16 %v756, %v755
  %v769 = vpack.c.b16 %v758, %v757
  %v770 = vpack.c.b16 %v760, %v759
  %v771 = vpack.c.b16 %v762, %v761
  %v772 = vpack.c.b16 %v764, %v763
  %781 = vmatprep.subr.bf16.mxu0 0
  %782 = vmatpush1.bf16.msra.mxu0 %v765
  %783 = vmatprep.subr.bf16.mxu0 0
  %784 = vmatpush1.bf16.msra.mxu0 %v766
  %785 = vmatprep.subr.bf16.mxu0 0
  %786 = vmatpush1.bf16.msra.mxu0 %v767
  %787 = vmatprep.subr.bf16.mxu0 0
  %788 = vmatpush1.bf16.msra.mxu0 %v768
  %789 = vmatprep.subr.bf16.mxu0 0
  %790 = vmatpush1.bf16.msra.mxu0 %v769
  %791 = vmatprep.subr.bf16.mxu0 0
  %792 = vmatpush1.bf16.msra.mxu0 %v770
  %793 = vmatprep.subr.bf16.mxu0 0
  %794 = vmatpush1.bf16.msra.mxu0 %v771
  %795 = vmatprep.subr.bf16.mxu0 0
  %796 = vmatpush1.bf16.msra.mxu0 %v772
  %797 = vmatprep.subr.bf16.mxu0 0
  %798 = vmatpush1.bf16.msra.mxu0 0
  %799 = vmatprep.subr.bf16.mxu0 0
  %800 = vmatpush1.bf16.msra.mxu0 0
  %801 = vmatprep.subr.bf16.mxu0 0
  %802 = vmatpush1.bf16.msra.mxu0 0
  %803 = vmatprep.subr.bf16.mxu0 0
  %804 = vmatpush1.bf16.msra.mxu0 0
  %805 = vmatprep.subr.bf16.mxu0 0
  %806 = vmatpush1.bf16.msra.mxu0 0
  %807 = vmatprep.subr.bf16.mxu0 0
  %808 = vmatpush1.bf16.msra.mxu0 0
  %809 = vmatprep.subr.bf16.mxu0 0
  %810 = vmatpush1.bf16.msra.mxu0 0
  %811 = vmatprep.subr.bf16.mxu0 0
  %812 = vmatpush1.bf16.msra.mxu0 0
  %813 = vmatprep.mubr.bf16.mxu0 0
  %814 = vmatmul.mubr.bf16.gmra.mrb[0].mxu0 %v709
  %v815 = vpop.f32.mrb[0].mxu0
  %v816 = vadd.f32 %v731, %v815
  %v817 = vpop.f32.mrb[0].mxu0
  %v818 = vpop.f32.mrb[0].mxu0
  %v819 = vadd.f32 %v731, %v818
  %v820 = vpop.f32.mrb[0].mxu0
  %821 = vdwg.mxu0
  %v822 = vmax.f32 %v816, 0.0
  %v823 = vmax.f32 %v819, 0.0
  %v824 = vadd.f32 %v477, %v822
  %v825 = vadd.f32 %v478, %v823
  %v826 = vpack.c.bf16 %v825, %v824
  %v827 = vld [vmem:[%s27] sm:$0xf]
  %v828 = vld [vmem:[%s27 + $0x4] sm:$0xf]
  %v829 = vld [vmem:[%s27 + $0x8] sm:$0xf]
  %v830 = vld [vmem:[%s27 + $0xc] sm:$0xf]
  %v831 = vld [vmem:[%s27 + $0x10] sm:$0xf]
  %v832 = vld [vmem:[%s27 + $0x14] sm:$0xf]
  %v833 = vld [vmem:[%s27 + $0x18] sm:$0xf]
  %v834 = vld [vmem:[%s27 + $0x1c] sm:$0xf]
  %v835 = vld [vmem:[%s27 + $0x20] sm:$0xf]
  %v836 = vld [vmem:[%s27 + $0x24] sm:$0xf]
  %v837 = vld [vmem:[%s27 + $0x28] sm:$0xf]
  %v838 = vld [vmem:[%s27 + $0x2c] sm:$0xf]
  %v839 = vld [vmem:[%s27 + $0x30] sm:$0xf]
  %v840 = vld [vmem:[%s27 + $0x34] sm:$0xf]
  %v841 = vld [vmem:[%s27 + $0x38] sm:$0xf]
  %v842 = vld [vmem:[%s27 + $0x3c] sm:$0xf]
  %v843 = vld [vmem:[%s29] sm:$0x1]
  %v845 = vlaneseq
  %v846 = vshrl.u32 %v845, 7
  %v847 = vsub.s32 0, %v846
  %v848 = vrot.slane %v843, %v847
  %v866 = vunpack.c.l.b16 %v827
  %v867 = vunpack.c.l.b16 %v828
  %v868 = vunpack.c.l.b16 %v829
  %v869 = vunpack.c.l.b16 %v830
  %v870 = vunpack.c.l.b16 %v831
  %v871 = vunpack.c.l.b16 %v832
  %v872 = vunpack.c.l.b16 %v833
  %v873 = vunpack.c.l.b16 %v834
  %v874 = vunpack.c.l.b16 %v835
  %v875 = vunpack.c.l.b16 %v836
  %v876 = vunpack.c.l.b16 %v837
  %v877 = vunpack.c.l.b16 %v838
  %v878 = vunpack.c.l.b16 %v839
  %v879 = vunpack.c.l.b16 %v840
  %v880 = vunpack.c.l.b16 %v841
  %v881 = vunpack.c.l.b16 %v842
  %v882 = vpack.c.b16 %v867, %v866
  %v883 = vpack.c.b16 %v869, %v868
  %v884 = vpack.c.b16 %v871, %v870
  %v885 = vpack.c.b16 %v873, %v872
  %v886 = vpack.c.b16 %v875, %v874
  %v887 = vpack.c.b16 %v877, %v876
  %v888 = vpack.c.b16 %v879, %v878
  %v889 = vpack.c.b16 %v881, %v880
  %898 = vmatprep.subr.bf16.mxu0 0
  %899 = vmatpush1.bf16.msra.mxu0 %v882
  %900 = vmatprep.subr.bf16.mxu0 0
  %901 = vmatpush1.bf16.msra.mxu0 %v883
  %902 = vmatprep.subr.bf16.mxu0 0
  %903 = vmatpush1.bf16.msra.mxu0 %v884
  %904 = vmatprep.subr.bf16.mxu0 0
  %905 = vmatpush1.bf16.msra.mxu0 %v885
  %906 = vmatprep.subr.bf16.mxu0 0
  %907 = vmatpush1.bf16.msra.mxu0 %v886
  %908 = vmatprep.subr.bf16.mxu0 0
  %909 = vmatpush1.bf16.msra.mxu0 %v887
  %910 = vmatprep.subr.bf16.mxu0 0
  %911 = vmatpush1.bf16.msra.mxu0 %v888
  %912 = vmatprep.subr.bf16.mxu0 0
  %913 = vmatpush1.bf16.msra.mxu0 %v889
  %914 = vmatprep.subr.bf16.mxu0 0
  %915 = vmatpush1.bf16.msra.mxu0 0
  %916 = vmatprep.subr.bf16.mxu0 0
  %917 = vmatpush1.bf16.msra.mxu0 0
  %918 = vmatprep.subr.bf16.mxu0 0
  %919 = vmatpush1.bf16.msra.mxu0 0
  %920 = vmatprep.subr.bf16.mxu0 0
  %921 = vmatpush1.bf16.msra.mxu0 0
  %922 = vmatprep.subr.bf16.mxu0 0
  %923 = vmatpush1.bf16.msra.mxu0 0
  %924 = vmatprep.subr.bf16.mxu0 0
  %925 = vmatpush1.bf16.msra.mxu0 0
  %926 = vmatprep.subr.bf16.mxu0 0
  %927 = vmatpush1.bf16.msra.mxu0 0
  %928 = vmatprep.subr.bf16.mxu0 0
  %929 = vmatpush1.bf16.msra.mxu0 0
  %930 = vmatprep.mubr.bf16.mxu0 0
  %931 = vmatmul.mubr.bf16.gmra.mrb[0].mxu0 %v826
  %v932 = vpop.f32.mrb[0].mxu0
  %v933 = vadd.f32 %v848, %v932
  %v934 = vpop.f32.mrb[0].mxu0
  %v935 = vpop.f32.mrb[0].mxu0
  %v936 = vadd.f32 %v848, %v935
  %v937 = vpop.f32.mrb[0].mxu0
  %938 = vdwg.mxu0
  %v939 = vpack.c.bf16 %v936, %v933
  %v940 = vld [vmem:[%s31] sm:$0xf]
  %v941 = vld [vmem:[%s31 + $0x4] sm:$0xf]
  %v942 = vld [vmem:[%s31 + $0x8] sm:$0xf]
  %v943 = vld [vmem:[%s31 + $0xc] sm:$0xf]
  %v944 = vld [vmem:[%s33] sm:$0x1]
  %v946 = vlaneseq
  %v947 = vshrl.u32 %v946, 7
  %v948 = vsub.s32 0, %v947
  %v949 = vrot.slane %v944, %v948
  %v955 = vunpack.c.l.b16 %v940
  %v956 = vunpack.c.l.b16 %v941
  %v957 = vunpack.c.l.b16 %v942
  %v958 = vunpack.c.l.b16 %v943
  %v959 = vpack.c.b16 %v956, %v955
  %v960 = vpack.c.b16 %v958, %v957
  %vm963 = vcmask 261120
  %v965 = vsel %vm963, %v939, 0
  %967 = vmatprep.subr.bf16.mxu0 0
  %968 = vmatpush1.bf16.msra.mxu0 %v959
  %969 = vmatprep.subr.bf16.mxu0 0
  %970 = vmatpush1.bf16.msra.mxu0 %v960
  %971 = vmatprep.subr.bf16.mxu0 0
  %972 = vmatpush1.bf16.msra.mxu0 0
  %973 = vmatprep.subr.bf16.mxu0 0
  %974 = vmatpush1.bf16.msra.mxu0 0
  %975 = vmatprep.subr.bf16.mxu0 0
  %976 = vmatpush1.bf16.msra.mxu0 0
  %977 = vmatprep.subr.bf16.mxu0 0
  %978 = vmatpush1.bf16.msra.mxu0 0
  %979 = vmatprep.subr.bf16.mxu0 0
  %980 = vmatpush1.bf16.msra.mxu0 0
  %981 = vmatprep.subr.bf16.mxu0 0
  %982 = vmatpush1.bf16.msra.mxu0 0
  %983 = vmatprep.subr.bf16.mxu0 0
  %984 = vmatpush1.bf16.msra.mxu0 0
  %985 = vmatprep.subr.bf16.mxu0 0
  %986 = vmatpush1.bf16.msra.mxu0 0
  %987 = vmatprep.subr.bf16.mxu0 0
  %988 = vmatpush1.bf16.msra.mxu0 0
  %989 = vmatprep.subr.bf16.mxu0 0
  %990 = vmatpush1.bf16.msra.mxu0 0
  %991 = vmatprep.subr.bf16.mxu0 0
  %992 = vmatpush1.bf16.msra.mxu0 0
  %993 = vmatprep.subr.bf16.mxu0 0
  %994 = vmatpush1.bf16.msra.mxu0 0
  %995 = vmatprep.subr.bf16.mxu0 0
  %996 = vmatpush1.bf16.msra.mxu0 0
  %997 = vmatprep.subr.bf16.mxu0 0
  %998 = vmatpush1.bf16.msra.mxu0 0
  %999 = vmatprep.mubr.bf16.mxu0 0
  %1000 = vmatmul.mubr.bf16.gmra.mrb[0].mxu0 %v965
  %v1001 = vpop.f32.mrb[0].mxu0
  %v1002 = vadd.f32 %v949, %v1001
  %v1003 = vpop.f32.mrb[0].mxu0
  %v1004 = vpop.f32.mrb[0].mxu0
  %v1005 = vadd.f32 %v949, %v1004
  %v1006 = vpop.f32.mrb[0].mxu0
  %1007 = vdwg.mxu0
  %v1008 = vpack.c.bf16 %v1005, %v1002
  %v1009 = vld [vmem:[%s35] sm:$0xf]
  %v1010 = vld [vmem:[%s35 + $0x4] sm:$0xf]
  %v1011 = vld [vmem:[%s35 + $0x8] sm:$0xf]
  %v1012 = vld [vmem:[%s35 + $0xc] sm:$0xf]
  %v1013 = vld [vmem:[%s35 + $0x10] sm:$0xf]
  %v1014 = vld [vmem:[%s35 + $0x14] sm:$0xf]
  %v1015 = vld [vmem:[%s35 + $0x18] sm:$0xf]
  %v1016 = vld [vmem:[%s35 + $0x1c] sm:$0xf]
  %v1017 = vld [vmem:[%s35 + $0x20] sm:$0xf]
  %v1018 = vld [vmem:[%s35 + $0x24] sm:$0xf]
  %v1019 = vld [vmem:[%s35 + $0x28] sm:$0xf]
  %v1020 = vld [vmem:[%s35 + $0x2c] sm:$0xf]
  %v1021 = vld [vmem:[%s35 + $0x30] sm:$0xf]
  %v1022 = vld [vmem:[%s35 + $0x34] sm:$0xf]
  %v1023 = vld [vmem:[%s35 + $0x38] sm:$0xf]
  %v1024 = vld [vmem:[%s35 + $0x3c] sm:$0xf]
  %v1025 = vld [vmem:[%s37] sm:$0x1]
  %v1027 = vlaneseq
  %v1028 = vshrl.u32 %v1027, 7
  %v1029 = vsub.s32 0, %v1028
  %v1030 = vrot.slane %v1025, %v1029
  %v1048 = vunpack.c.l.b16 %v1009
  %v1049 = vunpack.c.l.b16 %v1010
  %v1050 = vunpack.c.l.b16 %v1011
  %v1051 = vunpack.c.l.b16 %v1012
  %v1052 = vunpack.c.l.b16 %v1013
  %v1053 = vunpack.c.l.b16 %v1014
  %v1054 = vunpack.c.l.b16 %v1015
  %v1055 = vunpack.c.l.b16 %v1016
  %v1056 = vunpack.c.l.b16 %v1017
  %v1057 = vunpack.c.l.b16 %v1018
  %v1058 = vunpack.c.l.b16 %v1019
  %v1059 = vunpack.c.l.b16 %v1020
  %v1060 = vunpack.c.l.b16 %v1021
  %v1061 = vunpack.c.l.b16 %v1022
  %v1062 = vunpack.c.l.b16 %v1023
  %v1063 = vunpack.c.l.b16 %v1024
  %v1064 = vpack.c.b16 %v1049, %v1048
  %v1065 = vpack.c.b16 %v1051, %v1050
  %v1066 = vpack.c.b16 %v1053, %v1052
  %v1067 = vpack.c.b16 %v1055, %v1054
  %v1068 = vpack.c.b16 %v1057, %v1056
  %v1069 = vpack.c.b16 %v1059, %v1058
  %v1070 = vpack.c.b16 %v1061, %v1060
  %v1071 = vpack.c.b16 %v1063, %v1062
  %1080 = vmatprep.subr.bf16.mxu0 0
  %1081 = vmatpush1.bf16.msra.mxu0 %v1064
  %1082 = vmatprep.subr.bf16.mxu0 0
  %1083 = vmatpush1.bf16.msra.mxu0 %v1065
  %1084 = vmatprep.subr.bf16.mxu0 0
  %1085 = vmatpush1.bf16.msra.mxu0 %v1066
  %1086 = vmatprep.subr.bf16.mxu0 0
  %1087 = vmatpush1.bf16.msra.mxu0 %v1067
  %1088 = vmatprep.subr.bf16.mxu0 0
  %1089 = vmatpush1.bf16.msra.mxu0 %v1068
  %1090 = vmatprep.subr.bf16.mxu0 0
  %1091 = vmatpush1.bf16.msra.mxu0 %v1069
  %1092 = vmatprep.subr.bf16.mxu0 0
  %1093 = vmatpush1.bf16.msra.mxu0 %v1070
  %1094 = vmatprep.subr.bf16.mxu0 0
  %1095 = vmatpush1.bf16.msra.mxu0 %v1071
  %1096 = vmatprep.subr.bf16.mxu0 0
  %1097 = vmatpush1.bf16.msra.mxu0 0
  %1098 = vmatprep.subr.bf16.mxu0 0
  %1099 = vmatpush1.bf16.msra.mxu0 0
  %1100 = vmatprep.subr.bf16.mxu0 0
  %1101 = vmatpush1.bf16.msra.mxu0 0
  %1102 = vmatprep.subr.bf16.mxu0 0
  %1103 = vmatpush1.bf16.msra.mxu0 0
  %1104 = vmatprep.subr.bf16.mxu0 0
  %1105 = vmatpush1.bf16.msra.mxu0 0
  %1106 = vmatprep.subr.bf16.mxu0 0
  %1107 = vmatpush1.bf16.msra.mxu0 0
  %1108 = vmatprep.subr.bf16.mxu0 0
  %1109 = vmatpush1.bf16.msra.mxu0 0
  %1110 = vmatprep.subr.bf16.mxu0 0
  %1111 = vmatpush1.bf16.msra.mxu0 0
  %1112 = vmatprep.mubr.bf16.mxu0 0
  %1113 = vmatmul.mubr.bf16.gmra.mrb[0].mxu0 %v1008
  %v1114 = vpop.f32.mrb[0].mxu0
  %v1115 = vadd.f32 %v1030, %v1114
  %v1116 = vpop.f32.mrb[0].mxu0
  %v1117 = vpop.f32.mrb[0].mxu0
  %v1118 = vadd.f32 %v1030, %v1117
  %v1119 = vpop.f32.mrb[0].mxu0
  %1120 = vdwg.mxu0
  %v1121 = vmax.f32 %v1115, 0.0
  %v1122 = vmax.f32 %v1118, 0.0
  %v1123 = vpack.c.bf16 %v1122, %v1121
  %v1124 = vld [vmem:[%s39] sm:$0xf]
  %v1125 = vld [vmem:[%s39 + $0x4] sm:$0xf]
  %v1126 = vld [vmem:[%s39 + $0x8] sm:$0xf]
  %v1127 = vld [vmem:[%s39 + $0xc] sm:$0xf]
  %v1128 = vld [vmem:[%s39 + $0x10] sm:$0xf]
  %v1129 = vld [vmem:[%s39 + $0x14] sm:$0xf]
  %v1130 = vld [vmem:[%s39 + $0x18] sm:$0xf]
  %v1131 = vld [vmem:[%s39 + $0x1c] sm:$0xf]
  %v1132 = vld [vmem:[%s39 + $0x20] sm:$0xf]
  %v1133 = vld [vmem:[%s39 + $0x24] sm:$0xf]
  %v1134 = vld [vmem:[%s39 + $0x28] sm:$0xf]
  %v1135 = vld [vmem:[%s39 + $0x2c] sm:$0xf]
  %v1136 = vld [vmem:[%s39 + $0x30] sm:$0xf]
  %v1137 = vld [vmem:[%s39 + $0x34] sm:$0xf]
  %v1138 = vld [vmem:[%s39 + $0x38] sm:$0xf]
  %v1139 = vld [vmem:[%s39 + $0x3c] sm:$0xf]
  %v1140 = vld [vmem:[%s41] sm:$0x1]
  %v1142 = vlaneseq
  %v1143 = vshrl.u32 %v1142, 7
  %v1144 = vsub.s32 0, %v1143
  %v1145 = vrot.slane %v1140, %v1144
  %v1163 = vunpack.c.l.b16 %v1124
  %v1164 = vunpack.c.l.b16 %v1125
  %v1165 = vunpack.c.l.b16 %v1126
  %v1166 = vunpack.c.l.b16 %v1127
  %v1167 = vunpack.c.l.b16 %v1128
  %v1168 = vunpack.c.l.b16 %v1129
  %v1169 = vunpack.c.l.b16 %v1130
  %v1170 = vunpack.c.l.b16 %v1131
  %v1171 = vunpack.c.l.b16 %v1132
  %v1172 = vunpack.c.l.b16 %v1133
  %v1173 = vunpack.c.l.b16 %v1134
  %v1174 = vunpack.c.l.b16 %v1135
  %v1175 = vunpack.c.l.b16 %v1136
  %v1176 = vunpack.c.l.b16 %v1137
  %v1177 = vunpack.c.l.b16 %v1138
  %v1178 = vunpack.c.l.b16 %v1139
  %v1179 = vpack.c.b16 %v1164, %v1163
  %v1180 = vpack.c.b16 %v1166, %v1165
  %v1181 = vpack.c.b16 %v1168, %v1167
  %v1182 = vpack.c.b16 %v1170, %v1169
  %v1183 = vpack.c.b16 %v1172, %v1171
  %v1184 = vpack.c.b16 %v1174, %v1173
  %v1185 = vpack.c.b16 %v1176, %v1175
  %v1186 = vpack.c.b16 %v1178, %v1177
  %1195 = vmatprep.subr.bf16.mxu0 0
  %1196 = vmatpush1.bf16.msra.mxu0 %v1179
  %1197 = vmatprep.subr.bf16.mxu0 0
  %1198 = vmatpush1.bf16.msra.mxu0 %v1180
  %1199 = vmatprep.subr.bf16.mxu0 0
  %1200 = vmatpush1.bf16.msra.mxu0 %v1181
  %1201 = vmatprep.subr.bf16.mxu0 0
  %1202 = vmatpush1.bf16.msra.mxu0 %v1182
  %1203 = vmatprep.subr.bf16.mxu0 0
  %1204 = vmatpush1.bf16.msra.mxu0 %v1183
  %1205 = vmatprep.subr.bf16.mxu0 0
  %1206 = vmatpush1.bf16.msra.mxu0 %v1184
  %1207 = vmatprep.subr.bf16.mxu0 0
  %1208 = vmatpush1.bf16.msra.mxu0 %v1185
  %1209 = vmatprep.subr.bf16.mxu0 0
  %1210 = vmatpush1.bf16.msra.mxu0 %v1186
  %1211 = vmatprep.subr.bf16.mxu0 0
  %1212 = vmatpush1.bf16.msra.mxu0 0
  %1213 = vmatprep.subr.bf16.mxu0 0
  %1214 = vmatpush1.bf16.msra.mxu0 0
  %1215 = vmatprep.subr.bf16.mxu0 0
  %1216 = vmatpush1.bf16.msra.mxu0 0
  %1217 = vmatprep.subr.bf16.mxu0 0
  %1218 = vmatpush1.bf16.msra.mxu0 0
  %1219 = vmatprep.subr.bf16.mxu0 0
  %1220 = vmatpush1.bf16.msra.mxu0 0
  %1221 = vmatprep.subr.bf16.mxu0 0
  %1222 = vmatpush1.bf16.msra.mxu0 0
  %1223 = vmatprep.subr.bf16.mxu0 0
  %1224 = vmatpush1.bf16.msra.mxu0 0
  %1225 = vmatprep.subr.bf16.mxu0 0
  %1226 = vmatpush1.bf16.msra.mxu0 0
  %1227 = vmatprep.mubr.bf16.mxu0 0
  %1228 = vmatmul.mubr.bf16.gmra.mrb[0].mxu0 %v1123
  %v1229 = vpop.f32.mrb[0].mxu0
  %v1230 = vadd.f32 %v1145, %v1229
  %v1231 = vpop.f32.mrb[0].mxu0
  %v1232 = vpop.f32.mrb[0].mxu0
  %v1233 = vadd.f32 %v1145, %v1232
  %v1234 = vpop.f32.mrb[0].mxu0
  %1235 = vdwg.mxu0
  %v1236 = vmax.f32 %v1230, 0.0
  %v1237 = vmax.f32 %v1233, 0.0
  %v1238 = vpack.c.bf16 %v1237, %v1236
  %v1239 = vld [vmem:[%s43] sm:$0xf]
  %v1240 = vld [vmem:[%s43 + $0x4] sm:$0xf]
  %v1241 = vld [vmem:[%s43 + $0x8] sm:$0xf]
  %v1242 = vld [vmem:[%s43 + $0xc] sm:$0xf]
  %v1243 = vld [vmem:[%s43 + $0x10] sm:$0xf]
  %v1244 = vld [vmem:[%s43 + $0x14] sm:$0xf]
  %v1245 = vld [vmem:[%s43 + $0x18] sm:$0xf]
  %v1246 = vld [vmem:[%s43 + $0x1c] sm:$0xf]
  %v1247 = vld [vmem:[%s43 + $0x20] sm:$0xf]
  %v1248 = vld [vmem:[%s43 + $0x24] sm:$0xf]
  %v1249 = vld [vmem:[%s43 + $0x28] sm:$0xf]
  %v1250 = vld [vmem:[%s43 + $0x2c] sm:$0xf]
  %v1251 = vld [vmem:[%s43 + $0x30] sm:$0xf]
  %v1252 = vld [vmem:[%s43 + $0x34] sm:$0xf]
  %v1253 = vld [vmem:[%s43 + $0x38] sm:$0xf]
  %v1254 = vld [vmem:[%s43 + $0x3c] sm:$0xf]
  %v1255 = vld [vmem:[%s45] sm:$0x1]
  %v1257 = vlaneseq
  %v1258 = vshrl.u32 %v1257, 7
  %v1259 = vsub.s32 0, %v1258
  %v1260 = vrot.slane %v1255, %v1259
  %v1278 = vunpack.c.l.b16 %v1239
  %v1279 = vunpack.c.l.b16 %v1240
  %v1280 = vunpack.c.l.b16 %v1241
  %v1281 = vunpack.c.l.b16 %v1242
  %v1282 = vunpack.c.l.b16 %v1243
  %v1283 = vunpack.c.l.b16 %v1244
  %v1284 = vunpack.c.l.b16 %v1245
  %v1285 = vunpack.c.l.b16 %v1246
  %v1286 = vunpack.c.l.b16 %v1247
  %v1287 = vunpack.c.l.b16 %v1248
  %v1288 = vunpack.c.l.b16 %v1249
  %v1289 = vunpack.c.l.b16 %v1250
  %v1290 = vunpack.c.l.b16 %v1251
  %v1291 = vunpack.c.l.b16 %v1252
  %v1292 = vunpack.c.l.b16 %v1253
  %v1293 = vunpack.c.l.b16 %v1254
  %v1294 = vpack.c.b16 %v1279, %v1278
  %v1295 = vpack.c.b16 %v1281, %v1280
  %v1296 = vpack.c.b16 %v1283, %v1282
  %v1297 = vpack.c.b16 %v1285, %v1284
  %v1298 = vpack.c.b16 %v1287, %v1286
  %v1299 = vpack.c.b16 %v1289, %v1288
  %v1300 = vpack.c.b16 %v1291, %v1290
  %v1301 = vpack.c.b16 %v1293, %v1292
  %1310 = vmatprep.subr.bf16.mxu0 0
  %1311 = vmatpush1.bf16.msra.mxu0 %v1294
  %1312 = vmatprep.subr.bf16.mxu0 0
  %1313 = vmatpush1.bf16.msra.mxu0 %v1295
  %1314 = vmatprep.subr.bf16.mxu0 0
  %1315 = vmatpush1.bf16.msra.mxu0 %v1296
  %1316 = vmatprep.subr.bf16.mxu0 0
  %1317 = vmatpush1.bf16.msra.mxu0 %v1297
  %1318 = vmatprep.subr.bf16.mxu0 0
  %1319 = vmatpush1.bf16.msra.mxu0 %v1298
  %1320 = vmatprep.subr.bf16.mxu0 0
  %1321 = vmatpush1.bf16.msra.mxu0 %v1299
  %1322 = vmatprep.subr.bf16.mxu0 0
  %1323 = vmatpush1.bf16.msra.mxu0 %v1300
  %1324 = vmatprep.subr.bf16.mxu0 0
  %1325 = vmatpush1.bf16.msra.mxu0 %v1301
  %1326 = vmatprep.subr.bf16.mxu0 0
  %1327 = vmatpush1.bf16.msra.mxu0 0
  %1328 = vmatprep.subr.bf16.mxu0 0
  %1329 = vmatpush1.bf16.msra.mxu0 0
  %1330 = vmatprep.subr.bf16.mxu0 0
  %1331 = vmatpush1.bf16.msra.mxu0 0
  %1332 = vmatprep.subr.bf16.mxu0 0
  %1333 = vmatpush1.bf16.msra.mxu0 0
  %1334 = vmatprep.subr.bf16.mxu0 0
  %1335 = vmatpush1.bf16.msra.mxu0 0
  %1336 = vmatprep.subr.bf16.mxu0 0
  %1337 = vmatpush1.bf16.msra.mxu0 0
  %1338 = vmatprep.subr.bf16.mxu0 0
  %1339 = vmatpush1.bf16.msra.mxu0 0
  %1340 = vmatprep.subr.bf16.mxu0 0
  %1341 = vmatpush1.bf16.msra.mxu0 0
  %1342 = vmatprep.mubr.bf16.mxu0 0
  %1343 = vmatmul.mubr.bf16.gmra.mrb[0].mxu0 %v1238
  %v1344 = vpop.f32.mrb[0].mxu0
  %v1345 = vadd.f32 %v1260, %v1344
  %v1346 = vpop.f32.mrb[0].mxu0
  %v1347 = vpop.f32.mrb[0].mxu0
  %v1348 = vadd.f32 %v1260, %v1347
  %v1349 = vpop.f32.mrb[0].mxu0
  %1350 = vdwg.mxu0
  %v1351 = vmax.f32 %v1345, 0.0
  %v1352 = vmax.f32 %v1348, 0.0
  %v1353 = vadd.f32 %v1002, %v1351
  %v1354 = vadd.f32 %v1005, %v1352
  %v1355 = vpack.c.bf16 %v1354, %v1353
  %v1356 = vld [vmem:[%s47] sm:$0xf]
  %v1357 = vld [vmem:[%s47 + $0x4] sm:$0xf]
  %v1358 = vld [vmem:[%s47 + $0x8] sm:$0xf]
  %v1359 = vld [vmem:[%s47 + $0xc] sm:$0xf]
  %v1360 = vld [vmem:[%s47 + $0x10] sm:$0xf]
  %v1361 = vld [vmem:[%s47 + $0x14] sm:$0xf]
  %v1362 = vld [vmem:[%s47 + $0x18] sm:$0xf]
  %v1363 = vld [vmem:[%s47 + $0x1c] sm:$0xf]
  %v1364 = vld [vmem:[%s47 + $0x20] sm:$0xf]
  %v1365 = vld [vmem:[%s47 + $0x24] sm:$0xf]
  %v1366 = vld [vmem:[%s47 + $0x28] sm:$0xf]
  %v1367 = vld [vmem:[%s47 + $0x2c] sm:$0xf]
  %v1368 = vld [vmem:[%s47 + $0x30] sm:$0xf]
  %v1369 = vld [vmem:[%s47 + $0x34] sm:$0xf]
  %v1370 = vld [vmem:[%s47 + $0x38] sm:$0xf]
  %v1371 = vld [vmem:[%s47 + $0x3c] sm:$0xf]
  %v1372 = vld [vmem:[%s49] sm:$0x1]
  %v1374 = vlaneseq
  %v1375 = vshrl.u32 %v1374, 7
  %v1376 = vsub.s32 0, %v1375
  %v1377 = vrot.slane %v1372, %v1376
  %v1395 = vunpack.c.l.b16 %v1356
  %v1396 = vunpack.c.l.b16 %v1357
  %v1397 = vunpack.c.l.b16 %v1358
  %v1398 = vunpack.c.l.b16 %v1359
  %v1399 = vunpack.c.l.b16 %v1360
  %v1400 = vunpack.c.l.b16 %v1361
  %v1401 = vunpack.c.l.b16 %v1362
  %v1402 = vunpack.c.l.b16 %v1363
  %v1403 = vunpack.c.l.b16 %v1364
  %v1404 = vunpack.c.l.b16 %v1365
  %v1405 = vunpack.c.l.b16 %v1366
  %v1406 = vunpack.c.l.b16 %v1367
  %v1407 = vunpack.c.l.b16 %v1368
  %v1408 = vunpack.c.l.b16 %v1369
  %v1409 = vunpack.c.l.b16 %v1370
  %v1410 = vunpack.c.l.b16 %v1371
  %v1411 = vpack.c.b16 %v1396, %v1395
  %v1412 = vpack.c.b16 %v1398, %v1397
  %v1413 = vpack.c.b16 %v1400, %v1399
  %v1414 = vpack.c.b16 %v1402, %v1401
  %v1415 = vpack.c.b16 %v1404, %v1403
  %v1416 = vpack.c.b16 %v1406, %v1405
  %v1417 = vpack.c.b16 %v1408, %v1407
  %v1418 = vpack.c.b16 %v1410, %v1409
  %1427 = vmatprep.subr.bf16.mxu0 0
  %1428 = vmatpush1.bf16.msra.mxu0 %v1411
  %1429 = vmatprep.subr.bf16.mxu0 0
  %1430 = vmatpush1.bf16.msra.mxu0 %v1412
  %1431 = vmatprep.subr.bf16.mxu0 0
  %1432 = vmatpush1.bf16.msra.mxu0 %v1413
  %1433 = vmatprep.subr.bf16.mxu0 0
  %1434 = vmatpush1.bf16.msra.mxu0 %v1414
  %1435 = vmatprep.subr.bf16.mxu0 0
  %1436 = vmatpush1.bf16.msra.mxu0 %v1415
  %1437 = vmatprep.subr.bf16.mxu0 0
  %1438 = vmatpush1.bf16.msra.mxu0 %v1416
  %1439 = vmatprep.subr.bf16.mxu0 0
  %1440 = vmatpush1.bf16.msra.mxu0 %v1417
  %1441 = vmatprep.subr.bf16.mxu0 0
  %1442 = vmatpush1.bf16.msra.mxu0 %v1418
  %1443 = vmatprep.subr.bf16.mxu0 0
  %1444 = vmatpush1.bf16.msra.mxu0 0
  %1445 = vmatprep.subr.bf16.mxu0 0
  %1446 = vmatpush1.bf16.msra.mxu0 0
  %1447 = vmatprep.subr.bf16.mxu0 0
  %1448 = vmatpush1.bf16.msra.mxu0 0
  %1449 = vmatprep.subr.bf16.mxu0 0
  %1450 = vmatpush1.bf16.msra.mxu0 0
  %1451 = vmatprep.subr.bf16.mxu0 0
  %1452 = vmatpush1.bf16.msra.mxu0 0
  %1453 = vmatprep.subr.bf16.mxu0 0
  %1454 = vmatpush1.bf16.msra.mxu0 0
  %1455 = vmatprep.subr.bf16.mxu0 0
  %1456 = vmatpush1.bf16.msra.mxu0 0
  %1457 = vmatprep.subr.bf16.mxu0 0
  %1458 = vmatpush1.bf16.msra.mxu0 0
  %1459 = vmatprep.mubr.bf16.mxu0 0
  %1460 = vmatmul.mubr.bf16.gmra.mrb[0].mxu0 %v1355
  %v1461 = vpop.f32.mrb[0].mxu0
  %v1462 = vadd.f32 %v1377, %v1461
  %v1463 = vpop.f32.mrb[0].mxu0
  %v1464 = vpop.f32.mrb[0].mxu0
  %v1465 = vadd.f32 %v1377, %v1464
  %v1466 = vpop.f32.mrb[0].mxu0
  %1467 = vdwg.mxu0
  %v1468 = vmax.f32 %v1462, 0.0
  %v1469 = vmax.f32 %v1465, 0.0
  %v1470 = vpack.c.bf16 %v1469, %v1468
  %v1471 = vld [vmem:[%s51] sm:$0xf]
  %v1472 = vld [vmem:[%s51 + $0x4] sm:$0xf]
  %v1473 = vld [vmem:[%s51 + $0x8] sm:$0xf]
  %v1474 = vld [vmem:[%s51 + $0xc] sm:$0xf]
  %v1475 = vld [vmem:[%s51 + $0x10] sm:$0xf]
  %v1476 = vld [vmem:[%s51 + $0x14] sm:$0xf]
  %v1477 = vld [vmem:[%s51 + $0x18] sm:$0xf]
  %v1478 = vld [vmem:[%s51 + $0x1c] sm:$0xf]
  %v1479 = vld [vmem:[%s51 + $0x20] sm:$0xf]
  %v1480 = vld [vmem:[%s51 + $0x24] sm:$0xf]
  %v1481 = vld [vmem:[%s51 + $0x28] sm:$0xf]
  %v1482 = vld [vmem:[%s51 + $0x2c] sm:$0xf]
  %v1483 = vld [vmem:[%s51 + $0x30] sm:$0xf]
  %v1484 = vld [vmem:[%s51 + $0x34] sm:$0xf]
  %v1485 = vld [vmem:[%s51 + $0x38] sm:$0xf]
  %v1486 = vld [vmem:[%s51 + $0x3c] sm:$0xf]
  %v1487 = vld [vmem:[%s53] sm:$0x1]
  %v1489 = vlaneseq
  %v1490 = vshrl.u32 %v1489, 7
  %v1491 = vsub.s32 0, %v1490
  %v1492 = vrot.slane %v1487, %v1491
  %v1510 = vunpack.c.l.b16 %v1471
  %v1511 = vunpack.c.l.b16 %v1472
  %v1512 = vunpack.c.l.b16 %v1473
  %v1513 = vunpack.c.l.b16 %v1474
  %v1514 = vunpack.c.l.b16 %v1475
  %v1515 = vunpack.c.l.b16 %v1476
  %v1516 = vunpack.c.l.b16 %v1477
  %v1517 = vunpack.c.l.b16 %v1478
  %v1518 = vunpack.c.l.b16 %v1479
  %v1519 = vunpack.c.l.b16 %v1480
  %v1520 = vunpack.c.l.b16 %v1481
  %v1521 = vunpack.c.l.b16 %v1482
  %v1522 = vunpack.c.l.b16 %v1483
  %v1523 = vunpack.c.l.b16 %v1484
  %v1524 = vunpack.c.l.b16 %v1485
  %v1525 = vunpack.c.l.b16 %v1486
  %v1526 = vpack.c.b16 %v1511, %v1510
  %v1527 = vpack.c.b16 %v1513, %v1512
  %v1528 = vpack.c.b16 %v1515, %v1514
  %v1529 = vpack.c.b16 %v1517, %v1516
  %v1530 = vpack.c.b16 %v1519, %v1518
  %v1531 = vpack.c.b16 %v1521, %v1520
  %v1532 = vpack.c.b16 %v1523, %v1522
  %v1533 = vpack.c.b16 %v1525, %v1524
  %1542 = vmatprep.subr.bf16.mxu0 0
  %1543 = vmatpush1.bf16.msra.mxu0 %v1526
  %1544 = vmatprep.subr.bf16.mxu0 0
  %1545 = vmatpush1.bf16.msra.mxu0 %v1527
  %1546 = vmatprep.subr.bf16.mxu0 0
  %1547 = vmatpush1.bf16.msra.mxu0 %v1528
  %1548 = vmatprep.subr.bf16.mxu0 0
  %1549 = vmatpush1.bf16.msra.mxu0 %v1529
  %1550 = vmatprep.subr.bf16.mxu0 0
  %1551 = vmatpush1.bf16.msra.mxu0 %v1530
  %1552 = vmatprep.subr.bf16.mxu0 0
  %1553 = vmatpush1.bf16.msra.mxu0 %v1531
  %1554 = vmatprep.subr.bf16.mxu0 0
  %1555 = vmatpush1.bf16.msra.mxu0 %v1532
  %1556 = vmatprep.subr.bf16.mxu0 0
  %1557 = vmatpush1.bf16.msra.mxu0 %v1533
  %1558 = vmatprep.subr.bf16.mxu0 0
  %1559 = vmatpush1.bf16.msra.mxu0 0
  %1560 = vmatprep.subr.bf16.mxu0 0
  %1561 = vmatpush1.bf16.msra.mxu0 0
  %1562 = vmatprep.subr.bf16.mxu0 0
  %1563 = vmatpush1.bf16.msra.mxu0 0
  %1564 = vmatprep.subr.bf16.mxu0 0
  %1565 = vmatpush1.bf16.msra.mxu0 0
  %1566 = vmatprep.subr.bf16.mxu0 0
  %1567 = vmatpush1.bf16.msra.mxu0 0
  %1568 = vmatprep.subr.bf16.mxu0 0
  %1569 = vmatpush1.bf16.msra.mxu0 0
  %1570 = vmatprep.subr.bf16.mxu0 0
  %1571 = vmatpush1.bf16.msra.mxu0 0
  %1572 = vmatprep.subr.bf16.mxu0 0
  %1573 = vmatpush1.bf16.msra.mxu0 0
  %1574 = vmatprep.mubr.bf16.mxu0 0
  %1575 = vmatmul.mubr.bf16.gmra.mrb[0].mxu0 %v1470
  %v1576 = vpop.f32.mrb[0].mxu0
  %v1577 = vadd.f32 %v1492, %v1576
  %v1578 = vpop.f32.mrb[0].mxu0
  %v1579 = vpop.f32.mrb[0].mxu0
  %v1580 = vadd.f32 %v1492, %v1579
  %v1581 = vpop.f32.mrb[0].mxu0
  %1582 = vdwg.mxu0
  %v1583 = vmax.f32 %v1577, 0.0
  %v1584 = vmax.f32 %v1580, 0.0
  %v1585 = vpack.c.bf16 %v1584, %v1583
  %v1586 = vld [vmem:[%s55] sm:$0xf]
  %v1587 = vld [vmem:[%s55 + $0x4] sm:$0xf]
  %v1588 = vld [vmem:[%s55 + $0x8] sm:$0xf]
  %v1589 = vld [vmem:[%s55 + $0xc] sm:$0xf]
  %v1590 = vld [vmem:[%s55 + $0x10] sm:$0xf]
  %v1591 = vld [vmem:[%s55 + $0x14] sm:$0xf]
  %v1592 = vld [vmem:[%s55 + $0x18] sm:$0xf]
  %v1593 = vld [vmem:[%s55 + $0x1c] sm:$0xf]
  %v1594 = vld [vmem:[%s55 + $0x20] sm:$0xf]
  %v1595 = vld [vmem:[%s55 + $0x24] sm:$0xf]
  %v1596 = vld [vmem:[%s55 + $0x28] sm:$0xf]
  %v1597 = vld [vmem:[%s55 + $0x2c] sm:$0xf]
  %v1598 = vld [vmem:[%s55 + $0x30] sm:$0xf]
  %v1599 = vld [vmem:[%s55 + $0x34] sm:$0xf]
  %v1600 = vld [vmem:[%s55 + $0x38] sm:$0xf]
  %v1601 = vld [vmem:[%s55 + $0x3c] sm:$0xf]
  %v1602 = vld [vmem:[%s57] sm:$0x1]
  %v1604 = vlaneseq
  %v1605 = vshrl.u32 %v1604, 7
  %v1606 = vsub.s32 0, %v1605
  %v1607 = vrot.slane %v1602, %v1606
  %v1625 = vunpack.c.l.b16 %v1586
  %v1626 = vunpack.c.l.b16 %v1587
  %v1627 = vunpack.c.l.b16 %v1588
  %v1628 = vunpack.c.l.b16 %v1589
  %v1629 = vunpack.c.l.b16 %v1590
  %v1630 = vunpack.c.l.b16 %v1591
  %v1631 = vunpack.c.l.b16 %v1592
  %v1632 = vunpack.c.l.b16 %v1593
  %v1633 = vunpack.c.l.b16 %v1594
  %v1634 = vunpack.c.l.b16 %v1595
  %v1635 = vunpack.c.l.b16 %v1596
  %v1636 = vunpack.c.l.b16 %v1597
  %v1637 = vunpack.c.l.b16 %v1598
  %v1638 = vunpack.c.l.b16 %v1599
  %v1639 = vunpack.c.l.b16 %v1600
  %v1640 = vunpack.c.l.b16 %v1601
  %v1641 = vpack.c.b16 %v1626, %v1625
  %v1642 = vpack.c.b16 %v1628, %v1627
  %v1643 = vpack.c.b16 %v1630, %v1629
  %v1644 = vpack.c.b16 %v1632, %v1631
  %v1645 = vpack.c.b16 %v1634, %v1633
  %v1646 = vpack.c.b16 %v1636, %v1635
  %v1647 = vpack.c.b16 %v1638, %v1637
  %v1648 = vpack.c.b16 %v1640, %v1639
  %1657 = vmatprep.subr.bf16.mxu0 0
  %1658 = vmatpush1.bf16.msra.mxu0 %v1641
  %1659 = vmatprep.subr.bf16.mxu0 0
  %1660 = vmatpush1.bf16.msra.mxu0 %v1642
  %1661 = vmatprep.subr.bf16.mxu0 0
  %1662 = vmatpush1.bf16.msra.mxu0 %v1643
  %1663 = vmatprep.subr.bf16.mxu0 0
  %1664 = vmatpush1.bf16.msra.mxu0 %v1644
  %1665 = vmatprep.subr.bf16.mxu0 0
  %1666 = vmatpush1.bf16.msra.mxu0 %v1645
  %1667 = vmatprep.subr.bf16.mxu0 0
  %1668 = vmatpush1.bf16.msra.mxu0 %v1646
  %1669 = vmatprep.subr.bf16.mxu0 0
  %1670 = vmatpush1.bf16.msra.mxu0 %v1647
  %1671 = vmatprep.subr.bf16.mxu0 0
  %1672 = vmatpush1.bf16.msra.mxu0 %v1648
  %1673 = vmatprep.subr.bf16.mxu0 0
  %1674 = vmatpush1.bf16.msra.mxu0 0
  %1675 = vmatprep.subr.bf16.mxu0 0
  %1676 = vmatpush1.bf16.msra.mxu0 0
  %1677 = vmatprep.subr.bf16.mxu0 0
  %1678 = vmatpush1.bf16.msra.mxu0 0
  %1679 = vmatprep.subr.bf16.mxu0 0
  %1680 = vmatpush1.bf16.msra.mxu0 0
  %1681 = vmatprep.subr.bf16.mxu0 0
  %1682 = vmatpush1.bf16.msra.mxu0 0
  %1683 = vmatprep.subr.bf16.mxu0 0
  %1684 = vmatpush1.bf16.msra.mxu0 0
  %1685 = vmatprep.subr.bf16.mxu0 0
  %1686 = vmatpush1.bf16.msra.mxu0 0
  %1687 = vmatprep.subr.bf16.mxu0 0
  %1688 = vmatpush1.bf16.msra.mxu0 0
  %1689 = vmatprep.mubr.bf16.mxu0 0
  %1690 = vmatmul.mubr.bf16.gmra.mrb[0].mxu0 %v1585
  %v1691 = vpop.f32.mrb[0].mxu0
  %v1692 = vadd.f32 %v1607, %v1691
  %v1693 = vpop.f32.mrb[0].mxu0
  %v1694 = vpop.f32.mrb[0].mxu0
  %v1695 = vadd.f32 %v1607, %v1694
  %v1696 = vpop.f32.mrb[0].mxu0
  %1697 = vdwg.mxu0
  %v1698 = vmax.f32 %v1692, 0.0
  %v1699 = vmax.f32 %v1695, 0.0
  %v1700 = vadd.f32 %v1353, %v1698
  %v1701 = vadd.f32 %v1354, %v1699
  %v1702 = vpack.c.bf16 %v1701, %v1700
  %v1704 = vunpack.c.l.b16 %v1702
  %v1705 = vunpack.c.h.b16 %v1702
  %v1706 = vpack.c.b16 %v1704, %v1704
  %v1707 = vpack.c.b16 %v1705, %v1705
  %1710 = vst [vmem:[%s59] sm:$0xf] %v1706
  %1711 = vst [vmem:[%s59 + $0x4] sm:$0xf] %v1707
  // Predicated region
  $region118: #{forward.1} parent=0 // pred_check
    _
  $region119: #{forward.1} parent=0 // pred_check_branch
    %1713 = sbr.rel (0) target = $region121
  $region120: #{forward.1} parent=0 // pred_region
    _
  $region121: #{forward.1} parent=0 // pred_fallthru
    _
  // Predicated region
  $region122: #{forward.1} parent=0 // pred_check
    _
  $region123: #{forward.1} parent=0 // pred_check_branch
    %1715 = sbr.rel (0) target = $region125
  $region124: #{forward.1} parent=0 // pred_region
    _
  $region125: #{forward.1} parent=0 // pred_fallthru
    _

// kernel: forward.1
$region0: #{forward.1}
  #allocation0 [shape = 'u32[]', space=smem, size = 0x4, offset = 0x4, fixed_abs, tag = 'smem constant byte address 0x4 - core index']
  #allocation1 [shape = 'u32[144,128]{1,0:T(1,128)}', space=vmem, size = 0x12000, scoped, tag = 'internal scratch']
  %s0 = inlined_call_operand.smem [shape: u32[30], index: -1, kind: input, shape index: {}]
  %s1 = sld [smem:[%s0]]
  %s2 = scalar_lea.smem %s0, 1
  %s3 = sld [smem:[%s2]]
  %s4 = scalar_lea.smem %s0, 2
  %s5 = sld [smem:[%s4]]
  %s6 = scalar_lea.smem %s0, 3
  %s7 = sld [smem:[%s6]]
  %s8 = scalar_lea.smem %s0, 4
  %s9 = sld [smem:[%s8]]
  %s10 = scalar_lea.smem %s0, 5
  %s11 = sld [smem:[%s10]]
  %s12 = scalar_lea.smem %s0, 6
  %s13 = sld [smem:[%s12]]
  %s14 = scalar_lea.smem %s0, 7
  %s15 = sld [smem:[%s14]]
  %s16 = scalar_lea.smem %s0, 8
  %s17 = sld [smem:[%s16]]
  %s18 = scalar_lea.smem %s0, 9
  %s19 = sld [smem:[%s18]]
  %s20 = scalar_lea.smem %s0, 10
  %s21 = sld [smem:[%s20]]
  %s22 = scalar_lea.smem %s0, 11
  %s23 = sld [smem:[%s22]]
  %s24 = scalar_lea.smem %s0, 12
  %s25 = sld [smem:[%s24]]
  %s26 = scalar_lea.smem %s0, 13
  %s27 = sld [smem:[%s26]]
  %s28 = scalar_lea.smem %s0, 14
  %s29 = sld [smem:[%s28]]
  %s30 = scalar_lea.smem %s0, 15
  %s31 = sld [smem:[%s30]]
  %s32 = scalar_lea.smem %s0, 16
  %s33 = sld [smem:[%s32]]
  %s34 = scalar_lea.smem %s0, 17
  %s35 = sld [smem:[%s34]]
  %s36 = scalar_lea.smem %s0, 18
  %s37 = sld [smem:[%s36]]
  %s38 = scalar_lea.smem %s0, 19
  %s39 = sld [smem:[%s38]]
  %s40 = scalar_lea.smem %s0, 20
  %s41 = sld [smem:[%s40]]
  %s42 = scalar_lea.smem %s0, 21
  %s43 = sld [smem:[%s42]]
  %s44 = scalar_lea.smem %s0, 22
  %s45 = sld [smem:[%s44]]
  %s46 = scalar_lea.smem %s0, 23
  %s47 = sld [smem:[%s46]]
  %s48 = scalar_lea.smem %s0, 24
  %s49 = sld [smem:[%s48]]
  %s50 = scalar_lea.smem %s0, 25
  %s51 = sld [smem:[%s50]]
  %s52 = scalar_lea.smem %s0, 26
  %s53 = sld [smem:[%s52]]
  %s54 = scalar_lea.smem %s0, 27
  %s55 = sld [smem:[%s54]]
  %s56 = scalar_lea.smem %s0, 28
  %s57 = sld [smem:[%s56]]
  %s58 = scalar_lea.smem %s0, 29
  %s59 = sld [smem:[%s58]]
  %s60 = sld [smem:[#allocation0]]
  $region126: #{forward.1} parent=0
    _
  %s62 = ssub.s32 1, %s60
  %s63 = scalar_select 0, %s62, %s60
  // Predicated region
  $region2: #{forward.1} parent=0 // pred_check
    _
  $region3: #{forward.1} parent=0 // pred_check_branch
    %65 = sbr.rel (0) target = $region5
  $region4: #{forward.1} parent=0 // pred_region
    _
  $region5: #{forward.1} parent=0 // pred_fallthru
    _
  // Predicated region
  $region6: #{forward.1} parent=0 // pred_check
    _
  $region7: #{forward.1} parent=0 // pred_check_branch
    %67 = sbr.rel (0) target = $region9
  $region8: #{forward.1} parent=0 // pred_region
    _
  $region9: #{forward.1} parent=0 // pred_fallthru
    _
  // Predicated region
  $region10: #{forward.1} parent=0 // pred_check
    _
  $region11: #{forward.1} parent=0 // pred_check_branch
    %69 = sbr.rel (0) target = $region13
  $region12: #{forward.1} parent=0 // pred_region
    _
  $region13: #{forward.1} parent=0 // pred_fallthru
    _
  // Predicated region
  $region14: #{forward.1} parent=0 // pred_check
    _
  $region15: #{forward.1} parent=0 // pred_check_branch
    %71 = sbr.rel (0) target = $region17
  $region16: #{forward.1} parent=0 // pred_region
    _
  $region17: #{forward.1} parent=0 // pred_fallthru
    _
  // Predicated region
  $region18: #{forward.1} parent=0 // pred_check
    _
  $region19: #{forward.1} parent=0 // pred_check_branch
    %73 = sbr.rel (0) target = $region21
  $region20: #{forward.1} parent=0 // pred_region
    _
  $region21: #{forward.1} parent=0 // pred_fallthru
    _
  // Predicated region
  $region22: #{forward.1} parent=0 // pred_check
    _
  $region23: #{forward.1} parent=0 // pred_check_branch
    %75 = sbr.rel (0) target = $region25
  $region24: #{forward.1} parent=0 // pred_region
    _
  $region25: #{forward.1} parent=0 // pred_fallthru
    _
  // Predicated region
  $region26: #{forward.1} parent=0 // pred_check
    _
  $region27: #{forward.1} parent=0 // pred_check_branch
    %77 = sbr.rel (0) target = $region29
  $region28: #{forward.1} parent=0 // pred_region
    _
  $region29: #{forward.1} parent=0 // pred_fallthru
    _
  // Predicated region
  $region30: #{forward.1} parent=0 // pred_check
    _
  $region31: #{forward.1} parent=0 // pred_check_branch
    %79 = sbr.rel (0) target = $region33
  $region32: #{forward.1} parent=0 // pred_region
    _
  $region33: #{forward.1} parent=0 // pred_fallthru
    _
  // Predicated region
  $region34: #{forward.1} parent=0 // pred_check
    _
  $region35: #{forward.1} parent=0 // pred_check_branch
    %81 = sbr.rel (0) target = $region37
  $region36: #{forward.1} parent=0 // pred_region
    _
  $region37: #{forward.1} parent=0 // pred_fallthru
    _
  // Predicated region
  $region38: #{forward.1} parent=0 // pred_check
    _
  $region39: #{forward.1} parent=0 // pred_check_branch
    %83 = sbr.rel (0) target = $region41
  $region40: #{forward.1} parent=0 // pred_region
    _
  $region41: #{forward.1} parent=0 // pred_fallthru
    _
  // Predicated region
  $region42: #{forward.1} parent=0 // pred_check
    _
  $region43: #{forward.1} parent=0 // pred_check_branch
    %85 = sbr.rel (0) target = $region45
  $region44: #{forward.1} parent=0 // pred_region
    _
  $region45: #{forward.1} parent=0 // pred_fallthru
    _
  // Predicated region
  $region46: #{forward.1} parent=0 // pred_check
    _
  $region47: #{forward.1} parent=0 // pred_check_branch
    %87 = sbr.rel (0) target = $region49
  $region48: #{forward.1} parent=0 // pred_region
    _
  $region49: #{forward.1} parent=0 // pred_fallthru
    _
  // Predicated region
  $region50: #{forward.1} parent=0 // pred_check
    _
  $region51: #{forward.1} parent=0 // pred_check_branch
    %89 = sbr.rel (0) target = $region53
  $region52: #{forward.1} parent=0 // pred_region
    _
  $region53: #{forward.1} parent=0 // pred_fallthru
    _
  // Predicated region
  $region54: #{forward.1} parent=0 // pred_check
    _
  $region55: #{forward.1} parent=0 // pred_check_branch
    %91 = sbr.rel (0) target = $region57
  $region56: #{forward.1} parent=0 // pred_region
    _
  $region57: #{forward.1} parent=0 // pred_fallthru
    _
  // Predicated region
  $region58: #{forward.1} parent=0 // pred_check
    _
  $region59: #{forward.1} parent=0 // pred_check_branch
    %93 = sbr.rel (0) target = $region61
  $region60: #{forward.1} parent=0 // pred_region
    _
  $region61: #{forward.1} parent=0 // pred_fallthru
    _
  // Predicated region
  $region62: #{forward.1} parent=0 // pred_check
    _
  $region63: #{forward.1} parent=0 // pred_check_branch
    %95 = sbr.rel (0) target = $region65
  $region64: #{forward.1} parent=0 // pred_region
    _
  $region65: #{forward.1} parent=0 // pred_fallthru
    _
  // Predicated region
  $region66: #{forward.1} parent=0 // pred_check
    _
  $region67: #{forward.1} parent=0 // pred_check_branch
    %97 = sbr.rel (0) target = $region69
  $region68: #{forward.1} parent=0 // pred_region
    _
  $region69: #{forward.1} parent=0 // pred_fallthru
    _
  // Predicated region
  $region70: #{forward.1} parent=0 // pred_check
    _
  $region71: #{forward.1} parent=0 // pred_check_branch
    %99 = sbr.rel (0) target = $region73
  $region72: #{forward.1} parent=0 // pred_region
    _
  $region73: #{forward.1} parent=0 // pred_fallthru
    _
  // Predicated region
  $region74: #{forward.1} parent=0 // pred_check
    _
  $region75: #{forward.1} parent=0 // pred_check_branch
    %101 = sbr.rel (0) target = $region77
  $region76: #{forward.1} parent=0 // pred_region
    _
  $region77: #{forward.1} parent=0 // pred_fallthru
    _
  // Predicated region
  $region78: #{forward.1} parent=0 // pred_check
    _
  $region79: #{forward.1} parent=0 // pred_check_branch
    %103 = sbr.rel (0) target = $region81
  $region80: #{forward.1} parent=0 // pred_region
    _
  $region81: #{forward.1} parent=0 // pred_fallthru
    _
  // Predicated region
  $region82: #{forward.1} parent=0 // pred_check
    _
  $region83: #{forward.1} parent=0 // pred_check_branch
    %105 = sbr.rel (0) target = $region85
  $region84: #{forward.1} parent=0 // pred_region
    _
  $region85: #{forward.1} parent=0 // pred_fallthru
    _
  // Predicated region
  $region86: #{forward.1} parent=0 // pred_check
    _
  $region87: #{forward.1} parent=0 // pred_check_branch
    %107 = sbr.rel (0) target = $region89
  $region88: #{forward.1} parent=0 // pred_region
    _
  $region89: #{forward.1} parent=0 // pred_fallthru
    _
  // Predicated region
  $region90: #{forward.1} parent=0 // pred_check
    _
  $region91: #{forward.1} parent=0 // pred_check_branch
    %109 = sbr.rel (0) target = $region93
  $region92: #{forward.1} parent=0 // pred_region
    _
  $region93: #{forward.1} parent=0 // pred_fallthru
    _
  // Predicated region
  $region94: #{forward.1} parent=0 // pred_check
    _
  $region95: #{forward.1} parent=0 // pred_check_branch
    %111 = sbr.rel (0) target = $region97
  $region96: #{forward.1} parent=0 // pred_region
    _
  $region97: #{forward.1} parent=0 // pred_fallthru
    _
  // Predicated region
  $region98: #{forward.1} parent=0 // pred_check
    _
  $region99: #{forward.1} parent=0 // pred_check_branch
    %113 = sbr.rel (0) target = $region101
  $region100: #{forward.1} parent=0 // pred_region
    _
  $region101: #{forward.1} parent=0 // pred_fallthru
    _
  // Predicated region
  $region102: #{forward.1} parent=0 // pred_check
    _
  $region103: #{forward.1} parent=0 // pred_check_branch
    %115 = sbr.rel (0) target = $region105
  $region104: #{forward.1} parent=0 // pred_region
    _
  $region105: #{forward.1} parent=0 // pred_fallthru
    _
  // Predicated region
  $region106: #{forward.1} parent=0 // pred_check
    _
  $region107: #{forward.1} parent=0 // pred_check_branch
    %117 = sbr.rel (0) target = $region109
  $region108: #{forward.1} parent=0 // pred_region
    _
  $region109: #{forward.1} parent=0 // pred_fallthru
    _
  // Predicated region
  $region110: #{forward.1} parent=0 // pred_check
    _
  $region111: #{forward.1} parent=0 // pred_check_branch
    %119 = sbr.rel (0) target = $region113
  $region112: #{forward.1} parent=0 // pred_region
    _
  $region113: #{forward.1} parent=0 // pred_fallthru
    _
  // Predicated region
  $region114: #{forward.1} parent=0 // pred_check
    _
  $region115: #{forward.1} parent=0 // pred_check_branch
    %121 = sbr.rel (0) target = $region117
  $region116: #{forward.1} parent=0 // pred_region
    _
  $region117: #{forward.1} parent=0 // pred_fallthru
    _
  %v123 = vld [vmem:[%s1] sm:$0xf]
  %v124 = vld [vmem:[%s1 + $0x4] sm:$0xf]
  %v125 = vld [vmem:[%s3] sm:$0xf]
  %v126 = vld [vmem:[%s3 + $0x4] sm:$0xf]
  %v127 = vld [vmem:[%s3 + $0x8] sm:$0xf]
  %v128 = vld [vmem:[%s3 + $0xc] sm:$0xf]
  %v129 = vld [vmem:[%s3 + $0x10] sm:$0xf]
  %v130 = vld [vmem:[%s3 + $0x14] sm:$0xf]
  %v131 = vld [vmem:[%s3 + $0x18] sm:$0xf]
  %v132 = vld [vmem:[%s3 + $0x1c] sm:$0xf]
  %v133 = vld [vmem:[%s3 + $0x20] sm:$0xf]
  %v134 = vld [vmem:[%s3 + $0x24] sm:$0xf]
  %v135 = vld [vmem:[%s3 + $0x28] sm:$0xf]
  %v136 = vld [vmem:[%s3 + $0x2c] sm:$0xf]
  %v137 = vld [vmem:[%s3 + $0x30] sm:$0xf]
  %v138 = vld [vmem:[%s3 + $0x34] sm:$0xf]
  %v139 = vld [vmem:[%s3 + $0x38] sm:$0xf]
  %v140 = vld [vmem:[%s3 + $0x3c] sm:$0xf]
  %v141 = vld [vmem:[%s5] sm:$0x1]
  %v143 = vlaneseq
  %v144 = vshrl.u32 %v143, 7
  %v145 = vsub.s32 0, %v144
  %v146 = vrot.slane %v141, %v145
  %v150 = vunpack.c.l.b16 %v123
  %v151 = vunpack.c.l.b16 %v124
  %v152 = vpack.c.b16 %v151, %v150
  %v170 = vunpack.c.l.b16 %v125
  %v171 = vunpack.c.l.b16 %v126
  %v172 = vunpack.c.l.b16 %v127
  %v173 = vunpack.c.l.b16 %v128
  %v174 = vunpack.c.l.b16 %v129
  %v175 = vunpack.c.l.b16 %v130
  %v176 = vunpack.c.l.b16 %v131
  %v177 = vunpack.c.l.b16 %v132
  %v178 = vunpack.c.l.b16 %v133
  %v179 = vunpack.c.l.b16 %v134
  %v180 = vunpack.c.l.b16 %v135
  %v181 = vunpack.c.l.b16 %v136
  %v182 = vunpack.c.l.b16 %v137
  %v183 = vunpack.c.l.b16 %v138
  %v184 = vunpack.c.l.b16 %v139
  %v185 = vunpack.c.l.b16 %v140
  %v186 = vpack.c.b16 %v171, %v170
  %v187 = vpack.c.b16 %v173, %v172
  %v188 = vpack.c.b16 %v175, %v174
  %v189 = vpack.c.b16 %v177, %v176
  %v190 = vpack.c.b16 %v179, %v178
  %v191 = vpack.c.b16 %v181, %v180
  %v192 = vpack.c.b16 %v183, %v182
  %v193 = vpack.c.b16 %v185, %v184
  %202 = vmatprep.subr.bf16.mxu0 0
  %203 = vmatpush1.bf16.msra.mxu0 %v186
  %204 = vmatprep.subr.bf16.mxu0 0
  %205 = vmatpush1.bf16.msra.mxu0 %v187
  %206 = vmatprep.subr.bf16.mxu0 0
  %207 = vmatpush1.bf16.msra.mxu0 %v188
  %208 = vmatprep.subr.bf16.mxu0 0
  %209 = vmatpush1.bf16.msra.mxu0 %v189
  %210 = vmatprep.subr.bf16.mxu0 0
  %211 = vmatpush1.bf16.msra.mxu0 %v190
  %212 = vmatprep.subr.bf16.mxu0 0
  %213 = vmatpush1.bf16.msra.mxu0 %v191
  %214 = vmatprep.subr.bf16.mxu0 0
  %215 = vmatpush1.bf16.msra.mxu0 %v192
  %216 = vmatprep.subr.bf16.mxu0 0
  %217 = vmatpush1.bf16.msra.mxu0 %v193
  %218 = vmatprep.subr.bf16.mxu0 0
  %219 = vmatpush1.bf16.msra.mxu0 0
  %220 = vmatprep.subr.bf16.mxu0 0
  %221 = vmatpush1.bf16.msra.mxu0 0
  %222 = vmatprep.subr.bf16.mxu0 0
  %223 = vmatpush1.bf16.msra.mxu0 0
  %224 = vmatprep.subr.bf16.mxu0 0
  %225 = vmatpush1.bf16.msra.mxu0 0
  %226 = vmatprep.subr.bf16.mxu0 0
  %227 = vmatpush1.bf16.msra.mxu0 0
  %228 = vmatprep.subr.bf16.mxu0 0
  %229 = vmatpush1.bf16.msra.mxu0 0
  %230 = vmatprep.subr.bf16.mxu0 0
  %231 = vmatpush1.bf16.msra.mxu0 0
  %232 = vmatprep.subr.bf16.mxu0 0
  %233 = vmatpush1.bf16.msra.mxu0 0
  %234 = vmatprep.mubr.bf16.mxu0 0
  %235 = vmatmul.mubr.bf16.gmra.mrb[0].mxu0 %v152
  %v236 = vpop.f32.mrb[0].mxu0
  %v237 = vadd.f32 %v146, %v236
  %v238 = vpop.f32.mrb[0].mxu0
  %v239 = vpop.f32.mrb[0].mxu0
  %v240 = vadd.f32 %v146, %v239
  %v241 = vpop.f32.mrb[0].mxu0
  %242 = vdwg.mxu0
  %v243 = vmax.f32 %v237, 0.0
  %v244 = vmax.f32 %v240, 0.0
  %v245 = vpack.c.bf16 %v244, %v243
  %v246 = vld [vmem:[%s7] sm:$0xf]
  %v247 = vld [vmem:[%s7 + $0x4] sm:$0xf]
  %v248 = vld [vmem:[%s7 + $0x8] sm:$0xf]
  %v249 = vld [vmem:[%s7 + $0xc] sm:$0xf]
  %v250 = vld [vmem:[%s7 + $0x10] sm:$0xf]
  %v251 = vld [vmem:[%s7 + $0x14] sm:$0xf]
  %v252 = vld [vmem:[%s7 + $0x18] sm:$0xf]
  %v253 = vld [vmem:[%s7 + $0x1c] sm:$0xf]
  %v254 = vld [vmem:[%s7 + $0x20] sm:$0xf]
  %v255 = vld [vmem:[%s7 + $0x24] sm:$0xf]
  %v256 = vld [vmem:[%s7 + $0x28] sm:$0xf]
  %v257 = vld [vmem:[%s7 + $0x2c] sm:$0xf]
  %v258 = vld [vmem:[%s7 + $0x30] sm:$0xf]
  %v259 = vld [vmem:[%s7 + $0x34] sm:$0xf]
  %v260 = vld [vmem:[%s7 + $0x38] sm:$0xf]
  %v261 = vld [vmem:[%s7 + $0x3c] sm:$0xf]
  %v262 = vld [vmem:[%s9] sm:$0x1]
  %v264 = vlaneseq
  %v265 = vshrl.u32 %v264, 7
  %v266 = vsub.s32 0, %v265
  %v267 = vrot.slane %v262, %v266
  %v285 = vunpack.c.l.b16 %v246
  %v286 = vunpack.c.l.b16 %v247
  %v287 = vunpack.c.l.b16 %v248
  %v288 = vunpack.c.l.b16 %v249
  %v289 = vunpack.c.l.b16 %v250
  %v290 = vunpack.c.l.b16 %v251
  %v291 = vunpack.c.l.b16 %v252
  %v292 = vunpack.c.l.b16 %v253
  %v293 = vunpack.c.l.b16 %v254
  %v294 = vunpack.c.l.b16 %v255
  %v295 = vunpack.c.l.b16 %v256
  %v296 = vunpack.c.l.b16 %v257
  %v297 = vunpack.c.l.b16 %v258
  %v298 = vunpack.c.l.b16 %v259
  %v299 = vunpack.c.l.b16 %v260
  %v300 = vunpack.c.l.b16 %v261
  %v301 = vpack.c.b16 %v286, %v285
  %v302 = vpack.c.b16 %v288, %v287
  %v303 = vpack.c.b16 %v290, %v289
  %v304 = vpack.c.b16 %v292, %v291
  %v305 = vpack.c.b16 %v294, %v293
  %v306 = vpack.c.b16 %v296, %v295
  %v307 = vpack.c.b16 %v298, %v297
  %v308 = vpack.c.b16 %v300, %v299
  %317 = vmatprep.subr.bf16.mxu0 0
  %318 = vmatpush1.bf16.msra.mxu0 %v301
  %319 = vmatprep.subr.bf16.mxu0 0
  %320 = vmatpush1.bf16.msra.mxu0 %v302
  %321 = vmatprep.subr.bf16.mxu0 0
  %322 = vmatpush1.bf16.msra.mxu0 %v303
  %323 = vmatprep.subr.bf16.mxu0 0
  %324 = vmatpush1.bf16.msra.mxu0 %v304
  %325 = vmatprep.subr.bf16.mxu0 0
  %326 = vmatpush1.bf16.msra.mxu0 %v305
  %327 = vmatprep.subr.bf16.mxu0 0
  %328 = vmatpush1.bf16.msra.mxu0 %v306
  %329 = vmatprep.subr.bf16.mxu0 0
  %330 = vmatpush1.bf16.msra.mxu0 %v307
  %331 = vmatprep.subr.bf16.mxu0 0
  %332 = vmatpush1.bf16.msra.mxu0 %v308
  %333 = vmatprep.subr.bf16.mxu0 0
  %334 = vmatpush1.bf16.msra.mxu0 0
  %335 = vmatprep.subr.bf16.mxu0 0
  %336 = vmatpush1.bf16.msra.mxu0 0
  %337 = vmatprep.subr.bf16.mxu0 0
  %338 = vmatpush1.bf16.msra.mxu0 0
  %339 = vmatprep.subr.bf16.mxu0 0
  %340 = vmatpush1.bf16.msra.mxu0 0
  %341 = vmatprep.subr.bf16.mxu0 0
  %342 = vmatpush1.bf16.msra.mxu0 0
  %343 = vmatprep.subr.bf16.mxu0 0
  %344 = vmatpush1.bf16.msra.mxu0 0
  %345 = vmatprep.subr.bf16.mxu0 0
  %346 = vmatpush1.bf16.msra.mxu0 0
  %347 = vmatprep.subr.bf16.mxu0 0
  %348 = vmatpush1.bf16.msra.mxu0 0
  %349 = vmatprep.mubr.bf16.mxu0 0
  %350 = vmatmul.mubr.bf16.gmra.mrb[0].mxu0 %v245
  %v351 = vpop.f32.mrb[0].mxu0
  %v352 = vadd.f32 %v267, %v351
  %v353 = vpop.f32.mrb[0].mxu0
  %v354 = vpop.f32.mrb[0].mxu0
  %v355 = vadd.f32 %v267, %v354
  %v356 = vpop.f32.mrb[0].mxu0
  %357 = vdwg.mxu0
  %v358 = vmax.f32 %v352, 0.0
  %v359 = vmax.f32 %v355, 0.0
  %v360 = vpack.c.bf16 %v359, %v358
  %v361 = vld [vmem:[%s11] sm:$0xf]
  %v362 = vld [vmem:[%s11 + $0x4] sm:$0xf]
  %v363 = vld [vmem:[%s11 + $0x8] sm:$0xf]
  %v364 = vld [vmem:[%s11 + $0xc] sm:$0xf]
  %v365 = vld [vmem:[%s11 + $0x10] sm:$0xf]
  %v366 = vld [vmem:[%s11 + $0x14] sm:$0xf]
  %v367 = vld [vmem:[%s11 + $0x18] sm:$0xf]
  %v368 = vld [vmem:[%s11 + $0x1c] sm:$0xf]
  %v369 = vld [vmem:[%s11 + $0x20] sm:$0xf]
  %v370 = vld [vmem:[%s11 + $0x24] sm:$0xf]
  %v371 = vld [vmem:[%s11 + $0x28] sm:$0xf]
  %v372 = vld [vmem:[%s11 + $0x2c] sm:$0xf]
  %v373 = vld [vmem:[%s11 + $0x30] sm:$0xf]
  %v374 = vld [vmem:[%s11 + $0x34] sm:$0xf]
  %v375 = vld [vmem:[%s11 + $0x38] sm:$0xf]
  %v376 = vld [vmem:[%s11 + $0x3c] sm:$0xf]
  %v377 = vld [vmem:[%s13] sm:$0x1]
  %v379 = vlaneseq
  %v380 = vshrl.u32 %v379, 7
  %v381 = vsub.s32 0, %v380
  %v382 = vrot.slane %v377, %v381
  %v400 = vunpack.c.l.b16 %v361
  %v401 = vunpack.c.l.b16 %v362
  %v402 = vunpack.c.l.b16 %v363
  %v403 = vunpack.c.l.b16 %v364
  %v404 = vunpack.c.l.b16 %v365
  %v405 = vunpack.c.l.b16 %v366
  %v406 = vunpack.c.l.b16 %v367
  %v407 = vunpack.c.l.b16 %v368
  %v408 = vunpack.c.l.b16 %v369
  %v409 = vunpack.c.l.b16 %v370
  %v410 = vunpack.c.l.b16 %v371
  %v411 = vunpack.c.l.b16 %v372
  %v412 = vunpack.c.l.b16 %v373
  %v413 = vunpack.c.l.b16 %v374
  %v414 = vunpack.c.l.b16 %v375
  %v415 = vunpack.c.l.b16 %v376
  %v416 = vpack.c.b16 %v401, %v400
  %v417 = vpack.c.b16 %v403, %v402
  %v418 = vpack.c.b16 %v405, %v404
  %v419 = vpack.c.b16 %v407, %v406
  %v420 = vpack.c.b16 %v409, %v408
  %v421 = vpack.c.b16 %v411, %v410
  %v422 = vpack.c.b16 %v413, %v412
  %v423 = vpack.c.b16 %v415, %v414
  %432 = vmatprep.subr.bf16.mxu0 0
  %433 = vmatpush1.bf16.msra.mxu0 %v416
  %434 = vmatprep.subr.bf16.mxu0 0
  %435 = vmatpush1.bf16.msra.mxu0 %v417
  %436 = vmatprep.subr.bf16.mxu0 0
  %437 = vmatpush1.bf16.msra.mxu0 %v418
  %438 = vmatprep.subr.bf16.mxu0 0
  %439 = vmatpush1.bf16.msra.mxu0 %v419
  %440 = vmatprep.subr.bf16.mxu0 0
  %441 = vmatpush1.bf16.msra.mxu0 %v420
  %442 = vmatprep.subr.bf16.mxu0 0
  %443 = vmatpush1.bf16.msra.mxu0 %v421
  %444 = vmatprep.subr.bf16.mxu0 0
  %445 = vmatpush1.bf16.msra.mxu0 %v422
  %446 = vmatprep.subr.bf16.mxu0 0
  %447 = vmatpush1.bf16.msra.mxu0 %v423
  %448 = vmatprep.subr.bf16.mxu0 0
  %449 = vmatpush1.bf16.msra.mxu0 0
  %450 = vmatprep.subr.bf16.mxu0 0
  %451 = vmatpush1.bf16.msra.mxu0 0
  %452 = vmatprep.subr.bf16.mxu0 0
  %453 = vmatpush1.bf16.msra.mxu0 0
  %454 = vmatprep.subr.bf16.mxu0 0
  %455 = vmatpush1.bf16.msra.mxu0 0
  %456 = vmatprep.subr.bf16.mxu0 0
  %457 = vmatpush1.bf16.msra.mxu0 0
  %458 = vmatprep.subr.bf16.mxu0 0
  %459 = vmatpush1.bf16.msra.mxu0 0
  %460 = vmatprep.subr.bf16.mxu0 0
  %461 = vmatpush1.bf16.msra.mxu0 0
  %462 = vmatprep.subr.bf16.mxu0 0
  %463 = vmatpush1.bf16.msra.mxu0 0
  %464 = vmatprep.mubr.bf16.mxu0 0
  %465 = vmatmul.mubr.bf16.gmra.mrb[0].mxu0 %v360
  %v466 = vpop.f32.mrb[0].mxu0
  %v467 = vadd.f32 %v382, %v466
  %v468 = vpop.f32.mrb[0].mxu0
  %v469 = vpop.f32.mrb[0].mxu0
  %v470 = vadd.f32 %v382, %v469
  %v471 = vpop.f32.mrb[0].mxu0
  %472 = vdwg.mxu0
  %v473 = vmax.f32 %v467, 0.0
  %v474 = vmax.f32 %v470, 0.0
  %v475 = vunpack.c.l.bf16 %v123
  %v476 = vunpack.c.l.bf16 %v124
  %v477 = vadd.f32 %v475, %v473
  %v478 = vadd.f32 %v476, %v474
  %v479 = vpack.c.bf16 %v478, %v477
  %v480 = vld [vmem:[%s15] sm:$0xf]
  %v481 = vld [vmem:[%s15 + $0x4] sm:$0xf]
  %v482 = vld [vmem:[%s15 + $0x8] sm:$0xf]
  %v483 = vld [vmem:[%s15 + $0xc] sm:$0xf]
  %v484 = vld [vmem:[%s15 + $0x10] sm:$0xf]
  %v485 = vld [vmem:[%s15 + $0x14] sm:$0xf]
  %v486 = vld [vmem:[%s15 + $0x18] sm:$0xf]
  %v487 = vld [vmem:[%s15 + $0x1c] sm:$0xf]
  %v488 = vld [vmem:[%s15 + $0x20] sm:$0xf]
  %v489 = vld [vmem:[%s15 + $0x24] sm:$0xf]
  %v490 = vld [vmem:[%s15 + $0x28] sm:$0xf]
  %v491 = vld [vmem:[%s15 + $0x2c] sm:$0xf]
  %v492 = vld [vmem:[%s15 + $0x30] sm:$0xf]
  %v493 = vld [vmem:[%s15 + $0x34] sm:$0xf]
  %v494 = vld [vmem:[%s15 + $0x38] sm:$0xf]
  %v495 = vld [vmem:[%s15 + $0x3c] sm:$0xf]
  %v496 = vld [vmem:[%s17] sm:$0x1]
  %v498 = vlaneseq
  %v499 = vshrl.u32 %v498, 7
  %v500 = vsub.s32 0, %v499
  %v501 = vrot.slane %v496, %v500
  %v519 = vunpack.c.l.b16 %v480
  %v520 = vunpack.c.l.b16 %v481
  %v521 = vunpack.c.l.b16 %v482
  %v522 = vunpack.c.l.b16 %v483
  %v523 = vunpack.c.l.b16 %v484
  %v524 = vunpack.c.l.b16 %v485
  %v525 = vunpack.c.l.b16 %v486
  %v526 = vunpack.c.l.b16 %v487
  %v527 = vunpack.c.l.b16 %v488
  %v528 = vunpack.c.l.b16 %v489
  %v529 = vunpack.c.l.b16 %v490
  %v530 = vunpack.c.l.b16 %v491
  %v531 = vunpack.c.l.b16 %v492
  %v532 = vunpack.c.l.b16 %v493
  %v533 = vunpack.c.l.b16 %v494
  %v534 = vunpack.c.l.b16 %v495
  %v535 = vpack.c.b16 %v520, %v519
  %v536 = vpack.c.b16 %v522, %v521
  %v537 = vpack.c.b16 %v524, %v523
  %v538 = vpack.c.b16 %v526, %v525
  %v539 = vpack.c.b16 %v528, %v527
  %v540 = vpack.c.b16 %v530, %v529
  %v541 = vpack.c.b16 %v532, %v531
  %v542 = vpack.c.b16 %v534, %v533
  %551 = vmatprep.subr.bf16.mxu0 0
  %552 = vmatpush1.bf16.msra.mxu0 %v535
  %553 = vmatprep.subr.bf16.mxu0 0
  %554 = vmatpush1.bf16.msra.mxu0 %v536
  %555 = vmatprep.subr.bf16.mxu0 0
  %556 = vmatpush1.bf16.msra.mxu0 %v537
  %557 = vmatprep.subr.bf16.mxu0 0
  %558 = vmatpush1.bf16.msra.mxu0 %v538
  %559 = vmatprep.subr.bf16.mxu0 0
  %560 = vmatpush1.bf16.msra.mxu0 %v539
  %561 = vmatprep.subr.bf16.mxu0 0
  %562 = vmatpush1.bf16.msra.mxu0 %v540
  %563 = vmatprep.subr.bf16.mxu0 0
  %564 = vmatpush1.bf16.msra.mxu0 %v541
  %565 = vmatprep.subr.bf16.mxu0 0
  %566 = vmatpush1.bf16.msra.mxu0 %v542
  %567 = vmatprep.subr.bf16.mxu0 0
  %568 = vmatpush1.bf16.msra.mxu0 0
  %569 = vmatprep.subr.bf16.mxu0 0
  %570 = vmatpush1.bf16.msra.mxu0 0
  %571 = vmatprep.subr.bf16.mxu0 0
  %572 = vmatpush1.bf16.msra.mxu0 0
  %573 = vmatprep.subr.bf16.mxu0 0
  %574 = vmatpush1.bf16.msra.mxu0 0
  %575 = vmatprep.subr.bf16.mxu0 0
  %576 = vmatpush1.bf16.msra.mxu0 0
  %577 = vmatprep.subr.bf16.mxu0 0
  %578 = vmatpush1.bf16.msra.mxu0 0
  %579 = vmatprep.subr.bf16.mxu0 0
  %580 = vmatpush1.bf16.msra.mxu0 0
  %581 = vmatprep.subr.bf16.mxu0 0
  %582 = vmatpush1.bf16.msra.mxu0 0
  %583 = vmatprep.mubr.bf16.mxu0 0
  %584 = vmatmul.mubr.bf16.gmra.mrb[0].mxu0 %v479
  %v585 = vpop.f32.mrb[0].mxu0
  %v586 = vadd.f32 %v501, %v585
  %v587 = vpop.f32.mrb[0].mxu0
  %v588 = vpop.f32.mrb[0].mxu0
  %v589 = vadd.f32 %v501, %v588
  %v590 = vpop.f32.mrb[0].mxu0
  %591 = vdwg.mxu0
  %v592 = vmax.f32 %v586, 0.0
  %v593 = vmax.f32 %v589, 0.0
  %v594 = vpack.c.bf16 %v593, %v592
  %v595 = vld [vmem:[%s19] sm:$0xf]
  %v596 = vld [vmem:[%s19 + $0x4] sm:$0xf]
  %v597 = vld [vmem:[%s19 + $0x8] sm:$0xf]
  %v598 = vld [vmem:[%s19 + $0xc] sm:$0xf]
  %v599 = vld [vmem:[%s19 + $0x10] sm:$0xf]
  %v600 = vld [vmem:[%s19 + $0x14] sm:$0xf]
  %v601 = vld [vmem:[%s19 + $0x18] sm:$0xf]
  %v602 = vld [vmem:[%s19 + $0x1c] sm:$0xf]
  %v603 = vld [vmem:[%s19 + $0x20] sm:$0xf]
  %v604 = vld [vmem:[%s19 + $0x24] sm:$0xf]
  %v605 = vld [vmem:[%s19 + $0x28] sm:$0xf]
  %v606 = vld [vmem:[%s19 + $0x2c] sm:$0xf]
  %v607 = vld [vmem:[%s19 + $0x30] sm:$0xf]
  %v608 = vld [vmem:[%s19 + $0x34] sm:$0xf]
  %v609 = vld [vmem:[%s19 + $0x38] sm:$0xf]
  %v610 = vld [vmem:[%s19 + $0x3c] sm:$0xf]
  %v611 = vld [vmem:[%s21] sm:$0x1]
  %v613 = vlaneseq
  %v614 = vshrl.u32 %v613, 7
  %v615 = vsub.s32 0, %v614
  %v616 = vrot.slane %v611, %v615
  %v634 = vunpack.c.l.b16 %v595
  %v635 = vunpack.c.l.b16 %v596
  %v636 = vunpack.c.l.b16 %v597
  %v637 = vunpack.c.l.b16 %v598
  %v638 = vunpack.c.l.b16 %v599
  %v639 = vunpack.c.l.b16 %v600
  %v640 = vunpack.c.l.b16 %v601
  %v641 = vunpack.c.l.b16 %v602
  %v642 = vunpack.c.l.b16 %v603
  %v643 = vunpack.c.l.b16 %v604
  %v644 = vunpack.c.l.b16 %v605
  %v645 = vunpack.c.l.b16 %v606
  %v646 = vunpack.c.l.b16 %v607
  %v647 = vunpack.c.l.b16 %v608
  %v648 = vunpack.c.l.b16 %v609
  %v649 = vunpack.c.l.b16 %v610
  %v650 = vpack.c.b16 %v635, %v634
  %v651 = vpack.c.b16 %v637, %v636
  %v652 = vpack.c.b16 %v639, %v638
  %v653 = vpack.c.b16 %v641, %v640
  %v654 = vpack.c.b16 %v643, %v642
  %v655 = vpack.c.b16 %v645, %v644
  %v656 = vpack.c.b16 %v647, %v646
  %v657 = vpack.c.b16 %v649, %v648
  %666 = vmatprep.subr.bf16.mxu0 0
  %667 = vmatpush1.bf16.msra.mxu0 %v650
  %668 = vmatprep.subr.bf16.mxu0 0
  %669 = vmatpush1.bf16.msra.mxu0 %v651
  %670 = vmatprep.subr.bf16.mxu0 0
  %671 = vmatpush1.bf16.msra.mxu0 %v652
  %672 = vmatprep.subr.bf16.mxu0 0
  %673 = vmatpush1.bf16.msra.mxu0 %v653
  %674 = vmatprep.subr.bf16.mxu0 0
  %675 = vmatpush1.bf16.msra.mxu0 %v654
  %676 = vmatprep.subr.bf16.mxu0 0
  %677 = vmatpush1.bf16.msra.mxu0 %v655
  %678 = vmatprep.subr.bf16.mxu0 0
  %679 = vmatpush1.bf16.msra.mxu0 %v656
  %680 = vmatprep.subr.bf16.mxu0 0
  %681 = vmatpush1.bf16.msra.mxu0 %v657
  %682 = vmatprep.subr.bf16.mxu0 0
  %683 = vmatpush1.bf16.msra.mxu0 0
  %684 = vmatprep.subr.bf16.mxu0 0
  %685 = vmatpush1.bf16.msra.mxu0 0
  %686 = vmatprep.subr.bf16.mxu0 0
  %687 = vmatpush1.bf16.msra.mxu0 0
  %688 = vmatprep.subr.bf16.mxu0 0
  %689 = vmatpush1.bf16.msra.mxu0 0
  %690 = vmatprep.subr.bf16.mxu0 0
  %691 = vmatpush1.bf16.msra.mxu0 0
  %692 = vmatprep.subr.bf16.mxu0 0
  %693 = vmatpush1.bf16.msra.mxu0 0
  %694 = vmatprep.subr.bf16.mxu0 0
  %695 = vmatpush1.bf16.msra.mxu0 0
  %696 = vmatprep.subr.bf16.mxu0 0
  %697 = vmatpush1.bf16.msra.mxu0 0
  %698 = vmatprep.mubr.bf16.mxu0 0
  %699 = vmatmul.mubr.bf16.gmra.mrb[0].mxu0 %v594
  %v700 = vpop.f32.mrb[0].mxu0
  %v701 = vadd.f32 %v616, %v700
  %v702 = vpop.f32.mrb[0].mxu0
  %v703 = vpop.f32.mrb[0].mxu0
  %v704 = vadd.f32 %v616, %v703
  %v705 = vpop.f32.mrb[0].mxu0
  %706 = vdwg.mxu0
  %v707 = vmax.f32 %v701, 0.0
  %v708 = vmax.f32 %v704, 0.0
  %v709 = vpack.c.bf16 %v708, %v707
  %v710 = vld [vmem:[%s23] sm:$0xf]
  %v711 = vld [vmem:[%s23 + $0x4] sm:$0xf]
  %v712 = vld [vmem:[%s23 + $0x8] sm:$0xf]
  %v713 = vld [vmem:[%s23 + $0xc] sm:$0xf]
  %v714 = vld [vmem:[%s23 + $0x10] sm:$0xf]
  %v715 = vld [vmem:[%s23 + $0x14] sm:$0xf]
  %v716 = vld [vmem:[%s23 + $0x18] sm:$0xf]
  %v717 = vld [vmem:[%s23 + $0x1c] sm:$0xf]
  %v718 = vld [vmem:[%s23 + $0x20] sm:$0xf]
  %v719 = vld [vmem:[%s23 + $0x24] sm:$0xf]
  %v720 = vld [vmem:[%s23 + $0x28] sm:$0xf]
  %v721 = vld [vmem:[%s23 + $0x2c] sm:$0xf]
  %v722 = vld [vmem:[%s23 + $0x30] sm:$0xf]
  %v723 = vld [vmem:[%s23 + $0x34] sm:$0xf]
  %v724 = vld [vmem:[%s23 + $0x38] sm:$0xf]
  %v725 = vld [vmem:[%s23 + $0x3c] sm:$0xf]
  %v726 = vld [vmem:[%s25] sm:$0x1]
  %v728 = vlaneseq
  %v729 = vshrl.u32 %v728, 7
  %v730 = vsub.s32 0, %v729
  %v731 = vrot.slane %v726, %v730
  %v749 = vunpack.c.l.b16 %v710
  %v750 = vunpack.c.l.b16 %v711
  %v751 = vunpack.c.l.b16 %v712
  %v752 = vunpack.c.l.b16 %v713
  %v753 = vunpack.c.l.b16 %v714
  %v754 = vunpack.c.l.b16 %v715
  %v755 = vunpack.c.l.b16 %v716
  %v756 = vunpack.c.l.b16 %v717
  %v757 = vunpack.c.l.b16 %v718
  %v758 = vunpack.c.l.b16 %v719
  %v759 = vunpack.c.l.b16 %v720
  %v760 = vunpack.c.l.b16 %v721
  %v761 = vunpack.c.l.b16 %v722
  %v762 = vunpack.c.l.b16 %v723
  %v763 = vunpack.c.l.b16 %v724
  %v764 = vunpack.c.l.b16 %v725
  %v765 = vpack.c.b16 %v750, %v749
  %v766 = vpack.c.b16 %v752, %v751
  %v767 = vpack.c.b16 %v754, %v753
  %v768 = vpack.c.b16 %v756, %v755
  %v769 = vpack.c.b16 %v758, %v757
  %v770 = vpack.c.b16 %v760, %v759
  %v771 = vpack.c.b16 %v762, %v761
  %v772 = vpack.c.b16 %v764, %v763
  %781 = vmatprep.subr.bf16.mxu0 0
  %782 = vmatpush1.bf16.msra.mxu0 %v765
  %783 = vmatprep.subr.bf16.mxu0 0
  %784 = vmatpush1.bf16.msra.mxu0 %v766
  %785 = vmatprep.subr.bf16.mxu0 0
  %786 = vmatpush1.bf16.msra.mxu0 %v767
  %787 = vmatprep.subr.bf16.mxu0 0
  %788 = vmatpush1.bf16.msra.mxu0 %v768
  %789 = vmatprep.subr.bf16.mxu0 0
  %790 = vmatpush1.bf16.msra.mxu0 %v769
  %791 = vmatprep.subr.bf16.mxu0 0
  %792 = vmatpush1.bf16.msra.mxu0 %v770
  %793 = vmatprep.subr.bf16.mxu0 0
  %794 = vmatpush1.bf16.msra.mxu0 %v771
  %795 = vmatprep.subr.bf16.mxu0 0
  %796 = vmatpush1.bf16.msra.mxu0 %v772
  %797 = vmatprep.subr.bf16.mxu0 0
  %798 = vmatpush1.bf16.msra.mxu0 0
  %799 = vmatprep.subr.bf16.mxu0 0
  %800 = vmatpush1.bf16.msra.mxu0 0
  %801 = vmatprep.subr.bf16.mxu0 0
  %802 = vmatpush1.bf16.msra.mxu0 0
  %803 = vmatprep.subr.bf16.mxu0 0
  %804 = vmatpush1.bf16.msra.mxu0 0
  %805 = vmatprep.subr.bf16.mxu0 0
  %806 = vmatpush1.bf16.msra.mxu0 0
  %807 = vmatprep.subr.bf16.mxu0 0
  %808 = vmatpush1.bf16.msra.mxu0 0
  %809 = vmatprep.subr.bf16.mxu0 0
  %810 = vmatpush1.bf16.msra.mxu0 0
  %811 = vmatprep.subr.bf16.mxu0 0
  %812 = vmatpush1.bf16.msra.mxu0 0
  %813 = vmatprep.mubr.bf16.mxu0 0
  %814 = vmatmul.mubr.bf16.gmra.mrb[0].mxu0 %v709
  %v815 = vpop.f32.mrb[0].mxu0
  %v816 = vadd.f32 %v731, %v815
  %v817 = vpop.f32.mrb[0].mxu0
  %v818 = vpop.f32.mrb[0].mxu0
  %v819 = vadd.f32 %v731, %v818
  %v820 = vpop.f32.mrb[0].mxu0
  %821 = vdwg.mxu0
  %v822 = vmax.f32 %v816, 0.0
  %v823 = vmax.f32 %v819, 0.0
  %v824 = vadd.f32 %v477, %v822
  %v825 = vadd.f32 %v478, %v823
  %v826 = vpack.c.bf16 %v825, %v824
  %v827 = vld [vmem:[%s27] sm:$0xf]
  %v828 = vld [vmem:[%s27 + $0x4] sm:$0xf]
  %v829 = vld [vmem:[%s27 + $0x8] sm:$0xf]
  %v830 = vld [vmem:[%s27 + $0xc] sm:$0xf]
  %v831 = vld [vmem:[%s27 + $0x10] sm:$0xf]
  %v832 = vld [vmem:[%s27 + $0x14] sm:$0xf]
  %v833 = vld [vmem:[%s27 + $0x18] sm:$0xf]
  %v834 = vld [vmem:[%s27 + $0x1c] sm:$0xf]
  %v835 = vld [vmem:[%s27 + $0x20] sm:$0xf]
  %v836 = vld [vmem:[%s27 + $0x24] sm:$0xf]
  %v837 = vld [vmem:[%s27 + $0x28] sm:$0xf]
  %v838 = vld [vmem:[%s27 + $0x2c] sm:$0xf]
  %v839 = vld [vmem:[%s27 + $0x30] sm:$0xf]
  %v840 = vld [vmem:[%s27 + $0x34] sm:$0xf]
  %v841 = vld [vmem:[%s27 + $0x38] sm:$0xf]
  %v842 = vld [vmem:[%s27 + $0x3c] sm:$0xf]
  %v843 = vld [vmem:[%s29] sm:$0x1]
  %v845 = vlaneseq
  %v846 = vshrl.u32 %v845, 7
  %v847 = vsub.s32 0, %v846
  %v848 = vrot.slane %v843, %v847
  %v866 = vunpack.c.l.b16 %v827
  %v867 = vunpack.c.l.b16 %v828
  %v868 = vunpack.c.l.b16 %v829
  %v869 = vunpack.c.l.b16 %v830
  %v870 = vunpack.c.l.b16 %v831
  %v871 = vunpack.c.l.b16 %v832
  %v872 = vunpack.c.l.b16 %v833
  %v873 = vunpack.c.l.b16 %v834
  %v874 = vunpack.c.l.b16 %v835
  %v875 = vunpack.c.l.b16 %v836
  %v876 = vunpack.c.l.b16 %v837
  %v877 = vunpack.c.l.b16 %v838
  %v878 = vunpack.c.l.b16 %v839
  %v879 = vunpack.c.l.b16 %v840
  %v880 = vunpack.c.l.b16 %v841
  %v881 = vunpack.c.l.b16 %v842
  %v882 = vpack.c.b16 %v867, %v866
  %v883 = vpack.c.b16 %v869, %v868
  %v884 = vpack.c.b16 %v871, %v870
  %v885 = vpack.c.b16 %v873, %v872
  %v886 = vpack.c.b16 %v875, %v874
  %v887 = vpack.c.b16 %v877, %v876
  %v888 = vpack.c.b16 %v879, %v878
  %v889 = vpack.c.b16 %v881, %v880
  %898 = vmatprep.subr.bf16.mxu0 0
  %899 = vmatpush1.bf16.msra.mxu0 %v882
  %900 = vmatprep.subr.bf16.mxu0 0
  %901 = vmatpush1.bf16.msra.mxu0 %v883
  %902 = vmatprep.subr.bf16.mxu0 0
  %903 = vmatpush1.bf16.msra.mxu0 %v884
  %904 = vmatprep.subr.bf16.mxu0 0
  %905 = vmatpush1.bf16.msra.mxu0 %v885
  %906 = vmatprep.subr.bf16.mxu0 0
  %907 = vmatpush1.bf16.msra.mxu0 %v886
  %908 = vmatprep.subr.bf16.mxu0 0
  %909 = vmatpush1.bf16.msra.mxu0 %v887
  %910 = vmatprep.subr.bf16.mxu0 0
  %911 = vmatpush1.bf16.msra.mxu0 %v888
  %912 = vmatprep.subr.bf16.mxu0 0
  %913 = vmatpush1.bf16.msra.mxu0 %v889
  %914 = vmatprep.subr.bf16.mxu0 0
  %915 = vmatpush1.bf16.msra.mxu0 0
  %916 = vmatprep.subr.bf16.mxu0 0
  %917 = vmatpush1.bf16.msra.mxu0 0
  %918 = vmatprep.subr.bf16.mxu0 0
  %919 = vmatpush1.bf16.msra.mxu0 0
  %920 = vmatprep.subr.bf16.mxu0 0
  %921 = vmatpush1.bf16.msra.mxu0 0
  %922 = vmatprep.subr.bf16.mxu0 0
  %923 = vmatpush1.bf16.msra.mxu0 0
  %924 = vmatprep.subr.bf16.mxu0 0
  %925 = vmatpush1.bf16.msra.mxu0 0
  %926 = vmatprep.subr.bf16.mxu0 0
  %927 = vmatpush1.bf16.msra.mxu0 0
  %928 = vmatprep.subr.bf16.mxu0 0
  %929 = vmatpush1.bf16.msra.mxu0 0
  %930 = vmatprep.mubr.bf16.mxu0 0
  %931 = vmatmul.mubr.bf16.gmra.mrb[0].mxu0 %v826
  %v932 = vpop.f32.mrb[0].mxu0
  %v933 = vadd.f32 %v848, %v932
  %v934 = vpop.f32.mrb[0].mxu0
  %v935 = vpop.f32.mrb[0].mxu0
  %v936 = vadd.f32 %v848, %v935
  %v937 = vpop.f32.mrb[0].mxu0
  %938 = vdwg.mxu0
  %v939 = vpack.c.bf16 %v936, %v933
  %v940 = vld [vmem:[%s31] sm:$0xf]
  %v941 = vld [vmem:[%s31 + $0x4] sm:$0xf]
  %v942 = vld [vmem:[%s31 + $0x8] sm:$0xf]
  %v943 = vld [vmem:[%s31 + $0xc] sm:$0xf]
  %v944 = vld [vmem:[%s33] sm:$0x1]
  %v946 = vlaneseq
  %v947 = vshrl.u32 %v946, 7
  %v948 = vsub.s32 0, %v947
  %v949 = vrot.slane %v944, %v948
  %v955 = vunpack.c.l.b16 %v940
  %v956 = vunpack.c.l.b16 %v941
  %v957 = vunpack.c.l.b16 %v942
  %v958 = vunpack.c.l.b16 %v943
  %v959 = vpack.c.b16 %v956, %v955
  %v960 = vpack.c.b16 %v958, %v957
  %vm963 = vcmask 261120
  %v965 = vsel %vm963, %v939, 0
  %967 = vmatprep.subr.bf16.mxu0 0
  %968 = vmatpush1.bf16.msra.mxu0 %v959
  %969 = vmatprep.subr.bf16.mxu0 0
  %970 = vmatpush1.bf16.msra.mxu0 %v960
  %971 = vmatprep.subr.bf16.mxu0 0
  %972 = vmatpush1.bf16.msra.mxu0 0
  %973 = vmatprep.subr.bf16.mxu0 0
  %974 = vmatpush1.bf16.msra.mxu0 0
  %975 = vmatprep.subr.bf16.mxu0 0
  %976 = vmatpush1.bf16.msra.mxu0 0
  %977 = vmatprep.subr.bf16.mxu0 0
  %978 = vmatpush1.bf16.msra.mxu0 0
  %979 = vmatprep.subr.bf16.mxu0 0
  %980 = vmatpush1.bf16.msra.mxu0 0
  %981 = vmatprep.subr.bf16.mxu0 0
  %982 = vmatpush1.bf16.msra.mxu0 0
  %983 = vmatprep.subr.bf16.mxu0 0
  %984 = vmatpush1.bf16.msra.mxu0 0
  %985 = vmatprep.subr.bf16.mxu0 0
  %986 = vmatpush1.bf16.msra.mxu0 0
  %987 = vmatprep.subr.bf16.mxu0 0
  %988 = vmatpush1.bf16.msra.mxu0 0
  %989 = vmatprep.subr.bf16.mxu0 0
  %990 = vmatpush1.bf16.msra.mxu0 0
  %991 = vmatprep.subr.bf16.mxu0 0
  %992 = vmatpush1.bf16.msra.mxu0 0
  %993 = vmatprep.subr.bf16.mxu0 0
  %994 = vmatpush1.bf16.msra.mxu0 0
  %995 = vmatprep.subr.bf16.mxu0 0
  %996 = vmatpush1.bf16.msra.mxu0 0
  %997 = vmatprep.subr.bf16.mxu0 0
  %998 = vmatpush1.bf16.msra.mxu0 0
  %999 = vmatprep.mubr.bf16.mxu0 0
  %1000 = vmatmul.mubr.bf16.gmra.mrb[0].mxu0 %v965
  %v1001 = vpop.f32.mrb[0].mxu0
  %v1002 = vadd.f32 %v949, %v1001
  %v1003 = vpop.f32.mrb[0].mxu0
  %v1004 = vpop.f32.mrb[0].mxu0
  %v1005 = vadd.f32 %v949, %v1004
  %v1006 = vpop.f32.mrb[0].mxu0
  %1007 = vdwg.mxu0
  %v1008 = vpack.c.bf16 %v1005, %v1002
  %v1009 = vld [vmem:[%s35] sm:$0xf]
  %v1010 = vld [vmem:[%s35 + $0x4] sm:$0xf]
  %v1011 = vld [vmem:[%s35 + $0x8] sm:$0xf]
  %v1012 = vld [vmem:[%s35 + $0xc] sm:$0xf]
  %v1013 = vld [vmem:[%s35 + $0x10] sm:$0xf]
  %v1014 = vld [vmem:[%s35 + $0x14] sm:$0xf]
  %v1015 = vld [vmem:[%s35 + $0x18] sm:$0xf]
  %v1016 = vld [vmem:[%s35 + $0x1c] sm:$0xf]
  %v1017 = vld [vmem:[%s35 + $0x20] sm:$0xf]
  %v1018 = vld [vmem:[%s35 + $0x24] sm:$0xf]
  %v1019 = vld [vmem:[%s35 + $0x28] sm:$0xf]
  %v1020 = vld [vmem:[%s35 + $0x2c] sm:$0xf]
  %v1021 = vld [vmem:[%s35 + $0x30] sm:$0xf]
  %v1022 = vld [vmem:[%s35 + $0x34] sm:$0xf]
  %v1023 = vld [vmem:[%s35 + $0x38] sm:$0xf]
  %v1024 = vld [vmem:[%s35 + $0x3c] sm:$0xf]
  %v1025 = vld [vmem:[%s37] sm:$0x1]
  %v1027 = vlaneseq
  %v1028 = vshrl.u32 %v1027, 7
  %v1029 = vsub.s32 0, %v1028
  %v1030 = vrot.slane %v1025, %v1029
  %v1048 = vunpack.c.l.b16 %v1009
  %v1049 = vunpack.c.l.b16 %v1010
  %v1050 = vunpack.c.l.b16 %v1011
  %v1051 = vunpack.c.l.b16 %v1012
  %v1052 = vunpack.c.l.b16 %v1013
  %v1053 = vunpack.c.l.b16 %v1014
  %v1054 = vunpack.c.l.b16 %v1015
  %v1055 = vunpack.c.l.b16 %v1016
  %v1056 = vunpack.c.l.b16 %v1017
  %v1057 = vunpack.c.l.b16 %v1018
  %v1058 = vunpack.c.l.b16 %v1019
  %v1059 = vunpack.c.l.b16 %v1020
  %v1060 = vunpack.c.l.b16 %v1021
  %v1061 = vunpack.c.l.b16 %v1022
  %v1062 = vunpack.c.l.b16 %v1023
  %v1063 = vunpack.c.l.b16 %v1024
  %v1064 = vpack.c.b16 %v1049, %v1048
  %v1065 = vpack.c.b16 %v1051, %v1050
  %v1066 = vpack.c.b16 %v1053, %v1052
  %v1067 = vpack.c.b16 %v1055, %v1054
  %v1068 = vpack.c.b16 %v1057, %v1056
  %v1069 = vpack.c.b16 %v1059, %v1058
  %v1070 = vpack.c.b16 %v1061, %v1060
  %v1071 = vpack.c.b16 %v1063, %v1062
  %1080 = vmatprep.subr.bf16.mxu0 0
  %1081 = vmatpush1.bf16.msra.mxu0 %v1064
  %1082 = vmatprep.subr.bf16.mxu0 0
  %1083 = vmatpush1.bf16.msra.mxu0 %v1065
  %1084 = vmatprep.subr.bf16.mxu0 0
  %1085 = vmatpush1.bf16.msra.mxu0 %v1066
  %1086 = vmatprep.subr.bf16.mxu0 0
  %1087 = vmatpush1.bf16.msra.mxu0 %v1067
  %1088 = vmatprep.subr.bf16.mxu0 0
  %1089 = vmatpush1.bf16.msra.mxu0 %v1068
  %1090 = vmatprep.subr.bf16.mxu0 0
  %1091 = vmatpush1.bf16.msra.mxu0 %v1069
  %1092 = vmatprep.subr.bf16.mxu0 0
  %1093 = vmatpush1.bf16.msra.mxu0 %v1070
  %1094 = vmatprep.subr.bf16.mxu0 0
  %1095 = vmatpush1.bf16.msra.mxu0 %v1071
  %1096 = vmatprep.subr.bf16.mxu0 0
  %1097 = vmatpush1.bf16.msra.mxu0 0
  %1098 = vmatprep.subr.bf16.mxu0 0
  %1099 = vmatpush1.bf16.msra.mxu0 0
  %1100 = vmatprep.subr.bf16.mxu0 0
  %1101 = vmatpush1.bf16.msra.mxu0 0
  %1102 = vmatprep.subr.bf16.mxu0 0
  %1103 = vmatpush1.bf16.msra.mxu0 0
  %1104 = vmatprep.subr.bf16.mxu0 0
  %1105 = vmatpush1.bf16.msra.mxu0 0
  %1106 = vmatprep.subr.bf16.mxu0 0
  %1107 = vmatpush1.bf16.msra.mxu0 0
  %1108 = vmatprep.subr.bf16.mxu0 0
  %1109 = vmatpush1.bf16.msra.mxu0 0
  %1110 = vmatprep.subr.bf16.mxu0 0
  %1111 = vmatpush1.bf16.msra.mxu0 0
  %1112 = vmatprep.mubr.bf16.mxu0 0
  %1113 = vmatmul.mubr.bf16.gmra.mrb[0].mxu0 %v1008
  %v1114 = vpop.f32.mrb[0].mxu0
  %v1115 = vadd.f32 %v1030, %v1114
  %v1116 = vpop.f32.mrb[0].mxu0
  %v1117 = vpop.f32.mrb[0].mxu0
  %v1118 = vadd.f32 %v1030, %v1117
  %v1119 = vpop.f32.mrb[0].mxu0
  %1120 = vdwg.mxu0
  %v1121 = vmax.f32 %v1115, 0.0
  %v1122 = vmax.f32 %v1118, 0.0
  %v1123 = vpack.c.bf16 %v1122, %v1121
  %v1124 = vld [vmem:[%s39] sm:$0xf]
  %v1125 = vld [vmem:[%s39 + $0x4] sm:$0xf]
  %v1126 = vld [vmem:[%s39 + $0x8] sm:$0xf]
  %v1127 = vld [vmem:[%s39 + $0xc] sm:$0xf]
  %v1128 = vld [vmem:[%s39 + $0x10] sm:$0xf]
  %v1129 = vld [vmem:[%s39 + $0x14] sm:$0xf]
  %v1130 = vld [vmem:[%s39 + $0x18] sm:$0xf]
  %v1131 = vld [vmem:[%s39 + $0x1c] sm:$0xf]
  %v1132 = vld [vmem:[%s39 + $0x20] sm:$0xf]
  %v1133 = vld [vmem:[%s39 + $0x24] sm:$0xf]
  %v1134 = vld [vmem:[%s39 + $0x28] sm:$0xf]
  %v1135 = vld [vmem:[%s39 + $0x2c] sm:$0xf]
  %v1136 = vld [vmem:[%s39 + $0x30] sm:$0xf]
  %v1137 = vld [vmem:[%s39 + $0x34] sm:$0xf]
  %v1138 = vld [vmem:[%s39 + $0x38] sm:$0xf]
  %v1139 = vld [vmem:[%s39 + $0x3c] sm:$0xf]
  %v1140 = vld [vmem:[%s41] sm:$0x1]
  %v1142 = vlaneseq
  %v1143 = vshrl.u32 %v1142, 7
  %v1144 = vsub.s32 0, %v1143
  %v1145 = vrot.slane %v1140, %v1144
  %v1163 = vunpack.c.l.b16 %v1124
  %v1164 = vunpack.c.l.b16 %v1125
  %v1165 = vunpack.c.l.b16 %v1126
  %v1166 = vunpack.c.l.b16 %v1127
  %v1167 = vunpack.c.l.b16 %v1128
  %v1168 = vunpack.c.l.b16 %v1129
  %v1169 = vunpack.c.l.b16 %v1130
  %v1170 = vunpack.c.l.b16 %v1131
  %v1171 = vunpack.c.l.b16 %v1132
  %v1172 = vunpack.c.l.b16 %v1133
  %v1173 = vunpack.c.l.b16 %v1134
  %v1174 = vunpack.c.l.b16 %v1135
  %v1175 = vunpack.c.l.b16 %v1136
  %v1176 = vunpack.c.l.b16 %v1137
  %v1177 = vunpack.c.l.b16 %v1138
  %v1178 = vunpack.c.l.b16 %v1139
  %v1179 = vpack.c.b16 %v1164, %v1163
  %v1180 = vpack.c.b16 %v1166, %v1165
  %v1181 = vpack.c.b16 %v1168, %v1167
  %v1182 = vpack.c.b16 %v1170, %v1169
  %v1183 = vpack.c.b16 %v1172, %v1171
  %v1184 = vpack.c.b16 %v1174, %v1173
  %v1185 = vpack.c.b16 %v1176, %v1175
  %v1186 = vpack.c.b16 %v1178, %v1177
  %1195 = vmatprep.subr.bf16.mxu0 0
  %1196 = vmatpush1.bf16.msra.mxu0 %v1179
  %1197 = vmatprep.subr.bf16.mxu0 0
  %1198 = vmatpush1.bf16.msra.mxu0 %v1180
  %1199 = vmatprep.subr.bf16.mxu0 0
  %1200 = vmatpush1.bf16.msra.mxu0 %v1181
  %1201 = vmatprep.subr.bf16.mxu0 0
  %1202 = vmatpush1.bf16.msra.mxu0 %v1182
  %1203 = vmatprep.subr.bf16.mxu0 0
  %1204 = vmatpush1.bf16.msra.mxu0 %v1183
  %1205 = vmatprep.subr.bf16.mxu0 0
  %1206 = vmatpush1.bf16.msra.mxu0 %v1184
  %1207 = vmatprep.subr.bf16.mxu0 0
  %1208 = vmatpush1.bf16.msra.mxu0 %v1185
  %1209 = vmatprep.subr.bf16.mxu0 0
  %1210 = vmatpush1.bf16.msra.mxu0 %v1186
  %1211 = vmatprep.subr.bf16.mxu0 0
  %1212 = vmatpush1.bf16.msra.mxu0 0
  %1213 = vmatprep.subr.bf16.mxu0 0
  %1214 = vmatpush1.bf16.msra.mxu0 0
  %1215 = vmatprep.subr.bf16.mxu0 0
  %1216 = vmatpush1.bf16.msra.mxu0 0
  %1217 = vmatprep.subr.bf16.mxu0 0
  %1218 = vmatpush1.bf16.msra.mxu0 0
  %1219 = vmatprep.subr.bf16.mxu0 0
  %1220 = vmatpush1.bf16.msra.mxu0 0
  %1221 = vmatprep.subr.bf16.mxu0 0
  %1222 = vmatpush1.bf16.msra.mxu0 0
  %1223 = vmatprep.subr.bf16.mxu0 0
  %1224 = vmatpush1.bf16.msra.mxu0 0
  %1225 = vmatprep.subr.bf16.mxu0 0
  %1226 = vmatpush1.bf16.msra.mxu0 0
  %1227 = vmatprep.mubr.bf16.mxu0 0
  %1228 = vmatmul.mubr.bf16.gmra.mrb[0].mxu0 %v1123
  %v1229 = vpop.f32.mrb[0].mxu0
  %v1230 = vadd.f32 %v1145, %v1229
  %v1231 = vpop.f32.mrb[0].mxu0
  %v1232 = vpop.f32.mrb[0].mxu0
  %v1233 = vadd.f32 %v1145, %v1232
  %v1234 = vpop.f32.mrb[0].mxu0
  %1235 = vdwg.mxu0
  %v1236 = vmax.f32 %v1230, 0.0
  %v1237 = vmax.f32 %v1233, 0.0
  %v1238 = vpack.c.bf16 %v1237, %v1236
  %v1239 = vld [vmem:[%s43] sm:$0xf]
  %v1240 = vld [vmem:[%s43 + $0x4] sm:$0xf]
  %v1241 = vld [vmem:[%s43 + $0x8] sm:$0xf]
  %v1242 = vld [vmem:[%s43 + $0xc] sm:$0xf]
  %v1243 = vld [vmem:[%s43 + $0x10] sm:$0xf]
  %v1244 = vld [vmem:[%s43 + $0x14] sm:$0xf]
  %v1245 = vld [vmem:[%s43 + $0x18] sm:$0xf]
  %v1246 = vld [vmem:[%s43 + $0x1c] sm:$0xf]
  %v1247 = vld [vmem:[%s43 + $0x20] sm:$0xf]
  %v1248 = vld [vmem:[%s43 + $0x24] sm:$0xf]
  %v1249 = vld [vmem:[%s43 + $0x28] sm:$0xf]
  %v1250 = vld [vmem:[%s43 + $0x2c] sm:$0xf]
  %v1251 = vld [vmem:[%s43 + $0x30] sm:$0xf]
  %v1252 = vld [vmem:[%s43 + $0x34] sm:$0xf]
  %v1253 = vld [vmem:[%s43 + $0x38] sm:$0xf]
  %v1254 = vld [vmem:[%s43 + $0x3c] sm:$0xf]
  %v1255 = vld [vmem:[%s45] sm:$0x1]
  %v1257 = vlaneseq
  %v1258 = vshrl.u32 %v1257, 7
  %v1259 = vsub.s32 0, %v1258
  %v1260 = vrot.slane %v1255, %v1259
  %v1278 = vunpack.c.l.b16 %v1239
  %v1279 = vunpack.c.l.b16 %v1240
  %v1280 = vunpack.c.l.b16 %v1241
  %v1281 = vunpack.c.l.b16 %v1242
  %v1282 = vunpack.c.l.b16 %v1243
  %v1283 = vunpack.c.l.b16 %v1244
  %v1284 = vunpack.c.l.b16 %v1245
  %v1285 = vunpack.c.l.b16 %v1246
  %v1286 = vunpack.c.l.b16 %v1247
  %v1287 = vunpack.c.l.b16 %v1248
  %v1288 = vunpack.c.l.b16 %v1249
  %v1289 = vunpack.c.l.b16 %v1250
  %v1290 = vunpack.c.l.b16 %v1251
  %v1291 = vunpack.c.l.b16 %v1252
  %v1292 = vunpack.c.l.b16 %v1253
  %v1293 = vunpack.c.l.b16 %v1254
  %v1294 = vpack.c.b16 %v1279, %v1278
  %v1295 = vpack.c.b16 %v1281, %v1280
  %v1296 = vpack.c.b16 %v1283, %v1282
  %v1297 = vpack.c.b16 %v1285, %v1284
  %v1298 = vpack.c.b16 %v1287, %v1286
  %v1299 = vpack.c.b16 %v1289, %v1288
  %v1300 = vpack.c.b16 %v1291, %v1290
  %v1301 = vpack.c.b16 %v1293, %v1292
  %1310 = vmatprep.subr.bf16.mxu0 0
  %1311 = vmatpush1.bf16.msra.mxu0 %v1294
  %1312 = vmatprep.subr.bf16.mxu0 0
  %1313 = vmatpush1.bf16.msra.mxu0 %v1295
  %1314 = vmatprep.subr.bf16.mxu0 0
  %1315 = vmatpush1.bf16.msra.mxu0 %v1296
  %1316 = vmatprep.subr.bf16.mxu0 0
  %1317 = vmatpush1.bf16.msra.mxu0 %v1297
  %1318 = vmatprep.subr.bf16.mxu0 0
  %1319 = vmatpush1.bf16.msra.mxu0 %v1298
  %1320 = vmatprep.subr.bf16.mxu0 0
  %1321 = vmatpush1.bf16.msra.mxu0 %v1299
  %1322 = vmatprep.subr.bf16.mxu0 0
  %1323 = vmatpush1.bf16.msra.mxu0 %v1300
  %1324 = vmatprep.subr.bf16.mxu0 0
  %1325 = vmatpush1.bf16.msra.mxu0 %v1301
  %1326 = vmatprep.subr.bf16.mxu0 0
  %1327 = vmatpush1.bf16.msra.mxu0 0
  %1328 = vmatprep.subr.bf16.mxu0 0
  %1329 = vmatpush1.bf16.msra.mxu0 0
  %1330 = vmatprep.subr.bf16.mxu0 0
  %1331 = vmatpush1.bf16.msra.mxu0 0
  %1332 = vmatprep.subr.bf16.mxu0 0
  %1333 = vmatpush1.bf16.msra.mxu0 0
  %1334 = vmatprep.subr.bf16.mxu0 0
  %1335 = vmatpush1.bf16.msra.mxu0 0
  %1336 = vmatprep.subr.bf16.mxu0 0
  %1337 = vmatpush1.bf16.msra.mxu0 0
  %1338 = vmatprep.subr.bf16.mxu0 0
  %1339 = vmatpush1.bf16.msra.mxu0 0
  %1340 = vmatprep.subr.bf16.mxu0 0
  %1341 = vmatpush1.bf16.msra.mxu0 0
  %1342 = vmatprep.mubr.bf16.mxu0 0
  %1343 = vmatmul.mubr.bf16.gmra.mrb[0].mxu0 %v1238
  %v1344 = vpop.f32.mrb[0].mxu0
  %v1345 = vadd.f32 %v1260, %v1344
  %v1346 = vpop.f32.mrb[0].mxu0
  %v1347 = vpop.f32.mrb[0].mxu0
  %v1348 = vadd.f32 %v1260, %v1347
  %v1349 = vpop.f32.mrb[0].mxu0
  %1350 = vdwg.mxu0
  %v1351 = vmax.f32 %v1345, 0.0
  %v1352 = vmax.f32 %v1348, 0.0
  %v1353 = vadd.f32 %v1002, %v1351
  %v1354 = vadd.f32 %v1005, %v1352
  %v1355 = vpack.c.bf16 %v1354, %v1353
  %v1356 = vld [vmem:[%s47] sm:$0xf]
  %v1357 = vld [vmem:[%s47 + $0x4] sm:$0xf]
  %v1358 = vld [vmem:[%s47 + $0x8] sm:$0xf]
  %v1359 = vld [vmem:[%s47 + $0xc] sm:$0xf]
  %v1360 = vld [vmem:[%s47 + $0x10] sm:$0xf]
  %v1361 = vld [vmem:[%s47 + $0x14] sm:$0xf]
  %v1362 = vld [vmem:[%s47 + $0x18] sm:$0xf]
  %v1363 = vld [vmem:[%s47 + $0x1c] sm:$0xf]
  %v1364 = vld [vmem:[%s47 + $0x20] sm:$0xf]
  %v1365 = vld [vmem:[%s47 + $0x24] sm:$0xf]
  %v1366 = vld [vmem:[%s47 + $0x28] sm:$0xf]
  %v1367 = vld [vmem:[%s47 + $0x2c] sm:$0xf]
  %v1368 = vld [vmem:[%s47 + $0x30] sm:$0xf]
  %v1369 = vld [vmem:[%s47 + $0x34] sm:$0xf]
  %v1370 = vld [vmem:[%s47 + $0x38] sm:$0xf]
  %v1371 = vld [vmem:[%s47 + $0x3c] sm:$0xf]
  %v1372 = vld [vmem:[%s49] sm:$0x1]
  %v1374 = vlaneseq
  %v1375 = vshrl.u32 %v1374, 7
  %v1376 = vsub.s32 0, %v1375
  %v1377 = vrot.slane %v1372, %v1376
  %v1395 = vunpack.c.l.b16 %v1356
  %v1396 = vunpack.c.l.b16 %v1357
  %v1397 = vunpack.c.l.b16 %v1358
  %v1398 = vunpack.c.l.b16 %v1359
  %v1399 = vunpack.c.l.b16 %v1360
  %v1400 = vunpack.c.l.b16 %v1361
  %v1401 = vunpack.c.l.b16 %v1362
  %v1402 = vunpack.c.l.b16 %v1363
  %v1403 = vunpack.c.l.b16 %v1364
  %v1404 = vunpack.c.l.b16 %v1365
  %v1405 = vunpack.c.l.b16 %v1366
  %v1406 = vunpack.c.l.b16 %v1367
  %v1407 = vunpack.c.l.b16 %v1368
  %v1408 = vunpack.c.l.b16 %v1369
  %v1409 = vunpack.c.l.b16 %v1370
  %v1410 = vunpack.c.l.b16 %v1371
  %v1411 = vpack.c.b16 %v1396, %v1395
  %v1412 = vpack.c.b16 %v1398, %v1397
  %v1413 = vpack.c.b16 %v1400, %v1399
  %v1414 = vpack.c.b16 %v1402, %v1401
  %v1415 = vpack.c.b16 %v1404, %v1403
  %v1416 = vpack.c.b16 %v1406, %v1405
  %v1417 = vpack.c.b16 %v1408, %v1407
  %v1418 = vpack.c.b16 %v1410, %v1409
  %1427 = vmatprep.subr.bf16.mxu0 0
  %1428 = vmatpush1.bf16.msra.mxu0 %v1411
  %1429 = vmatprep.subr.bf16.mxu0 0
  %1430 = vmatpush1.bf16.msra.mxu0 %v1412
  %1431 = vmatprep.subr.bf16.mxu0 0
  %1432 = vmatpush1.bf16.msra.mxu0 %v1413
  %1433 = vmatprep.subr.bf16.mxu0 0
  %1434 = vmatpush1.bf16.msra.mxu0 %v1414
  %1435 = vmatprep.subr.bf16.mxu0 0
  %1436 = vmatpush1.bf16.msra.mxu0 %v1415
  %1437 = vmatprep.subr.bf16.mxu0 0
  %1438 = vmatpush1.bf16.msra.mxu0 %v1416
  %1439 = vmatprep.subr.bf16.mxu0 0
  %1440 = vmatpush1.bf16.msra.mxu0 %v1417
  %1441 = vmatprep.subr.bf16.mxu0 0
  %1442 = vmatpush1.bf16.msra.mxu0 %v1418
  %1443 = vmatprep.subr.bf16.mxu0 0
  %1444 = vmatpush1.bf16.msra.mxu0 0
  %1445 = vmatprep.subr.bf16.mxu0 0
  %1446 = vmatpush1.bf16.msra.mxu0 0
  %1447 = vmatprep.subr.bf16.mxu0 0
  %1448 = vmatpush1.bf16.msra.mxu0 0
  %1449 = vmatprep.subr.bf16.mxu0 0
  %1450 = vmatpush1.bf16.msra.mxu0 0
  %1451 = vmatprep.subr.bf16.mxu0 0
  %1452 = vmatpush1.bf16.msra.mxu0 0
  %1453 = vmatprep.subr.bf16.mxu0 0
  %1454 = vmatpush1.bf16.msra.mxu0 0
  %1455 = vmatprep.subr.bf16.mxu0 0
  %1456 = vmatpush1.bf16.msra.mxu0 0
  %1457 = vmatprep.subr.bf16.mxu0 0
  %1458 = vmatpush1.bf16.msra.mxu0 0
  %1459 = vmatprep.mubr.bf16.mxu0 0
  %1460 = vmatmul.mubr.bf16.gmra.mrb[0].mxu0 %v1355
  %v1461 = vpop.f32.mrb[0].mxu0
  %v1462 = vadd.f32 %v1377, %v1461
  %v1463 = vpop.f32.mrb[0].mxu0
  %v1464 = vpop.f32.mrb[0].mxu0
  %v1465 = vadd.f32 %v1377, %v1464
  %v1466 = vpop.f32.mrb[0].mxu0
  %1467 = vdwg.mxu0
  %v1468 = vmax.f32 %v1462, 0.0
  %v1469 = vmax.f32 %v1465, 0.0
  %v1470 = vpack.c.bf16 %v1469, %v1468
  %v1471 = vld [vmem:[%s51] sm:$0xf]
  %v1472 = vld [vmem:[%s51 + $0x4] sm:$0xf]
  %v1473 = vld [vmem:[%s51 + $0x8] sm:$0xf]
  %v1474 = vld [vmem:[%s51 + $0xc] sm:$0xf]
  %v1475 = vld [vmem:[%s51 + $0x10] sm:$0xf]
  %v1476 = vld [vmem:[%s51 + $0x14] sm:$0xf]
  %v1477 = vld [vmem:[%s51 + $0x18] sm:$0xf]
  %v1478 = vld [vmem:[%s51 + $0x1c] sm:$0xf]
  %v1479 = vld [vmem:[%s51 + $0x20] sm:$0xf]
  %v1480 = vld [vmem:[%s51 + $0x24] sm:$0xf]
  %v1481 = vld [vmem:[%s51 + $0x28] sm:$0xf]
  %v1482 = vld [vmem:[%s51 + $0x2c] sm:$0xf]
  %v1483 = vld [vmem:[%s51 + $0x30] sm:$0xf]
  %v1484 = vld [vmem:[%s51 + $0x34] sm:$0xf]
  %v1485 = vld [vmem:[%s51 + $0x38] sm:$0xf]
  %v1486 = vld [vmem:[%s51 + $0x3c] sm:$0xf]
  %v1487 = vld [vmem:[%s53] sm:$0x1]
  %v1489 = vlaneseq
  %v1490 = vshrl.u32 %v1489, 7
  %v1491 = vsub.s32 0, %v1490
  %v1492 = vrot.slane %v1487, %v1491
  %v1510 = vunpack.c.l.b16 %v1471
  %v1511 = vunpack.c.l.b16 %v1472
  %v1512 = vunpack.c.l.b16 %v1473
  %v1513 = vunpack.c.l.b16 %v1474
  %v1514 = vunpack.c.l.b16 %v1475
  %v1515 = vunpack.c.l.b16 %v1476
  %v1516 = vunpack.c.l.b16 %v1477
  %v1517 = vunpack.c.l.b16 %v1478
  %v1518 = vunpack.c.l.b16 %v1479
  %v1519 = vunpack.c.l.b16 %v1480
  %v1520 = vunpack.c.l.b16 %v1481
  %v1521 = vunpack.c.l.b16 %v1482
  %v1522 = vunpack.c.l.b16 %v1483
  %v1523 = vunpack.c.l.b16 %v1484
  %v1524 = vunpack.c.l.b16 %v1485
  %v1525 = vunpack.c.l.b16 %v1486
  %v1526 = vpack.c.b16 %v1511, %v1510
  %v1527 = vpack.c.b16 %v1513, %v1512
  %v1528 = vpack.c.b16 %v1515, %v1514
  %v1529 = vpack.c.b16 %v1517, %v1516
  %v1530 = vpack.c.b16 %v1519, %v1518
  %v1531 = vpack.c.b16 %v1521, %v1520
  %v1532 = vpack.c.b16 %v1523, %v1522
  %v1533 = vpack.c.b16 %v1525, %v1524
  %1542 = vmatprep.subr.bf16.mxu0 0
  %1543 = vmatpush1.bf16.msra.mxu0 %v1526
  %1544 = vmatprep.subr.bf16.mxu0 0
  %1545 = vmatpush1.bf16.msra.mxu0 %v1527
  %1546 = vmatprep.subr.bf16.mxu0 0
  %1547 = vmatpush1.bf16.msra.mxu0 %v1528
  %1548 = vmatprep.subr.bf16.mxu0 0
  %1549 = vmatpush1.bf16.msra.mxu0 %v1529
  %1550 = vmatprep.subr.bf16.mxu0 0
  %1551 = vmatpush1.bf16.msra.mxu0 %v1530
  %1552 = vmatprep.subr.bf16.mxu0 0
  %1553 = vmatpush1.bf16.msra.mxu0 %v1531
  %1554 = vmatprep.subr.bf16.mxu0 0
  %1555 = vmatpush1.bf16.msra.mxu0 %v1532
  %1556 = vmatprep.subr.bf16.mxu0 0
  %1557 = vmatpush1.bf16.msra.mxu0 %v1533
  %1558 = vmatprep.subr.bf16.mxu0 0
  %1559 = vmatpush1.bf16.msra.mxu0 0
  %1560 = vmatprep.subr.bf16.mxu0 0
  %1561 = vmatpush1.bf16.msra.mxu0 0
  %1562 = vmatprep.subr.bf16.mxu0 0
  %1563 = vmatpush1.bf16.msra.mxu0 0
  %1564 = vmatprep.subr.bf16.mxu0 0
  %1565 = vmatpush1.bf16.msra.mxu0 0
  %1566 = vmatprep.subr.bf16.mxu0 0
  %1567 = vmatpush1.bf16.msra.mxu0 0
  %1568 = vmatprep.subr.bf16.mxu0 0
  %1569 = vmatpush1.bf16.msra.mxu0 0
  %1570 = vmatprep.subr.bf16.mxu0 0
  %1571 = vmatpush1.bf16.msra.mxu0 0
  %1572 = vmatprep.subr.bf16.mxu0 0
  %1573 = vmatpush1.bf16.msra.mxu0 0
  %1574 = vmatprep.mubr.bf16.mxu0 0
  %1575 = vmatmul.mubr.bf16.gmra.mrb[0].mxu0 %v1470
  %v1576 = vpop.f32.mrb[0].mxu0
  %v1577 = vadd.f32 %v1492, %v1576
  %v1578 = vpop.f32.mrb[0].mxu0
  %v1579 = vpop.f32.mrb[0].mxu0
  %v1580 = vadd.f32 %v1492, %v1579
  %v1581 = vpop.f32.mrb[0].mxu0
  %1582 = vdwg.mxu0
  %v1583 = vmax.f32 %v1577, 0.0
  %v1584 = vmax.f32 %v1580, 0.0
  %v1585 = vpack.c.bf16 %v1584, %v1583
  %v1586 = vld [vmem:[%s55] sm:$0xf]
  %v1587 = vld [vmem:[%s55 + $0x4] sm:$0xf]
  %v1588 = vld [vmem:[%s55 + $0x8] sm:$0xf]
  %v1589 = vld [vmem:[%s55 + $0xc] sm:$0xf]
  %v1590 = vld [vmem:[%s55 + $0x10] sm:$0xf]
  %v1591 = vld [vmem:[%s55 + $0x14] sm:$0xf]
  %v1592 = vld [vmem:[%s55 + $0x18] sm:$0xf]
  %v1593 = vld [vmem:[%s55 + $0x1c] sm:$0xf]
  %v1594 = vld [vmem:[%s55 + $0x20] sm:$0xf]
  %v1595 = vld [vmem:[%s55 + $0x24] sm:$0xf]
  %v1596 = vld [vmem:[%s55 + $0x28] sm:$0xf]
  %v1597 = vld [vmem:[%s55 + $0x2c] sm:$0xf]
  %v1598 = vld [vmem:[%s55 + $0x30] sm:$0xf]
  %v1599 = vld [vmem:[%s55 + $0x34] sm:$0xf]
  %v1600 = vld [vmem:[%s55 + $0x38] sm:$0xf]
  %v1601 = vld [vmem:[%s55 + $0x3c] sm:$0xf]
  %v1602 = vld [vmem:[%s57] sm:$0x1]
  %v1604 = vlaneseq
  %v1605 = vshrl.u32 %v1604, 7
  %v1606 = vsub.s32 0, %v1605
  %v1607 = vrot.slane %v1602, %v1606
  %v1625 = vunpack.c.l.b16 %v1586
  %v1626 = vunpack.c.l.b16 %v1587
  %v1627 = vunpack.c.l.b16 %v1588
  %v1628 = vunpack.c.l.b16 %v1589
  %v1629 = vunpack.c.l.b16 %v1590
  %v1630 = vunpack.c.l.b16 %v1591
  %v1631 = vunpack.c.l.b16 %v1592
  %v1632 = vunpack.c.l.b16 %v1593
  %v1633 = vunpack.c.l.b16 %v1594
  %v1634 = vunpack.c.l.b16 %v1595
  %v1635 = vunpack.c.l.b16 %v1596
  %v1636 = vunpack.c.l.b16 %v1597
  %v1637 = vunpack.c.l.b16 %v1598
  %v1638 = vunpack.c.l.b16 %v1599
  %v1639 = vunpack.c.l.b16 %v1600
  %v1640 = vunpack.c.l.b16 %v1601
  %v1641 = vpack.c.b16 %v1626, %v1625
  %v1642 = vpack.c.b16 %v1628, %v1627
  %v1643 = vpack.c.b16 %v1630, %v1629
  %v1644 = vpack.c.b16 %v1632, %v1631
  %v1645 = vpack.c.b16 %v1634, %v1633
  %v1646 = vpack.c.b16 %v1636, %v1635
  %v1647 = vpack.c.b16 %v1638, %v1637
  %v1648 = vpack.c.b16 %v1640, %v1639
  %1657 = vmatprep.subr.bf16.mxu0 0
  %1658 = vmatpush1.bf16.msra.mxu0 %v1641
  %1659 = vmatprep.subr.bf16.mxu0 0
  %1660 = vmatpush1.bf16.msra.mxu0 %v1642
  %1661 = vmatprep.subr.bf16.mxu0 0
  %1662 = vmatpush1.bf16.msra.mxu0 %v1643
  %1663 = vmatprep.subr.bf16.mxu0 0
  %1664 = vmatpush1.bf16.msra.mxu0 %v1644
  %1665 = vmatprep.subr.bf16.mxu0 0
  %1666 = vmatpush1.bf16.msra.mxu0 %v1645
  %1667 = vmatprep.subr.bf16.mxu0 0
  %1668 = vmatpush1.bf16.msra.mxu0 %v1646
  %1669 = vmatprep.subr.bf16.mxu0 0
  %1670 = vmatpush1.bf16.msra.mxu0 %v1647
  %1671 = vmatprep.subr.bf16.mxu0 0
  %1672 = vmatpush1.bf16.msra.mxu0 %v1648
  %1673 = vmatprep.subr.bf16.mxu0 0
  %1674 = vmatpush1.bf16.msra.mxu0 0
  %1675 = vmatprep.subr.bf16.mxu0 0
  %1676 = vmatpush1.bf16.msra.mxu0 0
  %1677 = vmatprep.subr.bf16.mxu0 0
  %1678 = vmatpush1.bf16.msra.mxu0 0
  %1679 = vmatprep.subr.bf16.mxu0 0
  %1680 = vmatpush1.bf16.msra.mxu0 0
  %1681 = vmatprep.subr.bf16.mxu0 0
  %1682 = vmatpush1.bf16.msra.mxu0 0
  %1683 = vmatprep.subr.bf16.mxu0 0
  %1684 = vmatpush1.bf16.msra.mxu0 0
  %1685 = vmatprep.subr.bf16.mxu0 0
  %1686 = vmatpush1.bf16.msra.mxu0 0
  %1687 = vmatprep.subr.bf16.mxu0 0
  %1688 = vmatpush1.bf16.msra.mxu0 0
  %1689 = vmatprep.mubr.bf16.mxu0 0
  %1690 = vmatmul.mubr.bf16.gmra.mrb[0].mxu0 %v1585
  %v1691 = vpop.f32.mrb[0].mxu0
  %v1692 = vadd.f32 %v1607, %v1691
  %v1693 = vpop.f32.mrb[0].mxu0
  %v1694 = vpop.f32.mrb[0].mxu0
  %v1695 = vadd.f32 %v1607, %v1694
  %v1696 = vpop.f32.mrb[0].mxu0
  %1697 = vdwg.mxu0
  %v1698 = vmax.f32 %v1692, 0.0
  %v1699 = vmax.f32 %v1695, 0.0
  %v1700 = vadd.f32 %v1353, %v1698
  %v1701 = vadd.f32 %v1354, %v1699
  %v1702 = vpack.c.bf16 %v1701, %v1700
  %v1704 = vunpack.c.l.b16 %v1702
  %v1705 = vunpack.c.h.b16 %v1702
  %v1706 = vpack.c.b16 %v1704, %v1704
  %v1707 = vpack.c.b16 %v1705, %v1705
  %1710 = vst [vmem:[%s59] sm:$0xf] %v1706
  %1711 = vst [vmem:[%s59 + $0x4] sm:$0xf] %v1707
  // Predicated region
  $region118: #{forward.1} parent=0 // pred_check
    _
  $region119: #{forward.1} parent=0 // pred_check_branch
    %1713 = sbr.rel (0) target = $region121
  $region120: #{forward.1} parent=0 // pred_region
    _
  $region121: #{forward.1} parent=0 // pred_fallthru
    _
  // Predicated region
  $region122: #{forward.1} parent=0 // pred_check
    _
  $region123: #{forward.1} parent=0 // pred_check_branch
    %1715 = sbr.rel (0) target = $region125
  $region124: #{forward.1} parent=0 // pred_region
    _
  $region125: #{forward.1} parent=0 // pred_fallthru
    _

</llo_original>
